<compile_context>
chip_gen: v6e
topology: v6e:2x2x1
jax: 0.10.0
libtpu: 0.0.40
codegen_flags: <defaults>
</compile_context>

<pallas_src>
import jax
import jax.numpy as jnp
import numpy as np
from jax import lax
from jax.experimental import pallas as pl
from jax.experimental.pallas import tpu as pltpu

FEAT_DIM = 32
NUM_HEADS = 4
HEAD_DIM = FEAT_DIM // NUM_HEADS
FFN_DIM = 64
LN_EPS = 1e-5

# packed bf16 weight-slab layout: rows [wqkv | wo | w1 | w2], cols padded to 65
_W_COLS = FFN_DIM + 1                                             # 65
_QKV_R0, _QKV_R1, _QKV_C = 0, 3 * FEAT_DIM, FEAT_DIM + 2          # (96, 34)
_WO_R0, _WO_R1, _WO_C = 3 * FEAT_DIM, 4 * FEAT_DIM, FEAT_DIM + 1  # (32, 33)
_W1_R0, _W1_R1, _W1_C = _WO_R1, _WO_R1 + FFN_DIM, FEAT_DIM + 1    # (64, 33)
_W2_R0, _W2_R1, _W2_C = _W1_R1, _W1_R1 + FEAT_DIM, FFN_DIM + 1    # (32, 65)
_W_ROWS = _W2_R1                                                  # 224


def _norm_rows(x):
    """LayerNorm over the feature (sublane) axis; gain/bias are folded into the
    following matmul.  Single-pass stats: var = E[x^2] - mean^2 (two independent
    sublane reductions instead of a dependent reduce->sub->square->reduce)."""
    inv_n = 1.0 / x.shape[0]
    mean = jnp.sum(x, axis=0, keepdims=True) * inv_n
    mean_sq = jnp.sum(x * x, axis=0, keepdims=True) * inv_n
    var = mean_sq - mean * mean
    return (x - mean) * lax.rsqrt(var + LN_EPS)


def transformer_layer_kernel(x_ref, w_ref, out_ref):
    bsz = x_ref.shape[0]
    n = x_ref.shape[2]
    bn = bsz * n
    f32, bf16 = jnp.float32, jnp.bfloat16

    w_all = w_ref[...]                                    # (224, 65) bf16
    wqkv = w_all[_QKV_R0:_QKV_R1, 0:_QKV_C]               # (3E, E+2)
    wo = w_all[_WO_R0:_WO_R1, 0:_WO_C]                    # (E,  E+1)
    w1 = w_all[_W1_R0:_W1_R1, 0:_W1_C]                    # (FFN, E+1)
    w2 = w_all[_W2_R0:_W2_R1, 0:_W2_C]                    # (E, FFN+1)

    # lane-stack batches: tokens of batch b live in lanes [b*n, (b+1)*n)
    x_all = jnp.concatenate(
        [x_ref[b, 0:FEAT_DIM, :] for b in range(bsz)], axis=1)        # (E, B*N)
    mask_all = jnp.concatenate(
        [x_ref[b, FEAT_DIM:FEAT_DIM + 1, :] for b in range(bsz)], axis=1)
    ones = jnp.ones((1, bn), f32)

    # pre_norm; q/k/v biases, the q-scale and the mask embedding are folded
    # into wqkv and applied through the appended [ones; mask] rows.
    xn = _norm_rows(x_all)
    xa = jnp.concatenate([xn, ones, mask_all], axis=0).astype(bf16)   # (E+2, B*N)
    qkv = jnp.dot(wqkv, xa, preferred_element_type=f32)               # (3E, B*N)

    # multi-head attention; every slice below is (8,128)-tile aligned
    attn_parts = []
    for b in range(bsz):
        c0 = b * n
        heads = []
        for h in range(NUM_HEADS):
            r0 = h * HEAD_DIM
            q_h = qkv[r0:r0 + HEAD_DIM, c0:c0 + n].astype(bf16)
            k_h = qkv[FEAT_DIM + r0:FEAT_DIM + r0 + HEAD_DIM,
                      c0:c0 + n].astype(bf16)
            v_h = qkv[2 * FEAT_DIM + r0:2 * FEAT_DIM + r0 + HEAD_DIM,
                      c0:c0 + n]
            # key-major scores s[j, i] = k_j . q_i : contract the sublane axis
            s = lax.dot_general(k_h, q_h, (((0,), (0,)), ((), ())),
                                preferred_element_type=f32)           # (Nk, Nq)
            s = s - jnp.max(s, axis=0, keepdims=True)
            p = jnp.exp(s)
            p = p * pl.reciprocal(jnp.sum(p, axis=0, keepdims=True),
                                  approx=True)
            # out_h[d, i] = sum_j v[d, j] * p[j, i]
            heads.append(jnp.dot(v_h.astype(bf16), p.astype(bf16),
                                 preferred_element_type=f32))         # (8, N)
        attn_parts.append(jnp.concatenate(heads, axis=0))             # (E, N)
    attn = jnp.concatenate(attn_parts, axis=1)                        # (E, B*N)

    # out projection (bo folded via the ones row) + residual
    attn_aug = jnp.concatenate([attn, ones], axis=0).astype(bf16)
    x2 = x_all + jnp.dot(wo, attn_aug, preferred_element_type=f32)

    # FFN: pre_ffn_norm affine + b1 folded into w1, b2 folded into w2
    xn2 = jnp.concatenate([_norm_rows(x2), ones], axis=0).astype(bf16)
    h1 = jnp.maximum(jnp.dot(w1, xn2, preferred_element_type=f32), 0.0)
    h1 = jnp.concatenate([h1, ones], axis=0).astype(bf16)
    out = x2 + jnp.dot(w2, h1, preferred_element_type=f32)            # (E, B*N)

    for b in range(bsz):
        out_ref[b, :, :] = out[:, b * n:(b + 1) * n]                  # lane-dense


# ----------------------------------------------------------------------------
# parameters: PyTorch-style raw params + one-off wrapper folding / packing
# ----------------------------------------------------------------------------

def make_params(key):
    """Raw PyTorch-style parameters (weights are (out, in))."""
    ks = jax.random.split(key, 18)
    s = 0.05
    p = {}
    p["ln1_g"] = 1.0 + 0.1 * jax.random.normal(ks[0], (FEAT_DIM,), jnp.float32)
    p["ln1_b"] = 0.1 * jax.random.normal(ks[1], (FEAT_DIM,), jnp.float32)
    p["me_w"] = jax.random.normal(ks[2], (FEAT_DIM,), jnp.float32) * s
    p["me_b"] = jax.random.normal(ks[3], (FEAT_DIM,), jnp.float32) * s
    p["wq"] = jax.random.normal(ks[4], (FEAT_DIM, FEAT_DIM), jnp.float32) * s
    p["wk"] = jax.random.normal(ks[5], (FEAT_DIM, FEAT_DIM), jnp.float32) * s
    p["wv"] = jax.random.normal(ks[6], (FEAT_DIM, FEAT_DIM), jnp.float32) * s
    p["bq"] = jax.random.normal(ks[7], (FEAT_DIM,), jnp.float32) * s
    p["bk"] = jax.random.normal(ks[8], (FEAT_DIM,), jnp.float32) * s
    p["bv"] = jax.random.normal(ks[9], (FEAT_DIM,), jnp.float32) * s
    p["wo"] = jax.random.normal(ks[10], (FEAT_DIM, FEAT_DIM), jnp.float32) * s
    p["bo"] = jax.random.normal(ks[11], (FEAT_DIM,), jnp.float32) * s
    p["ln2_g"] = 1.0 + 0.1 * jax.random.normal(ks[12], (FEAT_DIM,), jnp.float32)
    p["ln2_b"] = 0.1 * jax.random.normal(ks[13], (FEAT_DIM,), jnp.float32)
    p["w1"] = jax.random.normal(ks[14], (FFN_DIM, FEAT_DIM), jnp.float32) * s
    p["b1"] = jax.random.normal(ks[15], (FFN_DIM,), jnp.float32) * s
    p["w2"] = jax.random.normal(ks[16], (FEAT_DIM, FFN_DIM), jnp.float32) * s
    p["b2"] = jax.random.normal(ks[17], (FEAT_DIM,), jnp.float32) * s
    return p


def fold_params(p):
    """Fold LayerNorm affines, the 1/sqrt(d) q-scale, the mask-embedding
    Conv1d(k=1) and every bias into a single packed bf16 weight slab.  The
    kernel applies them through [ones; mask] rows appended to its activation
    slabs, so no bias broadcasts remain in-kernel."""
    scale = 1.0 / float(np.sqrt(HEAD_DIM))
    g1, b1n = p["ln1_g"], p["ln1_b"]
    wq = p["wq"] * g1[None, :] * scale
    wk = p["wk"] * g1[None, :]
    wv = p["wv"] * g1[None, :]
    bq = (p["bq"] + p["wq"] @ b1n) * scale
    bk = p["bk"] + p["wk"] @ b1n
    bv = p["bv"] + p["wv"] @ b1n + p["wv"] @ p["me_b"]
    me_col = p["wv"] @ p["me_w"]                 # Wv @ mask-embedding weight
    zcol = jnp.zeros((FEAT_DIM, 1), jnp.float32)

    wqkv = jnp.concatenate([
        jnp.concatenate([wq, bq[:, None], zcol], axis=1),
        jnp.concatenate([wk, bk[:, None], zcol], axis=1),
        jnp.concatenate([wv, bv[:, None], me_col[:, None]], axis=1),
    ], axis=0)                                                       # (3E, E+2)

    wo = jnp.concatenate([p["wo"], p["bo"][:, None]], axis=1)        # (E, E+1)

    g2, b2n = p["ln2_g"], p["ln2_b"]
    w1 = jnp.concatenate([p["w1"] * g2[None, :],
                          (p["b1"] + p["w1"] @ b2n)[:, None]], axis=1)  # (FFN, E+1)
    w2 = jnp.concatenate([p["w2"], p["b2"][:, None]], axis=1)           # (E, FFN+1)

    def pad_cols(w):
        return jnp.pad(w, ((0, 0), (0, _W_COLS - w.shape[1])))

    w_all = jnp.concatenate(
        [pad_cols(wqkv), pad_cols(wo), pad_cols(w1), pad_cols(w2)], axis=0)
    assert w_all.shape == (_W_ROWS, _W_COLS)
    return w_all.astype(jnp.bfloat16)


# ----------------------------------------------------------------------------
# pallas_call wrapper
# ----------------------------------------------------------------------------

def transformer_layer_pallas(x_ben, mask_b1n, w_all):
    """x_ben: (B, E, N) f32 feature-major; mask_b1n: (B, 1, N) f32;
    w_all: packed bf16 weight slab from fold_params."""
    bs, emb, n = x_ben.shape
    # carry the mask as an extra feature row -> a single activation input / DMA
    x_aug = jnp.concatenate([x_ben, mask_b1n], axis=1)    # (B, E+1, N)

    return pl.pallas_call(
        transformer_layer_kernel,
        out_shape=jax.ShapeDtypeStruct((bs, emb, n), jnp.float32),
        grid_spec=pltpu.PrefetchScalarGridSpec(
            num_scalar_prefetch=0,
            grid=(1,),                       # whole batch in one grid step:
            in_specs=[                       # the layer is fixed-overhead bound
                pl.BlockSpec((bs, emb + 1, n), lambda i: (0, 0, 0)),
                pl.BlockSpec((_W_ROWS, _W_COLS), lambda i: (0, 0)),
            ],
            out_specs=pl.BlockSpec((bs, emb, n), lambda i: (0, 0, 0)),
        ),
        compiler_params=pltpu.CompilerParams(
            dimension_semantics=("arbitrary",)),
    )(x_aug, w_all)


# ----------------------------------------------------------------------------
# pure-JAX reference (mirrors the PyTorch module, raw params)
# ----------------------------------------------------------------------------

def transformer_layer_ref(x_ben, mask_b1n, p):
    x = jnp.transpose(x_ben, (0, 2, 1))          # (B, N, E)
    mask = jnp.transpose(mask_b1n, (0, 2, 1))    # (B, N, 1)

    def ln(v, g, b):
        mu = jnp.mean(v, -1, keepdims=True)
        var = jnp.mean((v - mu) ** 2, -1, keepdims=True)
        return (v - mu) * lax.rsqrt(var + LN_EPS) * g + b

    xx = ln(x, p["ln1_g"], p["ln1_b"])
    me = mask * p["me_w"] + p["me_b"]
    q = xx @ p["wq"].T + p["bq"]
    k = xx @ p["wk"].T + p["bk"]
    v = (xx + me) @ p["wv"].T + p["bv"]
    bs, n, e = x.shape
    qh = q.reshape(bs, n, NUM_HEADS, HEAD_DIM).transpose(0, 2, 1, 3)
    kh = k.reshape(bs, n, NUM_HEADS, HEAD_DIM).transpose(0, 2, 1, 3)
    vh = v.reshape(bs, n, NUM_HEADS, HEAD_DIM).transpose(0, 2, 1, 3)
    s = jnp.einsum("bhnd,bhmd->bhnm", qh / np.sqrt(HEAD_DIM), kh)
    pw = jax.nn.softmax(s, axis=-1)
    attn = jnp.einsum("bhnm,bhmd->bhnd", pw, vh)
    attn = attn.transpose(0, 2, 1, 3).reshape(bs, n, e)
    x = x + attn @ p["wo"].T + p["bo"]
    xx2 = ln(x, p["ln2_g"], p["ln2_b"])
    h = jax.nn.relu(xx2 @ p["w1"].T + p["b1"])
    out = x + h @ p["w2"].T + p["b2"]
    return jnp.transpose(out, (0, 2, 1))         # back to (B, E, N)


# ----------------------------------------------------------------------------
# module-level forward (mirrors TransformerLayer.forward for this cfg)
# ----------------------------------------------------------------------------

def forward(input_dict, w_all):
    search_feat = input_dict.pop("search_feat")        # (B, E, Ns)
    template_feat = input_dict.pop("template_feat")    # (B, E, Nt)
    search_xyz = input_dict.pop("search_xyz")
    template_xyz = input_dict.pop("template_xyz")
    template_mask_ref = input_dict.pop("template_mask_ref")
    search_mask_ref = input_dict.pop("search_mask_ref")

    n_s = search_feat.shape[-1]
    n_t = template_feat.shape[-1]

    feat = jnp.concatenate((search_feat, template_feat), axis=-1)   # (B, E, N)
    mask_ref = jnp.concatenate((search_mask_ref, template_mask_ref), axis=-1)

    x_ben = feat.astype(jnp.float32)                    # PyTorch-native layout
    mask_b1n = mask_ref[:, None, :].astype(jnp.float32)

    out_ben = transformer_layer_pallas(x_ben, mask_b1n, w_all)

    search_feat_o = out_ben[:, :, :n_s]
    template_feat_o = out_ben[:, :, n_s:n_s + n_t]

    output_dict = dict(
        search_feat=search_feat_o, template_feat=template_feat_o,
        search_xyz=search_xyz, template_xyz=template_xyz,
        search_mask_ref=search_mask_ref, template_mask_ref=template_mask_ref)
    output_dict.update(input_dict)
    # TODO(synk): mask_pred / center_pred / pos_emb 'mlp' heads disabled in cfg;
    # they would be additional pointwise-conv Pallas kernels of the same shape.
    return output_dict, out_ben, x_ben, mask_b1n


if __name__ == "__main__":
    key = jax.random.PRNGKey(0)
    k_param, k_sf, k_tf, k_sx, k_tx, k_sm, k_tm = jax.random.split(key, 7)

    BS, NS, NT = 2, 64, 64
    raw_params = make_params(k_param)
    w_all = fold_params(raw_params)

    inputs = dict(
        search_feat=jax.random.normal(k_sf, (BS, FEAT_DIM, NS), jnp.float32),
        template_feat=jax.random.normal(k_tf, (BS, FEAT_DIM, NT), jnp.float32),
        search_xyz=jax.random.normal(k_sx, (BS, NS, 3), jnp.float32),
        template_xyz=jax.random.normal(k_tx, (BS, NT, 3), jnp.float32),
        search_mask_ref=jax.random.uniform(k_sm, (BS, NS), jnp.float32),
        template_mask_ref=jax.random.uniform(k_tm, (BS, NT), jnp.float32),
    )

    out_dict, out_ben, x_ben, mask_b1n = forward(dict(inputs), w_all)
    out_ben = jax.block_until_ready(out_ben)

    # correctness check vs the pure-JAX reference (raw, unfolded params).
    # Tolerance loosened vs v2 because the kernel now feeds the MXU bf16
    # operands (f32 accumulation) and uses the EUP approx reciprocal.
    ref = jax.block_until_ready(
        transformer_layer_ref(x_ben, mask_b1n, raw_params))
    np.testing.assert_allclose(np.asarray(out_ben), np.asarray(ref),
                               rtol=2e-2, atol=2e-2)

    assert out_dict["search_feat"].shape == (BS, FEAT_DIM, NS)
    assert out_dict["template_feat"].shape == (BS, FEAT_DIM, NT)
    print("KERNEL_OK")
</pallas_src>

<mosaic_0001>
module attributes {stable_mosaic.version = 11 : i64} {
  func.func @transformer_layer_kernel(%arg0: i32, %arg1: memref<2x33x128xf32, #tpu.memory_space<vmem>>, %arg2: memref<224x65xbf16, #tpu.memory_space<vmem>>, %arg3: memref<2x32x128xf32, #tpu.memory_space<vmem>>) attributes {dimension_semantics = [#tpu.dimension_semantics<arbitrary>], iteration_bounds = array<i64: 1>, scalar_prefetch = 0 : i64, scratch_operands = 0 : i64, tpu.core_type = #tpu.core_type<tc>, window_params = [{pipeline_mode = #tpu.pipeline_mode<synchronous>, transform_indices = @transform_0, window_bounds = array<i64: 2, 33, 128>}, {pipeline_mode = #tpu.pipeline_mode<synchronous>, transform_indices = @transform_1, window_bounds = array<i64: 224, 65>}, {pipeline_mode = #tpu.pipeline_mode<synchronous>, transform_indices = @transform_2, window_bounds = array<i64: 2, 32, 128>}]} {
    %c0 = arith.constant 0 : index
    %c0_0 = arith.constant 0 : index
    %0 = vector.load %arg2[%c0, %c0_0] : memref<224x65xbf16, #tpu.memory_space<vmem>>, vector<224x65xbf16>
    %1 = vector.extract_strided_slice %0 {offsets = [0, 0], sizes = [96, 34], strides = [1, 1]} : vector<224x65xbf16> to vector<96x34xbf16>
    %2 = vector.extract_strided_slice %0 {offsets = [96, 0], sizes = [32, 33], strides = [1, 1]} : vector<224x65xbf16> to vector<32x33xbf16>
    %3 = vector.extract_strided_slice %0 {offsets = [128, 0], sizes = [64, 33], strides = [1, 1]} : vector<224x65xbf16> to vector<64x33xbf16>
    %4 = vector.extract_strided_slice %0 {offsets = [192, 0], sizes = [32, 65], strides = [1, 1]} : vector<224x65xbf16> to vector<32x65xbf16>
    %c0_1 = arith.constant 0 : index
    %c0_2 = arith.constant 0 : index
    %c0_3 = arith.constant 0 : index
    %5 = vector.load %arg1[%c0_1, %c0_2, %c0_3] : memref<2x33x128xf32, #tpu.memory_space<vmem>>, vector<1x32x128xf32>
    %6 = vector.shape_cast %5 : vector<1x32x128xf32> to vector<32x128xf32>
    %c1 = arith.constant 1 : index
    %c0_4 = arith.constant 0 : index
    %c0_5 = arith.constant 0 : index
    %7 = vector.load %arg1[%c1, %c0_4, %c0_5] : memref<2x33x128xf32, #tpu.memory_space<vmem>>, vector<1x32x128xf32>
    %8 = vector.shape_cast %7 : vector<1x32x128xf32> to vector<32x128xf32>
    %9 = tpu.concatenate %6, %8 in 1 : vector<32x128xf32>, vector<32x128xf32> -> vector<32x256xf32>
    %c0_6 = arith.constant 0 : index
    %c32 = arith.constant 32 : index
    %c0_7 = arith.constant 0 : index
    %10 = vector.load %arg1[%c0_6, %c32, %c0_7] : memref<2x33x128xf32, #tpu.memory_space<vmem>>, vector<1x1x128xf32>
    %11 = vector.shape_cast %10 : vector<1x1x128xf32> to vector<1x128xf32>
    %c1_8 = arith.constant 1 : index
    %c32_9 = arith.constant 32 : index
    %c0_10 = arith.constant 0 : index
    %12 = vector.load %arg1[%c1_8, %c32_9, %c0_10] : memref<2x33x128xf32, #tpu.memory_space<vmem>>, vector<1x1x128xf32>
    %13 = vector.shape_cast %12 : vector<1x1x128xf32> to vector<1x128xf32>
    %14 = tpu.concatenate %11, %13 in 1 : vector<1x128xf32>, vector<1x128xf32> -> vector<1x256xf32>
    %cst = arith.constant 1.000000e+00 : f32
    %15 = vector.broadcast %cst : f32 to vector<1x256xf32>
    %cst_11 = arith.constant dense<0.000000e+00> : vector<256xf32>
    %16 = vector.multi_reduction <add>, %9, %cst_11 [0] : vector<32x256xf32> to vector<256xf32>
    %17 = vector.shape_cast %16 : vector<256xf32> to vector<1x256xf32>
    %cst_12 = arith.constant 3.125000e-02 : f32
    %18 = vector.broadcast %cst_12 : f32 to vector<1x256xf32>
    %19 = arith.mulf %17, %18 : vector<1x256xf32>
    %20 = arith.mulf %9, %9 : vector<32x256xf32>
    %cst_13 = arith.constant dense<0.000000e+00> : vector<256xf32>
    %21 = vector.multi_reduction <add>, %20, %cst_13 [0] : vector<32x256xf32> to vector<256xf32>
    %22 = vector.shape_cast %21 : vector<256xf32> to vector<1x256xf32>
    %cst_14 = arith.constant 3.125000e-02 : f32
    %23 = vector.broadcast %cst_14 : f32 to vector<1x256xf32>
    %24 = arith.mulf %22, %23 : vector<1x256xf32>
    %25 = arith.mulf %19, %19 : vector<1x256xf32>
    %26 = arith.subf %24, %25 : vector<1x256xf32>
    %27 = vector.broadcast %19 : vector<1x256xf32> to vector<32x256xf32>
    %28 = arith.subf %9, %27 : vector<32x256xf32>
    %cst_15 = arith.constant 9.99999974E-6 : f32
    %29 = vector.broadcast %cst_15 : f32 to vector<1x256xf32>
    %30 = arith.addf %26, %29 : vector<1x256xf32>
    %31 = math.rsqrt %30 : vector<1x256xf32>
    %32 = vector.broadcast %31 : vector<1x256xf32> to vector<32x256xf32>
    %33 = arith.mulf %28, %32 : vector<32x256xf32>
    %34 = tpu.concatenate %33, %15, %14 in 0 : vector<32x256xf32>, vector<1x256xf32>, vector<1x256xf32> -> vector<34x256xf32>
    %35 = arith.truncf %34 : vector<34x256xf32> to vector<34x256xbf16>
    %cst_16 = arith.constant dense<0.000000e+00> : vector<96x256xf32>
    %36 = tpu.matmul %1, %35, %cst_16 {dimension_numbers = #tpu.dot_dimension_numbers<[1], [0], [0], [1], [0, 0, 1, 1], [], []>} : vector<96x34xbf16>, vector<34x256xbf16>, vector<96x256xf32> -> vector<96x256xf32>
    %37 = vector.extract_strided_slice %36 {offsets = [0, 0], sizes = [8, 128], strides = [1, 1]} : vector<96x256xf32> to vector<8x128xf32>
    %38 = arith.truncf %37 : vector<8x128xf32> to vector<8x128xbf16>
    %39 = vector.extract_strided_slice %36 {offsets = [32, 0], sizes = [8, 128], strides = [1, 1]} : vector<96x256xf32> to vector<8x128xf32>
    %40 = arith.truncf %39 : vector<8x128xf32> to vector<8x128xbf16>
    %41 = vector.extract_strided_slice %36 {offsets = [64, 0], sizes = [8, 128], strides = [1, 1]} : vector<96x256xf32> to vector<8x128xf32>
    %cst_17 = arith.constant dense<0.000000e+00> : vector<128x128xf32>
    %42 = tpu.matmul %40, %38, %cst_17 {dimension_numbers = #tpu.dot_dimension_numbers<[0], [0], [1], [1], [0, 1, 1, 1], [], []>} : vector<8x128xbf16>, vector<8x128xbf16>, vector<128x128xf32> -> vector<128x128xf32>
    %cst_18 = arith.constant dense<0xFF800000> : vector<128xf32>
    %43 = vector.multi_reduction <maximumf>, %42, %cst_18 [0] : vector<128x128xf32> to vector<128xf32>
    %44 = vector.shape_cast %43 : vector<128xf32> to vector<1x128xf32>
    %45 = vector.broadcast %44 : vector<1x128xf32> to vector<128x128xf32>
    %46 = arith.subf %42, %45 : vector<128x128xf32>
    %47 = math.exp %46 : vector<128x128xf32>
    %cst_19 = arith.constant dense<0.000000e+00> : vector<128xf32>
    %48 = vector.multi_reduction <add>, %47, %cst_19 [0] : vector<128x128xf32> to vector<128xf32>
    %49 = vector.shape_cast %48 : vector<128xf32> to vector<1x128xf32>
    %50 = tpu.reciprocal %49 {approx = true} : vector<1x128xf32> -> vector<1x128xf32>
    %51 = vector.broadcast %50 : vector<1x128xf32> to vector<128x128xf32>
    %52 = arith.mulf %47, %51 : vector<128x128xf32>
    %53 = arith.truncf %41 : vector<8x128xf32> to vector<8x128xbf16>
    %54 = arith.truncf %52 : vector<128x128xf32> to vector<128x128xbf16>
    %cst_20 = arith.constant dense<0.000000e+00> : vector<8x128xf32>
    %55 = tpu.matmul %53, %54, %cst_20 {dimension_numbers = #tpu.dot_dimension_numbers<[1], [0], [0], [1], [0, 0, 1, 1], [], []>} : vector<8x128xbf16>, vector<128x128xbf16>, vector<8x128xf32> -> vector<8x128xf32>
    %56 = vector.extract_strided_slice %36 {offsets = [8, 0], sizes = [8, 128], strides = [1, 1]} : vector<96x256xf32> to vector<8x128xf32>
    %57 = arith.truncf %56 : vector<8x128xf32> to vector<8x128xbf16>
    %58 = vector.extract_strided_slice %36 {offsets = [40, 0], sizes = [8, 128], strides = [1, 1]} : vector<96x256xf32> to vector<8x128xf32>
    %59 = arith.truncf %58 : vector<8x128xf32> to vector<8x128xbf16>
    %60 = vector.extract_strided_slice %36 {offsets = [72, 0], sizes = [8, 128], strides = [1, 1]} : vector<96x256xf32> to vector<8x128xf32>
    %cst_21 = arith.constant dense<0.000000e+00> : vector<128x128xf32>
    %61 = tpu.matmul %59, %57, %cst_21 {dimension_numbers = #tpu.dot_dimension_numbers<[0], [0], [1], [1], [0, 1, 1, 1], [], []>} : vector<8x128xbf16>, vector<8x128xbf16>, vector<128x128xf32> -> vector<128x128xf32>
    %cst_22 = arith.constant dense<0xFF800000> : vector<128xf32>
    %62 = vector.multi_reduction <maximumf>, %61, %cst_22 [0] : vector<128x128xf32> to vector<128xf32>
    %63 = vector.shape_cast %62 : vector<128xf32> to vector<1x128xf32>
    %64 = vector.broadcast %63 : vector<1x128xf32> to vector<128x128xf32>
    %65 = arith.subf %61, %64 : vector<128x128xf32>
    %66 = math.exp %65 : vector<128x128xf32>
    %cst_23 = arith.constant dense<0.000000e+00> : vector<128xf32>
    %67 = vector.multi_reduction <add>, %66, %cst_23 [0] : vector<128x128xf32> to vector<128xf32>
    %68 = vector.shape_cast %67 : vector<128xf32> to vector<1x128xf32>
    %69 = tpu.reciprocal %68 {approx = true} : vector<1x128xf32> -> vector<1x128xf32>
    %70 = vector.broadcast %69 : vector<1x128xf32> to vector<128x128xf32>
    %71 = arith.mulf %66, %70 : vector<128x128xf32>
    %72 = arith.truncf %60 : vector<8x128xf32> to vector<8x128xbf16>
    %73 = arith.truncf %71 : vector<128x128xf32> to vector<128x128xbf16>
    %cst_24 = arith.constant dense<0.000000e+00> : vector<8x128xf32>
    %74 = tpu.matmul %72, %73, %cst_24 {dimension_numbers = #tpu.dot_dimension_numbers<[1], [0], [0], [1], [0, 0, 1, 1], [], []>} : vector<8x128xbf16>, vector<128x128xbf16>, vector<8x128xf32> -> vector<8x128xf32>
    %75 = vector.extract_strided_slice %36 {offsets = [16, 0], sizes = [8, 128], strides = [1, 1]} : vector<96x256xf32> to vector<8x128xf32>
    %76 = arith.truncf %75 : vector<8x128xf32> to vector<8x128xbf16>
    %77 = vector.extract_strided_slice %36 {offsets = [48, 0], sizes = [8, 128], strides = [1, 1]} : vector<96x256xf32> to vector<8x128xf32>
    %78 = arith.truncf %77 : vector<8x128xf32> to vector<8x128xbf16>
    %79 = vector.extract_strided_slice %36 {offsets = [80, 0], sizes = [8, 128], strides = [1, 1]} : vector<96x256xf32> to vector<8x128xf32>
    %cst_25 = arith.constant dense<0.000000e+00> : vector<128x128xf32>
    %80 = tpu.matmul %78, %76, %cst_25 {dimension_numbers = #tpu.dot_dimension_numbers<[0], [0], [1], [1], [0, 1, 1, 1], [], []>} : vector<8x128xbf16>, vector<8x128xbf16>, vector<128x128xf32> -> vector<128x128xf32>
    %cst_26 = arith.constant dense<0xFF800000> : vector<128xf32>
    %81 = vector.multi_reduction <maximumf>, %80, %cst_26 [0] : vector<128x128xf32> to vector<128xf32>
    %82 = vector.shape_cast %81 : vector<128xf32> to vector<1x128xf32>
    %83 = vector.broadcast %82 : vector<1x128xf32> to vector<128x128xf32>
    %84 = arith.subf %80, %83 : vector<128x128xf32>
    %85 = math.exp %84 : vector<128x128xf32>
    %cst_27 = arith.constant dense<0.000000e+00> : vector<128xf32>
    %86 = vector.multi_reduction <add>, %85, %cst_27 [0] : vector<128x128xf32> to vector<128xf32>
    %87 = vector.shape_cast %86 : vector<128xf32> to vector<1x128xf32>
    %88 = tpu.reciprocal %87 {approx = true} : vector<1x128xf32> -> vector<1x128xf32>
    %89 = vector.broadcast %88 : vector<1x128xf32> to vector<128x128xf32>
    %90 = arith.mulf %85, %89 : vector<128x128xf32>
    %91 = arith.truncf %79 : vector<8x128xf32> to vector<8x128xbf16>
    %92 = arith.truncf %90 : vector<128x128xf32> to vector<128x128xbf16>
    %cst_28 = arith.constant dense<0.000000e+00> : vector<8x128xf32>
    %93 = tpu.matmul %91, %92, %cst_28 {dimension_numbers = #tpu.dot_dimension_numbers<[1], [0], [0], [1], [0, 0, 1, 1], [], []>} : vector<8x128xbf16>, vector<128x128xbf16>, vector<8x128xf32> -> vector<8x128xf32>
    %94 = vector.extract_strided_slice %36 {offsets = [24, 0], sizes = [8, 128], strides = [1, 1]} : vector<96x256xf32> to vector<8x128xf32>
    %95 = arith.truncf %94 : vector<8x128xf32> to vector<8x128xbf16>
    %96 = vector.extract_strided_slice %36 {offsets = [56, 0], sizes = [8, 128], strides = [1, 1]} : vector<96x256xf32> to vector<8x128xf32>
    %97 = arith.truncf %96 : vector<8x128xf32> to vector<8x128xbf16>
    %98 = vector.extract_strided_slice %36 {offsets = [88, 0], sizes = [8, 128], strides = [1, 1]} : vector<96x256xf32> to vector<8x128xf32>
    %cst_29 = arith.constant dense<0.000000e+00> : vector<128x128xf32>
    %99 = tpu.matmul %97, %95, %cst_29 {dimension_numbers = #tpu.dot_dimension_numbers<[0], [0], [1], [1], [0, 1, 1, 1], [], []>} : vector<8x128xbf16>, vector<8x128xbf16>, vector<128x128xf32> -> vector<128x128xf32>
    %cst_30 = arith.constant dense<0xFF800000> : vector<128xf32>
    %100 = vector.multi_reduction <maximumf>, %99, %cst_30 [0] : vector<128x128xf32> to vector<128xf32>
    %101 = vector.shape_cast %100 : vector<128xf32> to vector<1x128xf32>
    %102 = vector.broadcast %101 : vector<1x128xf32> to vector<128x128xf32>
    %103 = arith.subf %99, %102 : vector<128x128xf32>
    %104 = math.exp %103 : vector<128x128xf32>
    %cst_31 = arith.constant dense<0.000000e+00> : vector<128xf32>
    %105 = vector.multi_reduction <add>, %104, %cst_31 [0] : vector<128x128xf32> to vector<128xf32>
    %106 = vector.shape_cast %105 : vector<128xf32> to vector<1x128xf32>
    %107 = tpu.reciprocal %106 {approx = true} : vector<1x128xf32> -> vector<1x128xf32>
    %108 = vector.broadcast %107 : vector<1x128xf32> to vector<128x128xf32>
    %109 = arith.mulf %104, %108 : vector<128x128xf32>
    %110 = arith.truncf %98 : vector<8x128xf32> to vector<8x128xbf16>
    %111 = arith.truncf %109 : vector<128x128xf32> to vector<128x128xbf16>
    %cst_32 = arith.constant dense<0.000000e+00> : vector<8x128xf32>
    %112 = tpu.matmul %110, %111, %cst_32 {dimension_numbers = #tpu.dot_dimension_numbers<[1], [0], [0], [1], [0, 0, 1, 1], [], []>} : vector<8x128xbf16>, vector<128x128xbf16>, vector<8x128xf32> -> vector<8x128xf32>
    %113 = tpu.concatenate %55, %74, %93, %112 in 0 : vector<8x128xf32>, vector<8x128xf32>, vector<8x128xf32>, vector<8x128xf32> -> vector<32x128xf32>
    %114 = vector.extract_strided_slice %36 {offsets = [0, 128], sizes = [8, 128], strides = [1, 1]} : vector<96x256xf32> to vector<8x128xf32>
    %115 = arith.truncf %114 : vector<8x128xf32> to vector<8x128xbf16>
    %116 = vector.extract_strided_slice %36 {offsets = [32, 128], sizes = [8, 128], strides = [1, 1]} : vector<96x256xf32> to vector<8x128xf32>
    %117 = arith.truncf %116 : vector<8x128xf32> to vector<8x128xbf16>
    %118 = vector.extract_strided_slice %36 {offsets = [64, 128], sizes = [8, 128], strides = [1, 1]} : vector<96x256xf32> to vector<8x128xf32>
    %cst_33 = arith.constant dense<0.000000e+00> : vector<128x128xf32>
    %119 = tpu.matmul %117, %115, %cst_33 {dimension_numbers = #tpu.dot_dimension_numbers<[0], [0], [1], [1], [0, 1, 1, 1], [], []>} : vector<8x128xbf16>, vector<8x128xbf16>, vector<128x128xf32> -> vector<128x128xf32>
    %cst_34 = arith.constant dense<0xFF800000> : vector<128xf32>
    %120 = vector.multi_reduction <maximumf>, %119, %cst_34 [0] : vector<128x128xf32> to vector<128xf32>
    %121 = vector.shape_cast %120 : vector<128xf32> to vector<1x128xf32>
    %122 = vector.broadcast %121 : vector<1x128xf32> to vector<128x128xf32>
    %123 = arith.subf %119, %122 : vector<128x128xf32>
    %124 = math.exp %123 : vector<128x128xf32>
    %cst_35 = arith.constant dense<0.000000e+00> : vector<128xf32>
    %125 = vector.multi_reduction <add>, %124, %cst_35 [0] : vector<128x128xf32> to vector<128xf32>
    %126 = vector.shape_cast %125 : vector<128xf32> to vector<1x128xf32>
    %127 = tpu.reciprocal %126 {approx = true} : vector<1x128xf32> -> vector<1x128xf32>
    %128 = vector.broadcast %127 : vector<1x128xf32> to vector<128x128xf32>
    %129 = arith.mulf %124, %128 : vector<128x128xf32>
    %130 = arith.truncf %118 : vector<8x128xf32> to vector<8x128xbf16>
    %131 = arith.truncf %129 : vector<128x128xf32> to vector<128x128xbf16>
    %cst_36 = arith.constant dense<0.000000e+00> : vector<8x128xf32>
    %132 = tpu.matmul %130, %131, %cst_36 {dimension_numbers = #tpu.dot_dimension_numbers<[1], [0], [0], [1], [0, 0, 1, 1], [], []>} : vector<8x128xbf16>, vector<128x128xbf16>, vector<8x128xf32> -> vector<8x128xf32>
    %133 = vector.extract_strided_slice %36 {offsets = [8, 128], sizes = [8, 128], strides = [1, 1]} : vector<96x256xf32> to vector<8x128xf32>
    %134 = arith.truncf %133 : vector<8x128xf32> to vector<8x128xbf16>
    %135 = vector.extract_strided_slice %36 {offsets = [40, 128], sizes = [8, 128], strides = [1, 1]} : vector<96x256xf32> to vector<8x128xf32>
    %136 = arith.truncf %135 : vector<8x128xf32> to vector<8x128xbf16>
    %137 = vector.extract_strided_slice %36 {offsets = [72, 128], sizes = [8, 128], strides = [1, 1]} : vector<96x256xf32> to vector<8x128xf32>
    %cst_37 = arith.constant dense<0.000000e+00> : vector<128x128xf32>
    %138 = tpu.matmul %136, %134, %cst_37 {dimension_numbers = #tpu.dot_dimension_numbers<[0], [0], [1], [1], [0, 1, 1, 1], [], []>} : vector<8x128xbf16>, vector<8x128xbf16>, vector<128x128xf32> -> vector<128x128xf32>
    %cst_38 = arith.constant dense<0xFF800000> : vector<128xf32>
    %139 = vector.multi_reduction <maximumf>, %138, %cst_38 [0] : vector<128x128xf32> to vector<128xf32>
    %140 = vector.shape_cast %139 : vector<128xf32> to vector<1x128xf32>
    %141 = vector.broadcast %140 : vector<1x128xf32> to vector<128x128xf32>
    %142 = arith.subf %138, %141 : vector<128x128xf32>
    %143 = math.exp %142 : vector<128x128xf32>
    %cst_39 = arith.constant dense<0.000000e+00> : vector<128xf32>
    %144 = vector.multi_reduction <add>, %143, %cst_39 [0] : vector<128x128xf32> to vector<128xf32>
    %145 = vector.shape_cast %144 : vector<128xf32> to vector<1x128xf32>
    %146 = tpu.reciprocal %145 {approx = true} : vector<1x128xf32> -> vector<1x128xf32>
    %147 = vector.broadcast %146 : vector<1x128xf32> to vector<128x128xf32>
    %148 = arith.mulf %143, %147 : vector<128x128xf32>
    %149 = arith.truncf %137 : vector<8x128xf32> to vector<8x128xbf16>
    %150 = arith.truncf %148 : vector<128x128xf32> to vector<128x128xbf16>
    %cst_40 = arith.constant dense<0.000000e+00> : vector<8x128xf32>
    %151 = tpu.matmul %149, %150, %cst_40 {dimension_numbers = #tpu.dot_dimension_numbers<[1], [0], [0], [1], [0, 0, 1, 1], [], []>} : vector<8x128xbf16>, vector<128x128xbf16>, vector<8x128xf32> -> vector<8x128xf32>
    %152 = vector.extract_strided_slice %36 {offsets = [16, 128], sizes = [8, 128], strides = [1, 1]} : vector<96x256xf32> to vector<8x128xf32>
    %153 = arith.truncf %152 : vector<8x128xf32> to vector<8x128xbf16>
    %154 = vector.extract_strided_slice %36 {offsets = [48, 128], sizes = [8, 128], strides = [1, 1]} : vector<96x256xf32> to vector<8x128xf32>
    %155 = arith.truncf %154 : vector<8x128xf32> to vector<8x128xbf16>
    %156 = vector.extract_strided_slice %36 {offsets = [80, 128], sizes = [8, 128], strides = [1, 1]} : vector<96x256xf32> to vector<8x128xf32>
    %cst_41 = arith.constant dense<0.000000e+00> : vector<128x128xf32>
    %157 = tpu.matmul %155, %153, %cst_41 {dimension_numbers = #tpu.dot_dimension_numbers<[0], [0], [1], [1], [0, 1, 1, 1], [], []>} : vector<8x128xbf16>, vector<8x128xbf16>, vector<128x128xf32> -> vector<128x128xf32>
    %cst_42 = arith.constant dense<0xFF800000> : vector<128xf32>
    %158 = vector.multi_reduction <maximumf>, %157, %cst_42 [0] : vector<128x128xf32> to vector<128xf32>
    %159 = vector.shape_cast %158 : vector<128xf32> to vector<1x128xf32>
    %160 = vector.broadcast %159 : vector<1x128xf32> to vector<128x128xf32>
    %161 = arith.subf %157, %160 : vector<128x128xf32>
    %162 = math.exp %161 : vector<128x128xf32>
    %cst_43 = arith.constant dense<0.000000e+00> : vector<128xf32>
    %163 = vector.multi_reduction <add>, %162, %cst_43 [0] : vector<128x128xf32> to vector<128xf32>
    %164 = vector.shape_cast %163 : vector<128xf32> to vector<1x128xf32>
    %165 = tpu.reciprocal %164 {approx = true} : vector<1x128xf32> -> vector<1x128xf32>
    %166 = vector.broadcast %165 : vector<1x128xf32> to vector<128x128xf32>
    %167 = arith.mulf %162, %166 : vector<128x128xf32>
    %168 = arith.truncf %156 : vector<8x128xf32> to vector<8x128xbf16>
    %169 = arith.truncf %167 : vector<128x128xf32> to vector<128x128xbf16>
    %cst_44 = arith.constant dense<0.000000e+00> : vector<8x128xf32>
    %170 = tpu.matmul %168, %169, %cst_44 {dimension_numbers = #tpu.dot_dimension_numbers<[1], [0], [0], [1], [0, 0, 1, 1], [], []>} : vector<8x128xbf16>, vector<128x128xbf16>, vector<8x128xf32> -> vector<8x128xf32>
    %171 = vector.extract_strided_slice %36 {offsets = [24, 128], sizes = [8, 128], strides = [1, 1]} : vector<96x256xf32> to vector<8x128xf32>
    %172 = arith.truncf %171 : vector<8x128xf32> to vector<8x128xbf16>
    %173 = vector.extract_strided_slice %36 {offsets = [56, 128], sizes = [8, 128], strides = [1, 1]} : vector<96x256xf32> to vector<8x128xf32>
    %174 = arith.truncf %173 : vector<8x128xf32> to vector<8x128xbf16>
    %175 = vector.extract_strided_slice %36 {offsets = [88, 128], sizes = [8, 128], strides = [1, 1]} : vector<96x256xf32> to vector<8x128xf32>
    %cst_45 = arith.constant dense<0.000000e+00> : vector<128x128xf32>
    %176 = tpu.matmul %174, %172, %cst_45 {dimension_numbers = #tpu.dot_dimension_numbers<[0], [0], [1], [1], [0, 1, 1, 1], [], []>} : vector<8x128xbf16>, vector<8x128xbf16>, vector<128x128xf32> -> vector<128x128xf32>
    %cst_46 = arith.constant dense<0xFF800000> : vector<128xf32>
    %177 = vector.multi_reduction <maximumf>, %176, %cst_46 [0] : vector<128x128xf32> to vector<128xf32>
    %178 = vector.shape_cast %177 : vector<128xf32> to vector<1x128xf32>
    %179 = vector.broadcast %178 : vector<1x128xf32> to vector<128x128xf32>
    %180 = arith.subf %176, %179 : vector<128x128xf32>
    %181 = math.exp %180 : vector<128x128xf32>
    %cst_47 = arith.constant dense<0.000000e+00> : vector<128xf32>
    %182 = vector.multi_reduction <add>, %181, %cst_47 [0] : vector<128x128xf32> to vector<128xf32>
    %183 = vector.shape_cast %182 : vector<128xf32> to vector<1x128xf32>
    %184 = tpu.reciprocal %183 {approx = true} : vector<1x128xf32> -> vector<1x128xf32>
    %185 = vector.broadcast %184 : vector<1x128xf32> to vector<128x128xf32>
    %186 = arith.mulf %181, %185 : vector<128x128xf32>
    %187 = arith.truncf %175 : vector<8x128xf32> to vector<8x128xbf16>
    %188 = arith.truncf %186 : vector<128x128xf32> to vector<128x128xbf16>
    %cst_48 = arith.constant dense<0.000000e+00> : vector<8x128xf32>
    %189 = tpu.matmul %187, %188, %cst_48 {dimension_numbers = #tpu.dot_dimension_numbers<[1], [0], [0], [1], [0, 0, 1, 1], [], []>} : vector<8x128xbf16>, vector<128x128xbf16>, vector<8x128xf32> -> vector<8x128xf32>
    %190 = tpu.concatenate %132, %151, %170, %189 in 0 : vector<8x128xf32>, vector<8x128xf32>, vector<8x128xf32>, vector<8x128xf32> -> vector<32x128xf32>
    %191 = tpu.concatenate %113, %190 in 1 : vector<32x128xf32>, vector<32x128xf32> -> vector<32x256xf32>
    %192 = tpu.concatenate %191, %15 in 0 : vector<32x256xf32>, vector<1x256xf32> -> vector<33x256xf32>
    %193 = arith.truncf %192 : vector<33x256xf32> to vector<33x256xbf16>
    %cst_49 = arith.constant dense<0.000000e+00> : vector<32x256xf32>
    %194 = tpu.matmul %2, %193, %cst_49 {dimension_numbers = #tpu.dot_dimension_numbers<[1], [0], [0], [1], [0, 0, 1, 1], [], []>} : vector<32x33xbf16>, vector<33x256xbf16>, vector<32x256xf32> -> vector<32x256xf32>
    %195 = arith.addf %9, %194 : vector<32x256xf32>
    %cst_50 = arith.constant dense<0.000000e+00> : vector<256xf32>
    %196 = vector.multi_reduction <add>, %195, %cst_50 [0] : vector<32x256xf32> to vector<256xf32>
    %197 = vector.shape_cast %196 : vector<256xf32> to vector<1x256xf32>
    %cst_51 = arith.constant 3.125000e-02 : f32
    %198 = vector.broadcast %cst_51 : f32 to vector<1x256xf32>
    %199 = arith.mulf %197, %198 : vector<1x256xf32>
    %200 = arith.mulf %195, %195 : vector<32x256xf32>
    %cst_52 = arith.constant dense<0.000000e+00> : vector<256xf32>
    %201 = vector.multi_reduction <add>, %200, %cst_52 [0] : vector<32x256xf32> to vector<256xf32>
    %202 = vector.shape_cast %201 : vector<256xf32> to vector<1x256xf32>
    %cst_53 = arith.constant 3.125000e-02 : f32
    %203 = vector.broadcast %cst_53 : f32 to vector<1x256xf32>
    %204 = arith.mulf %202, %203 : vector<1x256xf32>
    %205 = arith.mulf %199, %199 : vector<1x256xf32>
    %206 = arith.subf %204, %205 : vector<1x256xf32>
    %207 = vector.broadcast %199 : vector<1x256xf32> to vector<32x256xf32>
    %208 = arith.subf %195, %207 : vector<32x256xf32>
    %cst_54 = arith.constant 9.99999974E-6 : f32
    %209 = vector.broadcast %cst_54 : f32 to vector<1x256xf32>
    %210 = arith.addf %206, %209 : vector<1x256xf32>
    %211 = math.rsqrt %210 : vector<1x256xf32>
    %212 = vector.broadcast %211 : vector<1x256xf32> to vector<32x256xf32>
    %213 = arith.mulf %208, %212 : vector<32x256xf32>
    %214 = tpu.concatenate %213, %15 in 0 : vector<32x256xf32>, vector<1x256xf32> -> vector<33x256xf32>
    %215 = arith.truncf %214 : vector<33x256xf32> to vector<33x256xbf16>
    %cst_55 = arith.constant dense<0.000000e+00> : vector<64x256xf32>
    %216 = tpu.matmul %3, %215, %cst_55 {dimension_numbers = #tpu.dot_dimension_numbers<[1], [0], [0], [1], [0, 0, 1, 1], [], []>} : vector<64x33xbf16>, vector<33x256xbf16>, vector<64x256xf32> -> vector<64x256xf32>
    %cst_56 = arith.constant 0.000000e+00 : f32
    %217 = vector.broadcast %cst_56 : f32 to vector<64x256xf32>
    %218 = arith.maximumf %216, %217 : vector<64x256xf32>
    %219 = tpu.concatenate %218, %15 in 0 : vector<64x256xf32>, vector<1x256xf32> -> vector<65x256xf32>
    %220 = arith.truncf %219 : vector<65x256xf32> to vector<65x256xbf16>
    %cst_57 = arith.constant dense<0.000000e+00> : vector<32x256xf32>
    %221 = tpu.matmul %4, %220, %cst_57 {dimension_numbers = #tpu.dot_dimension_numbers<[1], [0], [0], [1], [0, 0, 1, 1], [], []>} : vector<32x65xbf16>, vector<65x256xbf16>, vector<32x256xf32> -> vector<32x256xf32>
    %222 = arith.addf %195, %221 : vector<32x256xf32>
    %223 = vector.extract_strided_slice %222 {offsets = [0, 0], sizes = [32, 128], strides = [1, 1]} : vector<32x256xf32> to vector<32x128xf32>
    %c0_58 = arith.constant 0 : index
    %c0_59 = arith.constant 0 : index
    %c0_60 = arith.constant 0 : index
    %224 = vector.load %arg3[%c0_58, %c0_59, %c0_60] : memref<2x32x128xf32, #tpu.memory_space<vmem>>, vector<1x32x128xf32>
    %225 = vector.shape_cast %224 : vector<1x32x128xf32> to vector<32x128xf32>
    %226 = vector.shape_cast %223 : vector<32x128xf32> to vector<1x32x128xf32>
    tpu.vector_store %arg3[%c0_58, %c0_59, %c0_60], %226 {strides = array<i32>} : memref<2x32x128xf32, #tpu.memory_space<vmem>>, vector<1x32x128xf32>,
    %227 = vector.extract_strided_slice %222 {offsets = [0, 128], sizes = [32, 128], strides = [1, 1]} : vector<32x256xf32> to vector<32x128xf32>
    %c1_61 = arith.constant 1 : index
    %c0_62 = arith.constant 0 : index
    %c0_63 = arith.constant 0 : index
    %228 = vector.load %arg3[%c1_61, %c0_62, %c0_63] : memref<2x32x128xf32, #tpu.memory_space<vmem>>, vector<1x32x128xf32>
    %229 = vector.shape_cast %228 : vector<1x32x128xf32> to vector<32x128xf32>
    %230 = vector.shape_cast %227 : vector<32x128xf32> to vector<1x32x128xf32>
    tpu.vector_store %arg3[%c1_61, %c0_62, %c0_63], %230 {strides = array<i32>} : memref<2x32x128xf32, #tpu.memory_space<vmem>>, vector<1x32x128xf32>,
    return
  }
  func.func @transform_0(%arg0: i32) -> (i32, i32, i32) {
    %c0_i32 = arith.constant 0 : i32
    %c0_i32_0 = arith.constant 0 : i32
    %c0_i32_1 = arith.constant 0 : i32
    %c0_i32_2 = arith.constant 0 : i32
    return %c0_i32, %c0_i32_0, %c0_i32_1 : i32, i32, i32
  }
  func.func @transform_1(%arg0: i32) -> (i32, i32) {
    %c0_i32 = arith.constant 0 : i32
    %c0_i32_0 = arith.constant 0 : i32
    %c0_i32_1 = arith.constant 0 : i32
    return %c0_i32, %c0_i32_0 : i32, i32
  }
  func.func @transform_2(%arg0: i32) -> (i32, i32, i32) {
    %c0_i32 = arith.constant 0 : i32
    %c0_i32_0 = arith.constant 0 : i32
    %c0_i32_1 = arith.constant 0 : i32
    %c0_i32_2 = arith.constant 0 : i32
    return %c0_i32, %c0_i32_0, %c0_i32_1 : i32, i32, i32
  }
}

</mosaic_0001>

<llo_original>
// kernel: tpu_custom_call.1
$region0: #{tpu_custom_call.1}
  #allocation0 [shape = 'u32[]', space=smem, size = 0x4, offset = 0x4, fixed_abs, tag = 'smem constant byte address 0x4 - core index']
  #allocation1 [shape = 'u32[144,128]{1,0:T(1,128)}', space=vmem, size = 0x12000, scoped, tag = 'internal scratch']
  %s0 = inlined_call_operand.vmem [shape: f32[2,33,128], index: 0, kind: input, shape index: {}]
  %s1 = inlined_call_operand.vmem [shape: bf16[224,65], index: 1, kind: input, shape index: {}]
  %s2 = inlined_call_operand.hbm [shape: f32[2,32,128], index: 2, kind: output, shape index: {}]
  %s3 = sld [smem:[#allocation0]]
  $region18: #{tpu_custom_call.1} parent=0
    _
  %s5 = ssub.s32 1, %s3
  %s6 = scalar_select 0, %s5, %s3
  $region1: #{tpu_custom_call.1} parent=0
    #allocation2 [shape = 'u8[32768]{0}', space=vmem, size = 0x8000, scoped, tag = 'output window, operand 0, single buffered']
    #allocation3 [shape = 's32[1]{0}', space=sflag, size = 0x4, scoped, tag = 'scoped memory for tpu_custom_call.1']
    %7 = vsyncpa [#allocation3], 0
    // Predicated region
    $region2: #{tpu_custom_call.1} parent=1 // pred_check
      _
    $region3: #{tpu_custom_call.1} parent=1 // pred_check_branch
      %9 = sbr.rel (0) target = $region5
    $region4: #{tpu_custom_call.1} parent=1 // pred_region
      _
    $region5: #{tpu_custom_call.1} parent=1 // pred_fallthru
      _
    // Predicated region
    $region6: #{tpu_custom_call.1} parent=1 // pred_check
      _
    $region7: #{tpu_custom_call.1} parent=1 // pred_check_branch
      %11 = sbr.rel (0) target = $region9
    $region8: #{tpu_custom_call.1} parent=1 // pred_region
      _
    $region9: #{tpu_custom_call.1} parent=1 // pred_fallthru
      _
    %v13 = vld [vmem:[%s1] sm:$0xf]
    %v14 = vld [vmem:[%s1 + $0x4] sm:$0xf]
    %v15 = vld [vmem:[%s1 + $0x8] sm:$0xf]
    %v16 = vld [vmem:[%s1 + $0xc] sm:$0xf]
    %v17 = vld [vmem:[%s1 + $0x10] sm:$0xf]
    %v18 = vld [vmem:[%s1 + $0x14] sm:$0xf]
    %v19 = vld [vmem:[%s1 + $0x18] sm:$0xf]
    %v20 = vld [vmem:[%s1 + $0x1c] sm:$0xf]
    %v21 = vld [vmem:[%s1 + $0x20] sm:$0xf]
    %v22 = vld [vmem:[%s1 + $0x24] sm:$0xf]
    %v23 = vld [vmem:[%s1 + $0x28] sm:$0xf]
    %v24 = vld [vmem:[%s1 + $0x2c] sm:$0xf]
    %v25 = vld [vmem:[%s1 + $0x30] sm:$0xf]
    %v26 = vld [vmem:[%s1 + $0x34] sm:$0xf]
    %v27 = vld [vmem:[%s1 + $0x38] sm:$0xf]
    %v28 = vld [vmem:[%s1 + $0x3c] sm:$0xf]
    %v29 = vld [vmem:[%s1 + $0x40] sm:$0xf]
    %v30 = vld [vmem:[%s1 + $0x44] sm:$0xf]
    %v31 = vld [vmem:[%s1 + $0x48] sm:$0xf]
    %v32 = vld [vmem:[%s1 + $0x4c] sm:$0xf]
    %v33 = vld [vmem:[%s1 + $0x50] sm:$0xf]
    %v34 = vld [vmem:[%s1 + $0x54] sm:$0xf]
    %v35 = vld [vmem:[%s1 + $0x58] sm:$0xf]
    %v36 = vld [vmem:[%s1 + $0x5c] sm:$0xf]
    %v37 = vld [vmem:[%s1 + $0x60] sm:$0xf]
    %v38 = vld [vmem:[%s1 + $0x64] sm:$0xf]
    %v39 = vld [vmem:[%s1 + $0x68] sm:$0xf]
    %v40 = vld [vmem:[%s1 + $0x6c] sm:$0xf]
    %v41 = vld [vmem:[%s0] sm:$0xff]
    %v42 = vld [vmem:[%s0 + $0x8] sm:$0xff]
    %v43 = vld [vmem:[%s0 + $0x10] sm:$0xff]
    %v44 = vld [vmem:[%s0 + $0x18] sm:$0xff]
    %s45 = scalar_lea.vmem %s0, 40
    %v46 = vld [vmem:[%s45] sm:$0xff]
    %v47 = vld [vmem:[%s45 + $0x8] sm:$0xff]
    %v48 = vld [vmem:[%s45 + $0x10] sm:$0xff]
    %v49 = vld [vmem:[%s45 + $0x18] sm:$0xff]
    %v50 = vld [vmem:[%s0 + $0x20] sm:$0x1]
    %v51 = vld [vmem:[%s45 + $0x20] sm:$0x1]
    %v52 = vadd.f32 %v41, %v42
    %v53 = vadd.f32 %v52, %v43
    %v54 = vadd.f32 %v53, %v44
    %v55 = vrot.slane %v54, 4
    %v56 = vadd.f32 %v54, %v55
    %v57 = vrot.slane %v56, 2
    %v58 = vadd.f32 %v56, %v57
    %v59 = vrot.slane %v58, 1
    %v60 = vadd.f32 %v58, %v59
    %v61 = vadd.f32 %v46, %v47
    %v62 = vadd.f32 %v61, %v48
    %v63 = vadd.f32 %v62, %v49
    %v64 = vrot.slane %v63, 4
    %v65 = vadd.f32 %v63, %v64
    %v66 = vrot.slane %v65, 2
    %v67 = vadd.f32 %v65, %v66
    %v68 = vrot.slane %v67, 1
    %v69 = vadd.f32 %v67, %v68
    %v70 = vmul.f32 %v60, 0.03125
    %v71 = vmul.f32 %v69, 0.03125
    %v72 = vmul.f32 %v41, %v41
    %v73 = vmul.f32 %v46, %v46
    %v74 = vmul.f32 %v42, %v42
    %v75 = vmul.f32 %v47, %v47
    %v76 = vmul.f32 %v43, %v43
    %v77 = vmul.f32 %v48, %v48
    %v78 = vmul.f32 %v44, %v44
    %v79 = vmul.f32 %v49, %v49
    %v80 = vadd.f32 %v72, %v74
    %v81 = vadd.f32 %v80, %v76
    %v82 = vadd.f32 %v81, %v78
    %v83 = vrot.slane %v82, 4
    %v84 = vadd.f32 %v82, %v83
    %v85 = vrot.slane %v84, 2
    %v86 = vadd.f32 %v84, %v85
    %v87 = vrot.slane %v86, 1
    %v88 = vadd.f32 %v86, %v87
    %v89 = vadd.f32 %v73, %v75
    %v90 = vadd.f32 %v89, %v77
    %v91 = vadd.f32 %v90, %v79
    %v92 = vrot.slane %v91, 4
    %v93 = vadd.f32 %v91, %v92
    %v94 = vrot.slane %v93, 2
    %v95 = vadd.f32 %v93, %v94
    %v96 = vrot.slane %v95, 1
    %v97 = vadd.f32 %v95, %v96
    %v98 = vmul.f32 %v88, 0.03125
    %v99 = vmul.f32 %v97, 0.03125
    %v100 = vmul.f32 %v70, %v70
    %v101 = vmul.f32 %v71, %v71
    %v102 = vsub.f32 %v98, %v100
    %v103 = vsub.f32 %v99, %v101
    %v104 = vsub.f32 %v41, %v70
    %v105 = vsub.f32 %v46, %v71
    %v106 = vsub.f32 %v42, %v70
    %v107 = vsub.f32 %v47, %v71
    %v108 = vsub.f32 %v43, %v70
    %v109 = vsub.f32 %v48, %v71
    %v110 = vsub.f32 %v44, %v70
    %v111 = vsub.f32 %v49, %v71
    %v112 = vadd.f32 %v102, 1e-05
    %v113 = vadd.f32 %v103, 1e-05
    %v114 = vrsqrt.pop %v112
    %v115 = vrsqrt.pop %v113
    %v116 = vmul.f32 %v104, %v114
    %v117 = vmul.f32 %v105, %v115
    %v118 = vmul.f32 %v106, %v114
    %v119 = vmul.f32 %v107, %v115
    %v120 = vmul.f32 %v108, %v114
    %v121 = vmul.f32 %v109, %v115
    %v122 = vmul.f32 %v110, %v114
    %v123 = vmul.f32 %v111, %v115
    %v126 = vrot.slane %v50, 7
    %v127 = vrot.slane %v51, 7
    %vm130 = vcmask 1040384
    %v131 = vsel %vm130, 1.0, %v126
    %v132 = vsel %vm130, 1.0, %v127
    %v133 = vpack.c.bf16 %v118, %v116
    %v134 = vpack.c.bf16 %v119, %v117
    %v135 = vpack.c.bf16 %v122, %v120
    %v136 = vpack.c.bf16 %v123, %v121
    %v137 = vpack.c.bf16 %v131, %v131
    %v138 = vpack.c.bf16 %v132, %v132
    %v151 = vunpack.c.l.b16 %v13
    %v152 = vunpack.c.l.b16 %v14
    %v153 = vunpack.c.l.b16 %v15
    %v154 = vunpack.c.l.b16 %v16
    %v155 = vunpack.c.l.b16 %v17
    %v156 = vunpack.c.l.b16 %v18
    %v157 = vunpack.c.l.b16 %v19
    %v158 = vunpack.c.l.b16 %v20
    %v159 = vunpack.c.l.b16 %v21
    %v160 = vunpack.c.l.b16 %v22
    %v161 = vunpack.c.l.b16 %v23
    %v162 = vunpack.c.l.b16 %v24
    %v163 = vpack.c.b16 %v152, %v151
    %v164 = vpack.c.b16 %v154, %v153
    %v165 = vpack.c.b16 %v156, %v155
    %v166 = vpack.c.b16 %v158, %v157
    %v167 = vpack.c.b16 %v160, %v159
    %v168 = vpack.c.b16 %v162, %v161
    %vm169 = vcmask 277504
    %v171 = vsel %vm169, %v163, 0
    %v174 = vsel %vm169, %v164, 0
    %v177 = vsel %vm169, %v165, 0
    %v180 = vsel %vm169, %v166, 0
    %v183 = vsel %vm169, %v167, 0
    %v186 = vsel %vm169, %v168, 0
    %v189 = vsel %vm130, %v137, 0
    %v192 = vsel %vm130, %v138, 0
    %194 = vmatprep.subr.bf16.mxu0 0
    %195 = vmatpush1.bf16.msra.mxu0 0
    %196 = vmatprep.subr.bf16.mxu0 0
    %197 = vmatpush1.bf16.msra.mxu0 0
    %198 = vmatprep.subr.bf16.mxu0 0
    %199 = vmatpush1.bf16.msra.mxu0 0
    %200 = vmatprep.subr.bf16.mxu0 0
    %201 = vmatpush1.bf16.msra.mxu0 0
    %202 = vmatprep.subr.bf16.mxu0 0
    %203 = vmatpush1.bf16.msra.mxu0 0
    %204 = vmatprep.subr.bf16.mxu0 %v192
    %205 = vmatpush1.bf16.msra.mxu0 %v189
    %206 = vmatprep.subr.bf16.mxu0 %v136
    %207 = vmatpush1.bf16.msra.mxu0 %v135
    %208 = vmatprep.subr.bf16.mxu0 %v134
    %209 = vmatpush1.bf16.msra.mxu0 %v133
    %210 = vmatprep.subr.bf16.mxu0 0
    %211 = vmatpush2.bf16.msra.mxu0 0
    %212 = vmatprep.subr.bf16.mxu0 0
    %213 = vmatpush2.bf16.msra.mxu0 0
    %214 = vmatprep.subr.bf16.mxu0 0
    %215 = vmatpush2.bf16.msra.mxu0 0
    %216 = vmatprep.subr.bf16.mxu0 0
    %217 = vmatpush2.bf16.msra.mxu0 0
    %218 = vmatprep.subr.bf16.mxu0 0
    %219 = vmatpush2.bf16.msra.mxu0 0
    %220 = vmatprep.subr.bf16.mxu0 0
    %221 = vmatpush2.bf16.msra.mxu0 0
    %222 = vmatprep.subr.bf16.mxu0 0
    %223 = vmatpush2.bf16.msra.mxu0 0
    %224 = vmatprep.subr.bf16.mxu0 0
    %225 = vmatpush2.bf16.msra.mxu0 0
    %226 = vmatprep.mubr.bf16.mxu0 0
    %227 = vmatmul.mubr.bf16.gmra.mxu0 %v171
    %v228 = vpop.f32.mrf.mxu0
    %v229 = vadd.f32 0.0, %v228
    %v230 = vpop.f32.mrf.mxu0
    %v231 = vadd.f32 0.0, %v230
    %v232 = vpop.f32.mrf.mxu0
    %v233 = vadd.f32 0.0, %v232
    %v234 = vpop.f32.mrf.mxu0
    %v235 = vadd.f32 0.0, %v234
    %236 = vmatprep.mubr.bf16.mxu0 0
    %237 = vmatmul.mubr.bf16.gmra.mxu0 %v174
    %v238 = vpop.f32.mrf.mxu0
    %v239 = vadd.f32 0.0, %v238
    %v240 = vpop.f32.mrf.mxu0
    %v241 = vadd.f32 0.0, %v240
    %v242 = vpop.f32.mrf.mxu0
    %v243 = vadd.f32 0.0, %v242
    %v244 = vpop.f32.mrf.mxu0
    %v245 = vadd.f32 0.0, %v244
    %246 = vmatprep.mubr.bf16.mxu0 0
    %247 = vmatmul.mubr.bf16.gmra.mxu0 %v177
    %v248 = vpop.f32.mrf.mxu0
    %v249 = vadd.f32 0.0, %v248
    %v250 = vpop.f32.mrf.mxu0
    %v251 = vadd.f32 0.0, %v250
    %v252 = vpop.f32.mrf.mxu0
    %v253 = vadd.f32 0.0, %v252
    %v254 = vpop.f32.mrf.mxu0
    %v255 = vadd.f32 0.0, %v254
    %256 = vmatprep.mubr.bf16.mxu0 0
    %257 = vmatmul.mubr.bf16.gmra.mxu0 %v180
    %v258 = vpop.f32.mrf.mxu0
    %v259 = vadd.f32 0.0, %v258
    %v260 = vpop.f32.mrf.mxu0
    %v261 = vadd.f32 0.0, %v260
    %v262 = vpop.f32.mrf.mxu0
    %v263 = vadd.f32 0.0, %v262
    %v264 = vpop.f32.mrf.mxu0
    %v265 = vadd.f32 0.0, %v264
    %266 = vmatprep.mubr.bf16.mxu0 0
    %267 = vmatmul.mubr.bf16.gmra.mxu0 %v183
    %v268 = vpop.f32.mrf.mxu0
    %v269 = vadd.f32 0.0, %v268
    %v270 = vpop.f32.mrf.mxu0
    %v271 = vadd.f32 0.0, %v270
    %v272 = vpop.f32.mrf.mxu0
    %v273 = vadd.f32 0.0, %v272
    %v274 = vpop.f32.mrf.mxu0
    %v275 = vadd.f32 0.0, %v274
    %276 = vmatprep.mubr.bf16.mxu0 0
    %277 = vmatmul.mubr.bf16.gmra.mxu0 %v186
    %v278 = vpop.f32.mrf.mxu0
    %v279 = vadd.f32 0.0, %v278
    %v280 = vpop.f32.mrf.mxu0
    %v281 = vadd.f32 0.0, %v280
    %v282 = vpop.f32.mrf.mxu0
    %v283 = vadd.f32 0.0, %v282
    %v284 = vpop.f32.mrf.mxu0
    %v285 = vadd.f32 0.0, %v284
    %286 = vdwg.mxu0
    %v287 = vpack.c.bf16 %v229, %v229
    %v288 = vpack.c.bf16 %v249, %v249
    %289 = vxpose.xlu0.c.b16.start [1/8] %v288, 128
    %290 = vxpose.xlu0.c.b16.cont [2/8] 0, 128
    %291 = vxpose.xlu0.c.b16.cont [3/8] 0, 128
    %292 = vxpose.xlu0.c.b16.cont [4/8] 0, 128
    %293 = vxpose.xlu0.c.b16.cont [5/8] 0, 128
    %294 = vxpose.xlu0.c.b16.cont [6/8] 0, 128
    %295 = vxpose.xlu0.c.b16.cont [7/8] 0, 128
    %296 = vxpose.xlu0.c.b16.end [8/8] 0, 128
    %v297 = vpop.trf.xlu0
    %v298 = vpop.trf.xlu0
    %v299 = vpop.trf.xlu0
    %v300 = vpop.trf.xlu0
    %v301 = vpop.trf.xlu0
    %v302 = vpop.trf.xlu0
    %v303 = vpop.trf.xlu0
    %v304 = vpop.trf.xlu0
    %vm305 = vcmask 64512
    %v307 = vsel %vm305, %v297, 0
    %v310 = vsel %vm305, %v298, 0
    %v313 = vsel %vm305, %v299, 0
    %v316 = vsel %vm305, %v300, 0
    %v319 = vsel %vm305, %v301, 0
    %v322 = vsel %vm305, %v302, 0
    %v325 = vsel %vm305, %v303, 0
    %v328 = vsel %vm305, %v304, 0
    %vm330 = vcmask 1043456
    %v332 = vsel %vm330, %v287, 0
    %334 = vmatprep.subr.bf16.mxu0 0
    %335 = vmatpush1.bf16.msra.mxu0 0
    %336 = vmatprep.subr.bf16.mxu0 0
    %337 = vmatpush1.bf16.msra.mxu0 0
    %338 = vmatprep.subr.bf16.mxu0 0
    %339 = vmatpush1.bf16.msra.mxu0 0
    %340 = vmatprep.subr.bf16.mxu0 0
    %341 = vmatpush1.bf16.msra.mxu0 0
    %342 = vmatprep.subr.bf16.mxu0 0
    %343 = vmatpush1.bf16.msra.mxu0 0
    %344 = vmatprep.subr.bf16.mxu0 0
    %345 = vmatpush1.bf16.msra.mxu0 0
    %346 = vmatprep.subr.bf16.mxu0 0
    %347 = vmatpush1.bf16.msra.mxu0 0
    %348 = vmatprep.subr.bf16.mxu0 0
    %349 = vmatpush1.bf16.msra.mxu0 %v332
    %350 = vmatprep.subr.bf16.mxu0 0
    %351 = vmatpush2.bf16.msra.mxu0 0
    %352 = vmatprep.subr.bf16.mxu0 0
    %353 = vmatpush2.bf16.msra.mxu0 0
    %354 = vmatprep.subr.bf16.mxu0 0
    %355 = vmatpush2.bf16.msra.mxu0 0
    %356 = vmatprep.subr.bf16.mxu0 0
    %357 = vmatpush2.bf16.msra.mxu0 0
    %358 = vmatprep.subr.bf16.mxu0 0
    %359 = vmatpush2.bf16.msra.mxu0 0
    %360 = vmatprep.subr.bf16.mxu0 0
    %361 = vmatpush2.bf16.msra.mxu0 0
    %362 = vmatprep.subr.bf16.mxu0 0
    %363 = vmatpush2.bf16.msra.mxu0 0
    %364 = vmatprep.subr.bf16.mxu0 0
    %365 = vmatpush2.bf16.msra.mxu0 0
    %366 = vmatprep.mubr.bf16.mxu0 0
    %367 = vmatmul.mubr.bf16.gmra.mxu0 %v307
    %v368 = vpop.f32.mrf.mxu0
    %v369 = vadd.f32 0.0, %v368
    %v370 = vpop.f32.mrf.mxu0
    %v371 = vpop.f32.mrf.mxu0
    %v372 = vadd.f32 0.0, %v371
    %v373 = vpop.f32.mrf.mxu0
    %374 = vmatprep.mubr.bf16.mxu0 0
    %375 = vmatmul.mubr.bf16.gmra.mxu0 %v310
    %v376 = vpop.f32.mrf.mxu0
    %v377 = vadd.f32 0.0, %v376
    %v378 = vpop.f32.mrf.mxu0
    %v379 = vpop.f32.mrf.mxu0
    %v380 = vadd.f32 0.0, %v379
    %v381 = vpop.f32.mrf.mxu0
    %382 = vmatprep.mubr.bf16.mxu0 0
    %383 = vmatmul.mubr.bf16.gmra.mxu0 %v313
    %v384 = vpop.f32.mrf.mxu0
    %v385 = vadd.f32 0.0, %v384
    %v386 = vpop.f32.mrf.mxu0
    %v387 = vpop.f32.mrf.mxu0
    %v388 = vadd.f32 0.0, %v387
    %v389 = vpop.f32.mrf.mxu0
    %390 = vmatprep.mubr.bf16.mxu0 0
    %391 = vmatmul.mubr.bf16.gmra.mxu0 %v316
    %v392 = vpop.f32.mrf.mxu0
    %v393 = vadd.f32 0.0, %v392
    %v394 = vpop.f32.mrf.mxu0
    %v395 = vpop.f32.mrf.mxu0
    %v396 = vadd.f32 0.0, %v395
    %v397 = vpop.f32.mrf.mxu0
    %398 = vmatprep.mubr.bf16.mxu0 0
    %399 = vmatmul.mubr.bf16.gmra.mxu0 %v319
    %v400 = vpop.f32.mrf.mxu0
    %v401 = vadd.f32 0.0, %v400
    %v402 = vpop.f32.mrf.mxu0
    %v403 = vpop.f32.mrf.mxu0
    %v404 = vadd.f32 0.0, %v403
    %v405 = vpop.f32.mrf.mxu0
    %406 = vmatprep.mubr.bf16.mxu0 0
    %407 = vmatmul.mubr.bf16.gmra.mxu0 %v322
    %v408 = vpop.f32.mrf.mxu0
    %v409 = vadd.f32 0.0, %v408
    %v410 = vpop.f32.mrf.mxu0
    %v411 = vpop.f32.mrf.mxu0
    %v412 = vadd.f32 0.0, %v411
    %v413 = vpop.f32.mrf.mxu0
    %414 = vmatprep.mubr.bf16.mxu0 0
    %415 = vmatmul.mubr.bf16.gmra.mxu0 %v325
    %v416 = vpop.f32.mrf.mxu0
    %v417 = vadd.f32 0.0, %v416
    %v418 = vpop.f32.mrf.mxu0
    %v419 = vpop.f32.mrf.mxu0
    %v420 = vadd.f32 0.0, %v419
    %v421 = vpop.f32.mrf.mxu0
    %422 = vmatprep.mubr.bf16.mxu0 0
    %423 = vmatmul.mubr.bf16.gmra.mxu0 %v328
    %v424 = vpop.f32.mrf.mxu0
    %v425 = vadd.f32 0.0, %v424
    %v426 = vpop.f32.mrf.mxu0
    %v427 = vpop.f32.mrf.mxu0
    %v428 = vadd.f32 0.0, %v427
    %v429 = vpop.f32.mrf.mxu0
    %430 = vdwg.mxu0
    %v431 = vmax.f32 %v369, %v385
    %v432 = vmax.f32 %v372, %v388
    %v433 = vmax.f32 %v377, %v393
    %v434 = vmax.f32 %v380, %v396
    %v435 = vmax.f32 %v431, %v401
    %v436 = vmax.f32 %v432, %v404
    %v437 = vmax.f32 %v433, %v409
    %v438 = vmax.f32 %v434, %v412
    %v439 = vmax.f32 %v435, %v417
    %v440 = vmax.f32 %v436, %v420
    %v441 = vmax.f32 %v437, %v425
    %v442 = vmax.f32 %v438, %v428
    %v443 = vmax.f32 %v439, %v440
    %v444 = vmax.f32 %v441, %v442
    %v445 = vmax.f32 %v443, %v444
    %v446 = vrot.slane %v445, 4
    %v447 = vmax.f32 %v445, %v446
    %v448 = vrot.slane %v447, 2
    %v449 = vmax.f32 %v447, %v448
    %v450 = vrot.slane %v449, 1
    %v451 = vmax.f32 %v449, %v450
    %v452 = vsub.f32 %v369, %v451
    %v453 = vsub.f32 %v372, %v451
    %v454 = vsub.f32 %v377, %v451
    %v455 = vsub.f32 %v380, %v451
    %v456 = vsub.f32 %v385, %v451
    %v457 = vsub.f32 %v388, %v451
    %v458 = vsub.f32 %v393, %v451
    %v459 = vsub.f32 %v396, %v451
    %v460 = vsub.f32 %v401, %v451
    %v461 = vsub.f32 %v404, %v451
    %v462 = vsub.f32 %v409, %v451
    %v463 = vsub.f32 %v412, %v451
    %v464 = vsub.f32 %v417, %v451
    %v465 = vsub.f32 %v420, %v451
    %v466 = vsub.f32 %v425, %v451
    %v467 = vsub.f32 %v428, %v451
    %v468 = vmul.f32 %v452, 1.442695
    %v469 = vpow.pop %v468
    %v470 = vmul.f32 %v453, 1.442695
    %v471 = vpow.pop %v470
    %v472 = vmul.f32 %v454, 1.442695
    %v473 = vpow.pop %v472
    %v474 = vmul.f32 %v455, 1.442695
    %v475 = vpow.pop %v474
    %v476 = vmul.f32 %v456, 1.442695
    %v477 = vpow.pop %v476
    %v478 = vmul.f32 %v457, 1.442695
    %v479 = vpow.pop %v478
    %v480 = vmul.f32 %v458, 1.442695
    %v481 = vpow.pop %v480
    %v482 = vmul.f32 %v459, 1.442695
    %v483 = vpow.pop %v482
    %v484 = vmul.f32 %v460, 1.442695
    %v485 = vpow.pop %v484
    %v486 = vmul.f32 %v461, 1.442695
    %v487 = vpow.pop %v486
    %v488 = vmul.f32 %v462, 1.442695
    %v489 = vpow.pop %v488
    %v490 = vmul.f32 %v463, 1.442695
    %v491 = vpow.pop %v490
    %v492 = vmul.f32 %v464, 1.442695
    %v493 = vpow.pop %v492
    %v494 = vmul.f32 %v465, 1.442695
    %v495 = vpow.pop %v494
    %v496 = vmul.f32 %v466, 1.442695
    %v497 = vpow.pop %v496
    %v498 = vmul.f32 %v467, 1.442695
    %v499 = vpow.pop %v498
    %v500 = vadd.f32 %v469, %v471
    %v501 = vadd.f32 %v500, %v473
    %v502 = vadd.f32 %v501, %v475
    %v503 = vadd.f32 %v502, %v477
    %v504 = vadd.f32 %v503, %v479
    %v505 = vadd.f32 %v504, %v481
    %v506 = vadd.f32 %v505, %v483
    %v507 = vadd.f32 %v506, %v485
    %v508 = vadd.f32 %v507, %v487
    %v509 = vadd.f32 %v508, %v489
    %v510 = vadd.f32 %v509, %v491
    %v511 = vadd.f32 %v510, %v493
    %v512 = vadd.f32 %v511, %v495
    %v513 = vadd.f32 %v512, %v497
    %v514 = vadd.f32 %v513, %v499
    %v515 = vrot.slane %v514, 4
    %v516 = vadd.f32 %v514, %v515
    %v517 = vrot.slane %v516, 2
    %v518 = vadd.f32 %v516, %v517
    %v519 = vrot.slane %v518, 1
    %v520 = vadd.f32 %v518, %v519
    %v521 = vrcp.pop %v520
    %v522 = vmul.f32 %v469, %v521
    %v523 = vmul.f32 %v471, %v521
    %v524 = vmul.f32 %v473, %v521
    %v525 = vmul.f32 %v475, %v521
    %v526 = vmul.f32 %v477, %v521
    %v527 = vmul.f32 %v479, %v521
    %v528 = vmul.f32 %v481, %v521
    %v529 = vmul.f32 %v483, %v521
    %v530 = vmul.f32 %v485, %v521
    %v531 = vmul.f32 %v487, %v521
    %v532 = vmul.f32 %v489, %v521
    %v533 = vmul.f32 %v491, %v521
    %v534 = vmul.f32 %v493, %v521
    %v535 = vmul.f32 %v495, %v521
    %v536 = vmul.f32 %v497, %v521
    %v537 = vmul.f32 %v499, %v521
    %v538 = vpack.c.bf16 %v269, %v269
    %v539 = vpack.c.bf16 %v523, %v522
    %v540 = vpack.c.bf16 %v525, %v524
    %v541 = vpack.c.bf16 %v527, %v526
    %v542 = vpack.c.bf16 %v529, %v528
    %v543 = vpack.c.bf16 %v531, %v530
    %v544 = vpack.c.bf16 %v533, %v532
    %v545 = vpack.c.bf16 %v535, %v534
    %v546 = vpack.c.bf16 %v537, %v536
    %547 = vmatprep.subr.bf16.mxu0 0
    %548 = vmatpush1.bf16.msra.mxu0 %v546
    %549 = vmatprep.subr.bf16.mxu0 0
    %550 = vmatpush1.bf16.msra.mxu0 %v545
    %551 = vmatprep.subr.bf16.mxu0 0
    %552 = vmatpush1.bf16.msra.mxu0 %v544
    %553 = vmatprep.subr.bf16.mxu0 0
    %554 = vmatpush1.bf16.msra.mxu0 %v543
    %555 = vmatprep.subr.bf16.mxu0 0
    %556 = vmatpush1.bf16.msra.mxu0 %v542
    %557 = vmatprep.subr.bf16.mxu0 0
    %558 = vmatpush1.bf16.msra.mxu0 %v541
    %559 = vmatprep.subr.bf16.mxu0 0
    %560 = vmatpush1.bf16.msra.mxu0 %v540
    %561 = vmatprep.subr.bf16.mxu0 0
    %562 = vmatpush1.bf16.msra.mxu0 %v539
    %563 = vmatprep.subr.bf16.mxu0 0
    %564 = vmatpush2.bf16.msra.mxu0 0
    %565 = vmatprep.subr.bf16.mxu0 0
    %566 = vmatpush2.bf16.msra.mxu0 0
    %567 = vmatprep.subr.bf16.mxu0 0
    %568 = vmatpush2.bf16.msra.mxu0 0
    %569 = vmatprep.subr.bf16.mxu0 0
    %570 = vmatpush2.bf16.msra.mxu0 0
    %571 = vmatprep.subr.bf16.mxu0 0
    %572 = vmatpush2.bf16.msra.mxu0 0
    %573 = vmatprep.subr.bf16.mxu0 0
    %574 = vmatpush2.bf16.msra.mxu0 0
    %575 = vmatprep.subr.bf16.mxu0 0
    %576 = vmatpush2.bf16.msra.mxu0 0
    %577 = vmatprep.subr.bf16.mxu0 0
    %578 = vmatpush2.bf16.msra.mxu0 0
    %579 = vmatprep.mubr.bf16.mxu0 0
    %580 = vmatmul.mubr.bf16.gmra.mxu0 %v538
    %v581 = vpop.f32.mrf.mxu0
    %v582 = vadd.f32 0.0, %v581
    %v583 = vpop.f32.mrf.mxu0
    %v584 = vpop.f32.mrf.mxu0
    %v585 = vpop.f32.mrf.mxu0
    %586 = vdwg.mxu0
    %v587 = vpack.c.bf16 %v233, %v233
    %v588 = vpack.c.bf16 %v253, %v253
    %589 = vxpose.xlu0.c.b16.start [1/8] %v588, 128
    %590 = vxpose.xlu0.c.b16.cont [2/8] 0, 128
    %591 = vxpose.xlu0.c.b16.cont [3/8] 0, 128
    %592 = vxpose.xlu0.c.b16.cont [4/8] 0, 128
    %593 = vxpose.xlu0.c.b16.cont [5/8] 0, 128
    %594 = vxpose.xlu0.c.b16.cont [6/8] 0, 128
    %595 = vxpose.xlu0.c.b16.cont [7/8] 0, 128
    %596 = vxpose.xlu0.c.b16.end [8/8] 0, 128
    %v597 = vpop.trf.xlu0
    %v598 = vpop.trf.xlu0
    %v599 = vpop.trf.xlu0
    %v600 = vpop.trf.xlu0
    %v601 = vpop.trf.xlu0
    %v602 = vpop.trf.xlu0
    %v603 = vpop.trf.xlu0
    %v604 = vpop.trf.xlu0
    %v606 = vsel %vm305, %v597, 0
    %v609 = vsel %vm305, %v598, 0
    %v612 = vsel %vm305, %v599, 0
    %v615 = vsel %vm305, %v600, 0
    %v618 = vsel %vm305, %v601, 0
    %v621 = vsel %vm305, %v602, 0
    %v624 = vsel %vm305, %v603, 0
    %v627 = vsel %vm305, %v604, 0
    %v630 = vsel %vm330, %v587, 0
    %632 = vmatprep.subr.bf16.mxu0 0
    %633 = vmatpush1.bf16.msra.mxu0 0
    %634 = vmatprep.subr.bf16.mxu0 0
    %635 = vmatpush1.bf16.msra.mxu0 0
    %636 = vmatprep.subr.bf16.mxu0 0
    %637 = vmatpush1.bf16.msra.mxu0 0
    %638 = vmatprep.subr.bf16.mxu0 0
    %639 = vmatpush1.bf16.msra.mxu0 0
    %640 = vmatprep.subr.bf16.mxu0 0
    %641 = vmatpush1.bf16.msra.mxu0 0
    %642 = vmatprep.subr.bf16.mxu0 0
    %643 = vmatpush1.bf16.msra.mxu0 0
    %644 = vmatprep.subr.bf16.mxu0 0
    %645 = vmatpush1.bf16.msra.mxu0 0
    %646 = vmatprep.subr.bf16.mxu0 0
    %647 = vmatpush1.bf16.msra.mxu0 %v630
    %648 = vmatprep.subr.bf16.mxu0 0
    %649 = vmatpush2.bf16.msra.mxu0 0
    %650 = vmatprep.subr.bf16.mxu0 0
    %651 = vmatpush2.bf16.msra.mxu0 0
    %652 = vmatprep.subr.bf16.mxu0 0
    %653 = vmatpush2.bf16.msra.mxu0 0
    %654 = vmatprep.subr.bf16.mxu0 0
    %655 = vmatpush2.bf16.msra.mxu0 0
    %656 = vmatprep.subr.bf16.mxu0 0
    %657 = vmatpush2.bf16.msra.mxu0 0
    %658 = vmatprep.subr.bf16.mxu0 0
    %659 = vmatpush2.bf16.msra.mxu0 0
    %660 = vmatprep.subr.bf16.mxu0 0
    %661 = vmatpush2.bf16.msra.mxu0 0
    %662 = vmatprep.subr.bf16.mxu0 0
    %663 = vmatpush2.bf16.msra.mxu0 0
    %664 = vmatprep.mubr.bf16.mxu0 0
    %665 = vmatmul.mubr.bf16.gmra.mxu0 %v606
    %v666 = vpop.f32.mrf.mxu0
    %v667 = vadd.f32 0.0, %v666
    %v668 = vpop.f32.mrf.mxu0
    %v669 = vpop.f32.mrf.mxu0
    %v670 = vadd.f32 0.0, %v669
    %v671 = vpop.f32.mrf.mxu0
    %672 = vmatprep.mubr.bf16.mxu0 0
    %673 = vmatmul.mubr.bf16.gmra.mxu0 %v609
    %v674 = vpop.f32.mrf.mxu0
    %v675 = vadd.f32 0.0, %v674
    %v676 = vpop.f32.mrf.mxu0
    %v677 = vpop.f32.mrf.mxu0
    %v678 = vadd.f32 0.0, %v677
    %v679 = vpop.f32.mrf.mxu0
    %680 = vmatprep.mubr.bf16.mxu0 0
    %681 = vmatmul.mubr.bf16.gmra.mxu0 %v612
    %v682 = vpop.f32.mrf.mxu0
    %v683 = vadd.f32 0.0, %v682
    %v684 = vpop.f32.mrf.mxu0
    %v685 = vpop.f32.mrf.mxu0
    %v686 = vadd.f32 0.0, %v685
    %v687 = vpop.f32.mrf.mxu0
    %688 = vmatprep.mubr.bf16.mxu0 0
    %689 = vmatmul.mubr.bf16.gmra.mxu0 %v615
    %v690 = vpop.f32.mrf.mxu0
    %v691 = vadd.f32 0.0, %v690
    %v692 = vpop.f32.mrf.mxu0
    %v693 = vpop.f32.mrf.mxu0
    %v694 = vadd.f32 0.0, %v693
    %v695 = vpop.f32.mrf.mxu0
    %696 = vmatprep.mubr.bf16.mxu0 0
    %697 = vmatmul.mubr.bf16.gmra.mxu0 %v618
    %v698 = vpop.f32.mrf.mxu0
    %v699 = vadd.f32 0.0, %v698
    %v700 = vpop.f32.mrf.mxu0
    %v701 = vpop.f32.mrf.mxu0
    %v702 = vadd.f32 0.0, %v701
    %v703 = vpop.f32.mrf.mxu0
    %704 = vmatprep.mubr.bf16.mxu0 0
    %705 = vmatmul.mubr.bf16.gmra.mxu0 %v621
    %v706 = vpop.f32.mrf.mxu0
    %v707 = vadd.f32 0.0, %v706
    %v708 = vpop.f32.mrf.mxu0
    %v709 = vpop.f32.mrf.mxu0
    %v710 = vadd.f32 0.0, %v709
    %v711 = vpop.f32.mrf.mxu0
    %712 = vmatprep.mubr.bf16.mxu0 0
    %713 = vmatmul.mubr.bf16.gmra.mxu0 %v624
    %v714 = vpop.f32.mrf.mxu0
    %v715 = vadd.f32 0.0, %v714
    %v716 = vpop.f32.mrf.mxu0
    %v717 = vpop.f32.mrf.mxu0
    %v718 = vadd.f32 0.0, %v717
    %v719 = vpop.f32.mrf.mxu0
    %720 = vmatprep.mubr.bf16.mxu0 0
    %721 = vmatmul.mubr.bf16.gmra.mxu0 %v627
    %v722 = vpop.f32.mrf.mxu0
    %v723 = vadd.f32 0.0, %v722
    %v724 = vpop.f32.mrf.mxu0
    %v725 = vpop.f32.mrf.mxu0
    %v726 = vadd.f32 0.0, %v725
    %v727 = vpop.f32.mrf.mxu0
    %728 = vdwg.mxu0
    %v729 = vmax.f32 %v667, %v683
    %v730 = vmax.f32 %v670, %v686
    %v731 = vmax.f32 %v675, %v691
    %v732 = vmax.f32 %v678, %v694
    %v733 = vmax.f32 %v729, %v699
    %v734 = vmax.f32 %v730, %v702
    %v735 = vmax.f32 %v731, %v707
    %v736 = vmax.f32 %v732, %v710
    %v737 = vmax.f32 %v733, %v715
    %v738 = vmax.f32 %v734, %v718
    %v739 = vmax.f32 %v735, %v723
    %v740 = vmax.f32 %v736, %v726
    %v741 = vmax.f32 %v737, %v738
    %v742 = vmax.f32 %v739, %v740
    %v743 = vmax.f32 %v741, %v742
    %v744 = vrot.slane %v743, 4
    %v745 = vmax.f32 %v743, %v744
    %v746 = vrot.slane %v745, 2
    %v747 = vmax.f32 %v745, %v746
    %v748 = vrot.slane %v747, 1
    %v749 = vmax.f32 %v747, %v748
    %v750 = vsub.f32 %v667, %v749
    %v751 = vsub.f32 %v670, %v749
    %v752 = vsub.f32 %v675, %v749
    %v753 = vsub.f32 %v678, %v749
    %v754 = vsub.f32 %v683, %v749
    %v755 = vsub.f32 %v686, %v749
    %v756 = vsub.f32 %v691, %v749
    %v757 = vsub.f32 %v694, %v749
    %v758 = vsub.f32 %v699, %v749
    %v759 = vsub.f32 %v702, %v749
    %v760 = vsub.f32 %v707, %v749
    %v761 = vsub.f32 %v710, %v749
    %v762 = vsub.f32 %v715, %v749
    %v763 = vsub.f32 %v718, %v749
    %v764 = vsub.f32 %v723, %v749
    %v765 = vsub.f32 %v726, %v749
    %v766 = vmul.f32 %v750, 1.442695
    %v767 = vpow.pop %v766
    %v768 = vmul.f32 %v751, 1.442695
    %v769 = vpow.pop %v768
    %v770 = vmul.f32 %v752, 1.442695
    %v771 = vpow.pop %v770
    %v772 = vmul.f32 %v753, 1.442695
    %v773 = vpow.pop %v772
    %v774 = vmul.f32 %v754, 1.442695
    %v775 = vpow.pop %v774
    %v776 = vmul.f32 %v755, 1.442695
    %v777 = vpow.pop %v776
    %v778 = vmul.f32 %v756, 1.442695
    %v779 = vpow.pop %v778
    %v780 = vmul.f32 %v757, 1.442695
    %v781 = vpow.pop %v780
    %v782 = vmul.f32 %v758, 1.442695
    %v783 = vpow.pop %v782
    %v784 = vmul.f32 %v759, 1.442695
    %v785 = vpow.pop %v784
    %v786 = vmul.f32 %v760, 1.442695
    %v787 = vpow.pop %v786
    %v788 = vmul.f32 %v761, 1.442695
    %v789 = vpow.pop %v788
    %v790 = vmul.f32 %v762, 1.442695
    %v791 = vpow.pop %v790
    %v792 = vmul.f32 %v763, 1.442695
    %v793 = vpow.pop %v792
    %v794 = vmul.f32 %v764, 1.442695
    %v795 = vpow.pop %v794
    %v796 = vmul.f32 %v765, 1.442695
    %v797 = vpow.pop %v796
    %v798 = vadd.f32 %v767, %v769
    %v799 = vadd.f32 %v798, %v771
    %v800 = vadd.f32 %v799, %v773
    %v801 = vadd.f32 %v800, %v775
    %v802 = vadd.f32 %v801, %v777
    %v803 = vadd.f32 %v802, %v779
    %v804 = vadd.f32 %v803, %v781
    %v805 = vadd.f32 %v804, %v783
    %v806 = vadd.f32 %v805, %v785
    %v807 = vadd.f32 %v806, %v787
    %v808 = vadd.f32 %v807, %v789
    %v809 = vadd.f32 %v808, %v791
    %v810 = vadd.f32 %v809, %v793
    %v811 = vadd.f32 %v810, %v795
    %v812 = vadd.f32 %v811, %v797
    %v813 = vrot.slane %v812, 4
    %v814 = vadd.f32 %v812, %v813
    %v815 = vrot.slane %v814, 2
    %v816 = vadd.f32 %v814, %v815
    %v817 = vrot.slane %v816, 1
    %v818 = vadd.f32 %v816, %v817
    %v819 = vrcp.pop %v818
    %v820 = vmul.f32 %v767, %v819
    %v821 = vmul.f32 %v769, %v819
    %v822 = vmul.f32 %v771, %v819
    %v823 = vmul.f32 %v773, %v819
    %v824 = vmul.f32 %v775, %v819
    %v825 = vmul.f32 %v777, %v819
    %v826 = vmul.f32 %v779, %v819
    %v827 = vmul.f32 %v781, %v819
    %v828 = vmul.f32 %v783, %v819
    %v829 = vmul.f32 %v785, %v819
    %v830 = vmul.f32 %v787, %v819
    %v831 = vmul.f32 %v789, %v819
    %v832 = vmul.f32 %v791, %v819
    %v833 = vmul.f32 %v793, %v819
    %v834 = vmul.f32 %v795, %v819
    %v835 = vmul.f32 %v797, %v819
    %v836 = vpack.c.bf16 %v273, %v273
    %v837 = vpack.c.bf16 %v821, %v820
    %v838 = vpack.c.bf16 %v823, %v822
    %v839 = vpack.c.bf16 %v825, %v824
    %v840 = vpack.c.bf16 %v827, %v826
    %v841 = vpack.c.bf16 %v829, %v828
    %v842 = vpack.c.bf16 %v831, %v830
    %v843 = vpack.c.bf16 %v833, %v832
    %v844 = vpack.c.bf16 %v835, %v834
    %845 = vmatprep.subr.bf16.mxu0 0
    %846 = vmatpush1.bf16.msra.mxu0 %v844
    %847 = vmatprep.subr.bf16.mxu0 0
    %848 = vmatpush1.bf16.msra.mxu0 %v843
    %849 = vmatprep.subr.bf16.mxu0 0
    %850 = vmatpush1.bf16.msra.mxu0 %v842
    %851 = vmatprep.subr.bf16.mxu0 0
    %852 = vmatpush1.bf16.msra.mxu0 %v841
    %853 = vmatprep.subr.bf16.mxu0 0
    %854 = vmatpush1.bf16.msra.mxu0 %v840
    %855 = vmatprep.subr.bf16.mxu0 0
    %856 = vmatpush1.bf16.msra.mxu0 %v839
    %857 = vmatprep.subr.bf16.mxu0 0
    %858 = vmatpush1.bf16.msra.mxu0 %v838
    %859 = vmatprep.subr.bf16.mxu0 0
    %860 = vmatpush1.bf16.msra.mxu0 %v837
    %861 = vmatprep.subr.bf16.mxu0 0
    %862 = vmatpush2.bf16.msra.mxu0 0
    %863 = vmatprep.subr.bf16.mxu0 0
    %864 = vmatpush2.bf16.msra.mxu0 0
    %865 = vmatprep.subr.bf16.mxu0 0
    %866 = vmatpush2.bf16.msra.mxu0 0
    %867 = vmatprep.subr.bf16.mxu0 0
    %868 = vmatpush2.bf16.msra.mxu0 0
    %869 = vmatprep.subr.bf16.mxu0 0
    %870 = vmatpush2.bf16.msra.mxu0 0
    %871 = vmatprep.subr.bf16.mxu0 0
    %872 = vmatpush2.bf16.msra.mxu0 0
    %873 = vmatprep.subr.bf16.mxu0 0
    %874 = vmatpush2.bf16.msra.mxu0 0
    %875 = vmatprep.subr.bf16.mxu0 0
    %876 = vmatpush2.bf16.msra.mxu0 0
    %877 = vmatprep.mubr.bf16.mxu0 0
    %878 = vmatmul.mubr.bf16.gmra.mxu0 %v836
    %v879 = vpop.f32.mrf.mxu0
    %v880 = vadd.f32 0.0, %v879
    %v881 = vpop.f32.mrf.mxu0
    %v882 = vpop.f32.mrf.mxu0
    %v883 = vpop.f32.mrf.mxu0
    %884 = vdwg.mxu0
    %v885 = vpack.c.bf16 %v239, %v239
    %v886 = vpack.c.bf16 %v259, %v259
    %887 = vxpose.xlu0.c.b16.start [1/8] %v886, 128
    %888 = vxpose.xlu0.c.b16.cont [2/8] 0, 128
    %889 = vxpose.xlu0.c.b16.cont [3/8] 0, 128
    %890 = vxpose.xlu0.c.b16.cont [4/8] 0, 128
    %891 = vxpose.xlu0.c.b16.cont [5/8] 0, 128
    %892 = vxpose.xlu0.c.b16.cont [6/8] 0, 128
    %893 = vxpose.xlu0.c.b16.cont [7/8] 0, 128
    %894 = vxpose.xlu0.c.b16.end [8/8] 0, 128
    %v895 = vpop.trf.xlu0
    %v896 = vpop.trf.xlu0
    %v897 = vpop.trf.xlu0
    %v898 = vpop.trf.xlu0
    %v899 = vpop.trf.xlu0
    %v900 = vpop.trf.xlu0
    %v901 = vpop.trf.xlu0
    %v902 = vpop.trf.xlu0
    %v904 = vsel %vm305, %v895, 0
    %v907 = vsel %vm305, %v896, 0
    %v910 = vsel %vm305, %v897, 0
    %v913 = vsel %vm305, %v898, 0
    %v916 = vsel %vm305, %v899, 0
    %v919 = vsel %vm305, %v900, 0
    %v922 = vsel %vm305, %v901, 0
    %v925 = vsel %vm305, %v902, 0
    %v928 = vsel %vm330, %v885, 0
    %930 = vmatprep.subr.bf16.mxu0 0
    %931 = vmatpush1.bf16.msra.mxu0 0
    %932 = vmatprep.subr.bf16.mxu0 0
    %933 = vmatpush1.bf16.msra.mxu0 0
    %934 = vmatprep.subr.bf16.mxu0 0
    %935 = vmatpush1.bf16.msra.mxu0 0
    %936 = vmatprep.subr.bf16.mxu0 0
    %937 = vmatpush1.bf16.msra.mxu0 0
    %938 = vmatprep.subr.bf16.mxu0 0
    %939 = vmatpush1.bf16.msra.mxu0 0
    %940 = vmatprep.subr.bf16.mxu0 0
    %941 = vmatpush1.bf16.msra.mxu0 0
    %942 = vmatprep.subr.bf16.mxu0 0
    %943 = vmatpush1.bf16.msra.mxu0 0
    %944 = vmatprep.subr.bf16.mxu0 0
    %945 = vmatpush1.bf16.msra.mxu0 %v928
    %946 = vmatprep.subr.bf16.mxu0 0
    %947 = vmatpush2.bf16.msra.mxu0 0
    %948 = vmatprep.subr.bf16.mxu0 0
    %949 = vmatpush2.bf16.msra.mxu0 0
    %950 = vmatprep.subr.bf16.mxu0 0
    %951 = vmatpush2.bf16.msra.mxu0 0
    %952 = vmatprep.subr.bf16.mxu0 0
    %953 = vmatpush2.bf16.msra.mxu0 0
    %954 = vmatprep.subr.bf16.mxu0 0
    %955 = vmatpush2.bf16.msra.mxu0 0
    %956 = vmatprep.subr.bf16.mxu0 0
    %957 = vmatpush2.bf16.msra.mxu0 0
    %958 = vmatprep.subr.bf16.mxu0 0
    %959 = vmatpush2.bf16.msra.mxu0 0
    %960 = vmatprep.subr.bf16.mxu0 0
    %961 = vmatpush2.bf16.msra.mxu0 0
    %962 = vmatprep.mubr.bf16.mxu0 0
    %963 = vmatmul.mubr.bf16.gmra.mxu0 %v904
    %v964 = vpop.f32.mrf.mxu0
    %v965 = vadd.f32 0.0, %v964
    %v966 = vpop.f32.mrf.mxu0
    %v967 = vpop.f32.mrf.mxu0
    %v968 = vadd.f32 0.0, %v967
    %v969 = vpop.f32.mrf.mxu0
    %970 = vmatprep.mubr.bf16.mxu0 0
    %971 = vmatmul.mubr.bf16.gmra.mxu0 %v907
    %v972 = vpop.f32.mrf.mxu0
    %v973 = vadd.f32 0.0, %v972
    %v974 = vpop.f32.mrf.mxu0
    %v975 = vpop.f32.mrf.mxu0
    %v976 = vadd.f32 0.0, %v975
    %v977 = vpop.f32.mrf.mxu0
    %978 = vmatprep.mubr.bf16.mxu0 0
    %979 = vmatmul.mubr.bf16.gmra.mxu0 %v910
    %v980 = vpop.f32.mrf.mxu0
    %v981 = vadd.f32 0.0, %v980
    %v982 = vpop.f32.mrf.mxu0
    %v983 = vpop.f32.mrf.mxu0
    %v984 = vadd.f32 0.0, %v983
    %v985 = vpop.f32.mrf.mxu0
    %986 = vmatprep.mubr.bf16.mxu0 0
    %987 = vmatmul.mubr.bf16.gmra.mxu0 %v913
    %v988 = vpop.f32.mrf.mxu0
    %v989 = vadd.f32 0.0, %v988
    %v990 = vpop.f32.mrf.mxu0
    %v991 = vpop.f32.mrf.mxu0
    %v992 = vadd.f32 0.0, %v991
    %v993 = vpop.f32.mrf.mxu0
    %994 = vmatprep.mubr.bf16.mxu0 0
    %995 = vmatmul.mubr.bf16.gmra.mxu0 %v916
    %v996 = vpop.f32.mrf.mxu0
    %v997 = vadd.f32 0.0, %v996
    %v998 = vpop.f32.mrf.mxu0
    %v999 = vpop.f32.mrf.mxu0
    %v1000 = vadd.f32 0.0, %v999
    %v1001 = vpop.f32.mrf.mxu0
    %1002 = vmatprep.mubr.bf16.mxu0 0
    %1003 = vmatmul.mubr.bf16.gmra.mxu0 %v919
    %v1004 = vpop.f32.mrf.mxu0
    %v1005 = vadd.f32 0.0, %v1004
    %v1006 = vpop.f32.mrf.mxu0
    %v1007 = vpop.f32.mrf.mxu0
    %v1008 = vadd.f32 0.0, %v1007
    %v1009 = vpop.f32.mrf.mxu0
    %1010 = vmatprep.mubr.bf16.mxu0 0
    %1011 = vmatmul.mubr.bf16.gmra.mxu0 %v922
    %v1012 = vpop.f32.mrf.mxu0
    %v1013 = vadd.f32 0.0, %v1012
    %v1014 = vpop.f32.mrf.mxu0
    %v1015 = vpop.f32.mrf.mxu0
    %v1016 = vadd.f32 0.0, %v1015
    %v1017 = vpop.f32.mrf.mxu0
    %1018 = vmatprep.mubr.bf16.mxu0 0
    %1019 = vmatmul.mubr.bf16.gmra.mxu0 %v925
    %v1020 = vpop.f32.mrf.mxu0
    %v1021 = vadd.f32 0.0, %v1020
    %v1022 = vpop.f32.mrf.mxu0
    %v1023 = vpop.f32.mrf.mxu0
    %v1024 = vadd.f32 0.0, %v1023
    %v1025 = vpop.f32.mrf.mxu0
    %1026 = vdwg.mxu0
    %v1027 = vmax.f32 %v965, %v981
    %v1028 = vmax.f32 %v968, %v984
    %v1029 = vmax.f32 %v973, %v989
    %v1030 = vmax.f32 %v976, %v992
    %v1031 = vmax.f32 %v1027, %v997
    %v1032 = vmax.f32 %v1028, %v1000
    %v1033 = vmax.f32 %v1029, %v1005
    %v1034 = vmax.f32 %v1030, %v1008
    %v1035 = vmax.f32 %v1031, %v1013
    %v1036 = vmax.f32 %v1032, %v1016
    %v1037 = vmax.f32 %v1033, %v1021
    %v1038 = vmax.f32 %v1034, %v1024
    %v1039 = vmax.f32 %v1035, %v1036
    %v1040 = vmax.f32 %v1037, %v1038
    %v1041 = vmax.f32 %v1039, %v1040
    %v1042 = vrot.slane %v1041, 4
    %v1043 = vmax.f32 %v1041, %v1042
    %v1044 = vrot.slane %v1043, 2
    %v1045 = vmax.f32 %v1043, %v1044
    %v1046 = vrot.slane %v1045, 1
    %v1047 = vmax.f32 %v1045, %v1046
    %v1048 = vsub.f32 %v965, %v1047
    %v1049 = vsub.f32 %v968, %v1047
    %v1050 = vsub.f32 %v973, %v1047
    %v1051 = vsub.f32 %v976, %v1047
    %v1052 = vsub.f32 %v981, %v1047
    %v1053 = vsub.f32 %v984, %v1047
    %v1054 = vsub.f32 %v989, %v1047
    %v1055 = vsub.f32 %v992, %v1047
    %v1056 = vsub.f32 %v997, %v1047
    %v1057 = vsub.f32 %v1000, %v1047
    %v1058 = vsub.f32 %v1005, %v1047
    %v1059 = vsub.f32 %v1008, %v1047
    %v1060 = vsub.f32 %v1013, %v1047
    %v1061 = vsub.f32 %v1016, %v1047
    %v1062 = vsub.f32 %v1021, %v1047
    %v1063 = vsub.f32 %v1024, %v1047
    %v1064 = vmul.f32 %v1048, 1.442695
    %v1065 = vpow.pop %v1064
    %v1066 = vmul.f32 %v1049, 1.442695
    %v1067 = vpow.pop %v1066
    %v1068 = vmul.f32 %v1050, 1.442695
    %v1069 = vpow.pop %v1068
    %v1070 = vmul.f32 %v1051, 1.442695
    %v1071 = vpow.pop %v1070
    %v1072 = vmul.f32 %v1052, 1.442695
    %v1073 = vpow.pop %v1072
    %v1074 = vmul.f32 %v1053, 1.442695
    %v1075 = vpow.pop %v1074
    %v1076 = vmul.f32 %v1054, 1.442695
    %v1077 = vpow.pop %v1076
    %v1078 = vmul.f32 %v1055, 1.442695
    %v1079 = vpow.pop %v1078
    %v1080 = vmul.f32 %v1056, 1.442695
    %v1081 = vpow.pop %v1080
    %v1082 = vmul.f32 %v1057, 1.442695
    %v1083 = vpow.pop %v1082
    %v1084 = vmul.f32 %v1058, 1.442695
    %v1085 = vpow.pop %v1084
    %v1086 = vmul.f32 %v1059, 1.442695
    %v1087 = vpow.pop %v1086
    %v1088 = vmul.f32 %v1060, 1.442695
    %v1089 = vpow.pop %v1088
    %v1090 = vmul.f32 %v1061, 1.442695
    %v1091 = vpow.pop %v1090
    %v1092 = vmul.f32 %v1062, 1.442695
    %v1093 = vpow.pop %v1092
    %v1094 = vmul.f32 %v1063, 1.442695
    %v1095 = vpow.pop %v1094
    %v1096 = vadd.f32 %v1065, %v1067
    %v1097 = vadd.f32 %v1096, %v1069
    %v1098 = vadd.f32 %v1097, %v1071
    %v1099 = vadd.f32 %v1098, %v1073
    %v1100 = vadd.f32 %v1099, %v1075
    %v1101 = vadd.f32 %v1100, %v1077
    %v1102 = vadd.f32 %v1101, %v1079
    %v1103 = vadd.f32 %v1102, %v1081
    %v1104 = vadd.f32 %v1103, %v1083
    %v1105 = vadd.f32 %v1104, %v1085
    %v1106 = vadd.f32 %v1105, %v1087
    %v1107 = vadd.f32 %v1106, %v1089
    %v1108 = vadd.f32 %v1107, %v1091
    %v1109 = vadd.f32 %v1108, %v1093
    %v1110 = vadd.f32 %v1109, %v1095
    %v1111 = vrot.slane %v1110, 4
    %v1112 = vadd.f32 %v1110, %v1111
    %v1113 = vrot.slane %v1112, 2
    %v1114 = vadd.f32 %v1112, %v1113
    %v1115 = vrot.slane %v1114, 1
    %v1116 = vadd.f32 %v1114, %v1115
    %v1117 = vrcp.pop %v1116
    %v1118 = vmul.f32 %v1065, %v1117
    %v1119 = vmul.f32 %v1067, %v1117
    %v1120 = vmul.f32 %v1069, %v1117
    %v1121 = vmul.f32 %v1071, %v1117
    %v1122 = vmul.f32 %v1073, %v1117
    %v1123 = vmul.f32 %v1075, %v1117
    %v1124 = vmul.f32 %v1077, %v1117
    %v1125 = vmul.f32 %v1079, %v1117
    %v1126 = vmul.f32 %v1081, %v1117
    %v1127 = vmul.f32 %v1083, %v1117
    %v1128 = vmul.f32 %v1085, %v1117
    %v1129 = vmul.f32 %v1087, %v1117
    %v1130 = vmul.f32 %v1089, %v1117
    %v1131 = vmul.f32 %v1091, %v1117
    %v1132 = vmul.f32 %v1093, %v1117
    %v1133 = vmul.f32 %v1095, %v1117
    %v1134 = vpack.c.bf16 %v279, %v279
    %v1135 = vpack.c.bf16 %v1119, %v1118
    %v1136 = vpack.c.bf16 %v1121, %v1120
    %v1137 = vpack.c.bf16 %v1123, %v1122
    %v1138 = vpack.c.bf16 %v1125, %v1124
    %v1139 = vpack.c.bf16 %v1127, %v1126
    %v1140 = vpack.c.bf16 %v1129, %v1128
    %v1141 = vpack.c.bf16 %v1131, %v1130
    %v1142 = vpack.c.bf16 %v1133, %v1132
    %1143 = vmatprep.subr.bf16.mxu0 0
    %1144 = vmatpush1.bf16.msra.mxu0 %v1142
    %1145 = vmatprep.subr.bf16.mxu0 0
    %1146 = vmatpush1.bf16.msra.mxu0 %v1141
    %1147 = vmatprep.subr.bf16.mxu0 0
    %1148 = vmatpush1.bf16.msra.mxu0 %v1140
    %1149 = vmatprep.subr.bf16.mxu0 0
    %1150 = vmatpush1.bf16.msra.mxu0 %v1139
    %1151 = vmatprep.subr.bf16.mxu0 0
    %1152 = vmatpush1.bf16.msra.mxu0 %v1138
    %1153 = vmatprep.subr.bf16.mxu0 0
    %1154 = vmatpush1.bf16.msra.mxu0 %v1137
    %1155 = vmatprep.subr.bf16.mxu0 0
    %1156 = vmatpush1.bf16.msra.mxu0 %v1136
    %1157 = vmatprep.subr.bf16.mxu0 0
    %1158 = vmatpush1.bf16.msra.mxu0 %v1135
    %1159 = vmatprep.subr.bf16.mxu0 0
    %1160 = vmatpush2.bf16.msra.mxu0 0
    %1161 = vmatprep.subr.bf16.mxu0 0
    %1162 = vmatpush2.bf16.msra.mxu0 0
    %1163 = vmatprep.subr.bf16.mxu0 0
    %1164 = vmatpush2.bf16.msra.mxu0 0
    %1165 = vmatprep.subr.bf16.mxu0 0
    %1166 = vmatpush2.bf16.msra.mxu0 0
    %1167 = vmatprep.subr.bf16.mxu0 0
    %1168 = vmatpush2.bf16.msra.mxu0 0
    %1169 = vmatprep.subr.bf16.mxu0 0
    %1170 = vmatpush2.bf16.msra.mxu0 0
    %1171 = vmatprep.subr.bf16.mxu0 0
    %1172 = vmatpush2.bf16.msra.mxu0 0
    %1173 = vmatprep.subr.bf16.mxu0 0
    %1174 = vmatpush2.bf16.msra.mxu0 0
    %1175 = vmatprep.mubr.bf16.mxu0 0
    %1176 = vmatmul.mubr.bf16.gmra.mxu0 %v1134
    %v1177 = vpop.f32.mrf.mxu0
    %v1178 = vadd.f32 0.0, %v1177
    %v1179 = vpop.f32.mrf.mxu0
    %v1180 = vpop.f32.mrf.mxu0
    %v1181 = vpop.f32.mrf.mxu0
    %1182 = vdwg.mxu0
    %v1183 = vpack.c.bf16 %v243, %v243
    %v1184 = vpack.c.bf16 %v263, %v263
    %1185 = vxpose.xlu0.c.b16.start [1/8] %v1184, 128
    %1186 = vxpose.xlu0.c.b16.cont [2/8] 0, 128
    %1187 = vxpose.xlu0.c.b16.cont [3/8] 0, 128
    %1188 = vxpose.xlu0.c.b16.cont [4/8] 0, 128
    %1189 = vxpose.xlu0.c.b16.cont [5/8] 0, 128
    %1190 = vxpose.xlu0.c.b16.cont [6/8] 0, 128
    %1191 = vxpose.xlu0.c.b16.cont [7/8] 0, 128
    %1192 = vxpose.xlu0.c.b16.end [8/8] 0, 128
    %v1193 = vpop.trf.xlu0
    %v1194 = vpop.trf.xlu0
    %v1195 = vpop.trf.xlu0
    %v1196 = vpop.trf.xlu0
    %v1197 = vpop.trf.xlu0
    %v1198 = vpop.trf.xlu0
    %v1199 = vpop.trf.xlu0
    %v1200 = vpop.trf.xlu0
    %v1202 = vsel %vm305, %v1193, 0
    %v1205 = vsel %vm305, %v1194, 0
    %v1208 = vsel %vm305, %v1195, 0
    %v1211 = vsel %vm305, %v1196, 0
    %v1214 = vsel %vm305, %v1197, 0
    %v1217 = vsel %vm305, %v1198, 0
    %v1220 = vsel %vm305, %v1199, 0
    %v1223 = vsel %vm305, %v1200, 0
    %v1226 = vsel %vm330, %v1183, 0
    %1228 = vmatprep.subr.bf16.mxu0 0
    %1229 = vmatpush1.bf16.msra.mxu0 0
    %1230 = vmatprep.subr.bf16.mxu0 0
    %1231 = vmatpush1.bf16.msra.mxu0 0
    %1232 = vmatprep.subr.bf16.mxu0 0
    %1233 = vmatpush1.bf16.msra.mxu0 0
    %1234 = vmatprep.subr.bf16.mxu0 0
    %1235 = vmatpush1.bf16.msra.mxu0 0
    %1236 = vmatprep.subr.bf16.mxu0 0
    %1237 = vmatpush1.bf16.msra.mxu0 0
    %1238 = vmatprep.subr.bf16.mxu0 0
    %1239 = vmatpush1.bf16.msra.mxu0 0
    %1240 = vmatprep.subr.bf16.mxu0 0
    %1241 = vmatpush1.bf16.msra.mxu0 0
    %1242 = vmatprep.subr.bf16.mxu0 0
    %1243 = vmatpush1.bf16.msra.mxu0 %v1226
    %1244 = vmatprep.subr.bf16.mxu0 0
    %1245 = vmatpush2.bf16.msra.mxu0 0
    %1246 = vmatprep.subr.bf16.mxu0 0
    %1247 = vmatpush2.bf16.msra.mxu0 0
    %1248 = vmatprep.subr.bf16.mxu0 0
    %1249 = vmatpush2.bf16.msra.mxu0 0
    %1250 = vmatprep.subr.bf16.mxu0 0
    %1251 = vmatpush2.bf16.msra.mxu0 0
    %1252 = vmatprep.subr.bf16.mxu0 0
    %1253 = vmatpush2.bf16.msra.mxu0 0
    %1254 = vmatprep.subr.bf16.mxu0 0
    %1255 = vmatpush2.bf16.msra.mxu0 0
    %1256 = vmatprep.subr.bf16.mxu0 0
    %1257 = vmatpush2.bf16.msra.mxu0 0
    %1258 = vmatprep.subr.bf16.mxu0 0
    %1259 = vmatpush2.bf16.msra.mxu0 0
    %1260 = vmatprep.mubr.bf16.mxu0 0
    %1261 = vmatmul.mubr.bf16.gmra.mxu0 %v1202
    %v1262 = vpop.f32.mrf.mxu0
    %v1263 = vadd.f32 0.0, %v1262
    %v1264 = vpop.f32.mrf.mxu0
    %v1265 = vpop.f32.mrf.mxu0
    %v1266 = vadd.f32 0.0, %v1265
    %v1267 = vpop.f32.mrf.mxu0
    %1268 = vmatprep.mubr.bf16.mxu0 0
    %1269 = vmatmul.mubr.bf16.gmra.mxu0 %v1205
    %v1270 = vpop.f32.mrf.mxu0
    %v1271 = vadd.f32 0.0, %v1270
    %v1272 = vpop.f32.mrf.mxu0
    %v1273 = vpop.f32.mrf.mxu0
    %v1274 = vadd.f32 0.0, %v1273
    %v1275 = vpop.f32.mrf.mxu0
    %1276 = vmatprep.mubr.bf16.mxu0 0
    %1277 = vmatmul.mubr.bf16.gmra.mxu0 %v1208
    %v1278 = vpop.f32.mrf.mxu0
    %v1279 = vadd.f32 0.0, %v1278
    %v1280 = vpop.f32.mrf.mxu0
    %v1281 = vpop.f32.mrf.mxu0
    %v1282 = vadd.f32 0.0, %v1281
    %v1283 = vpop.f32.mrf.mxu0
    %1284 = vmatprep.mubr.bf16.mxu0 0
    %1285 = vmatmul.mubr.bf16.gmra.mxu0 %v1211
    %v1286 = vpop.f32.mrf.mxu0
    %v1287 = vadd.f32 0.0, %v1286
    %v1288 = vpop.f32.mrf.mxu0
    %v1289 = vpop.f32.mrf.mxu0
    %v1290 = vadd.f32 0.0, %v1289
    %v1291 = vpop.f32.mrf.mxu0
    %1292 = vmatprep.mubr.bf16.mxu0 0
    %1293 = vmatmul.mubr.bf16.gmra.mxu0 %v1214
    %v1294 = vpop.f32.mrf.mxu0
    %v1295 = vadd.f32 0.0, %v1294
    %v1296 = vpop.f32.mrf.mxu0
    %v1297 = vpop.f32.mrf.mxu0
    %v1298 = vadd.f32 0.0, %v1297
    %v1299 = vpop.f32.mrf.mxu0
    %1300 = vmatprep.mubr.bf16.mxu0 0
    %1301 = vmatmul.mubr.bf16.gmra.mxu0 %v1217
    %v1302 = vpop.f32.mrf.mxu0
    %v1303 = vadd.f32 0.0, %v1302
    %v1304 = vpop.f32.mrf.mxu0
    %v1305 = vpop.f32.mrf.mxu0
    %v1306 = vadd.f32 0.0, %v1305
    %v1307 = vpop.f32.mrf.mxu0
    %1308 = vmatprep.mubr.bf16.mxu0 0
    %1309 = vmatmul.mubr.bf16.gmra.mxu0 %v1220
    %v1310 = vpop.f32.mrf.mxu0
    %v1311 = vadd.f32 0.0, %v1310
    %v1312 = vpop.f32.mrf.mxu0
    %v1313 = vpop.f32.mrf.mxu0
    %v1314 = vadd.f32 0.0, %v1313
    %v1315 = vpop.f32.mrf.mxu0
    %1316 = vmatprep.mubr.bf16.mxu0 0
    %1317 = vmatmul.mubr.bf16.gmra.mxu0 %v1223
    %v1318 = vpop.f32.mrf.mxu0
    %v1319 = vadd.f32 0.0, %v1318
    %v1320 = vpop.f32.mrf.mxu0
    %v1321 = vpop.f32.mrf.mxu0
    %v1322 = vadd.f32 0.0, %v1321
    %v1323 = vpop.f32.mrf.mxu0
    %1324 = vdwg.mxu0
    %v1325 = vmax.f32 %v1263, %v1279
    %v1326 = vmax.f32 %v1266, %v1282
    %v1327 = vmax.f32 %v1271, %v1287
    %v1328 = vmax.f32 %v1274, %v1290
    %v1329 = vmax.f32 %v1325, %v1295
    %v1330 = vmax.f32 %v1326, %v1298
    %v1331 = vmax.f32 %v1327, %v1303
    %v1332 = vmax.f32 %v1328, %v1306
    %v1333 = vmax.f32 %v1329, %v1311
    %v1334 = vmax.f32 %v1330, %v1314
    %v1335 = vmax.f32 %v1331, %v1319
    %v1336 = vmax.f32 %v1332, %v1322
    %v1337 = vmax.f32 %v1333, %v1334
    %v1338 = vmax.f32 %v1335, %v1336
    %v1339 = vmax.f32 %v1337, %v1338
    %v1340 = vrot.slane %v1339, 4
    %v1341 = vmax.f32 %v1339, %v1340
    %v1342 = vrot.slane %v1341, 2
    %v1343 = vmax.f32 %v1341, %v1342
    %v1344 = vrot.slane %v1343, 1
    %v1345 = vmax.f32 %v1343, %v1344
    %v1346 = vsub.f32 %v1263, %v1345
    %v1347 = vsub.f32 %v1266, %v1345
    %v1348 = vsub.f32 %v1271, %v1345
    %v1349 = vsub.f32 %v1274, %v1345
    %v1350 = vsub.f32 %v1279, %v1345
    %v1351 = vsub.f32 %v1282, %v1345
    %v1352 = vsub.f32 %v1287, %v1345
    %v1353 = vsub.f32 %v1290, %v1345
    %v1354 = vsub.f32 %v1295, %v1345
    %v1355 = vsub.f32 %v1298, %v1345
    %v1356 = vsub.f32 %v1303, %v1345
    %v1357 = vsub.f32 %v1306, %v1345
    %v1358 = vsub.f32 %v1311, %v1345
    %v1359 = vsub.f32 %v1314, %v1345
    %v1360 = vsub.f32 %v1319, %v1345
    %v1361 = vsub.f32 %v1322, %v1345
    %v1362 = vmul.f32 %v1346, 1.442695
    %v1363 = vpow.pop %v1362
    %v1364 = vmul.f32 %v1347, 1.442695
    %v1365 = vpow.pop %v1364
    %v1366 = vmul.f32 %v1348, 1.442695
    %v1367 = vpow.pop %v1366
    %v1368 = vmul.f32 %v1349, 1.442695
    %v1369 = vpow.pop %v1368
    %v1370 = vmul.f32 %v1350, 1.442695
    %v1371 = vpow.pop %v1370
    %v1372 = vmul.f32 %v1351, 1.442695
    %v1373 = vpow.pop %v1372
    %v1374 = vmul.f32 %v1352, 1.442695
    %v1375 = vpow.pop %v1374
    %v1376 = vmul.f32 %v1353, 1.442695
    %v1377 = vpow.pop %v1376
    %v1378 = vmul.f32 %v1354, 1.442695
    %v1379 = vpow.pop %v1378
    %v1380 = vmul.f32 %v1355, 1.442695
    %v1381 = vpow.pop %v1380
    %v1382 = vmul.f32 %v1356, 1.442695
    %v1383 = vpow.pop %v1382
    %v1384 = vmul.f32 %v1357, 1.442695
    %v1385 = vpow.pop %v1384
    %v1386 = vmul.f32 %v1358, 1.442695
    %v1387 = vpow.pop %v1386
    %v1388 = vmul.f32 %v1359, 1.442695
    %v1389 = vpow.pop %v1388
    %v1390 = vmul.f32 %v1360, 1.442695
    %v1391 = vpow.pop %v1390
    %v1392 = vmul.f32 %v1361, 1.442695
    %v1393 = vpow.pop %v1392
    %v1394 = vadd.f32 %v1363, %v1365
    %v1395 = vadd.f32 %v1394, %v1367
    %v1396 = vadd.f32 %v1395, %v1369
    %v1397 = vadd.f32 %v1396, %v1371
    %v1398 = vadd.f32 %v1397, %v1373
    %v1399 = vadd.f32 %v1398, %v1375
    %v1400 = vadd.f32 %v1399, %v1377
    %v1401 = vadd.f32 %v1400, %v1379
    %v1402 = vadd.f32 %v1401, %v1381
    %v1403 = vadd.f32 %v1402, %v1383
    %v1404 = vadd.f32 %v1403, %v1385
    %v1405 = vadd.f32 %v1404, %v1387
    %v1406 = vadd.f32 %v1405, %v1389
    %v1407 = vadd.f32 %v1406, %v1391
    %v1408 = vadd.f32 %v1407, %v1393
    %v1409 = vrot.slane %v1408, 4
    %v1410 = vadd.f32 %v1408, %v1409
    %v1411 = vrot.slane %v1410, 2
    %v1412 = vadd.f32 %v1410, %v1411
    %v1413 = vrot.slane %v1412, 1
    %v1414 = vadd.f32 %v1412, %v1413
    %v1415 = vrcp.pop %v1414
    %v1416 = vmul.f32 %v1363, %v1415
    %v1417 = vmul.f32 %v1365, %v1415
    %v1418 = vmul.f32 %v1367, %v1415
    %v1419 = vmul.f32 %v1369, %v1415
    %v1420 = vmul.f32 %v1371, %v1415
    %v1421 = vmul.f32 %v1373, %v1415
    %v1422 = vmul.f32 %v1375, %v1415
    %v1423 = vmul.f32 %v1377, %v1415
    %v1424 = vmul.f32 %v1379, %v1415
    %v1425 = vmul.f32 %v1381, %v1415
    %v1426 = vmul.f32 %v1383, %v1415
    %v1427 = vmul.f32 %v1385, %v1415
    %v1428 = vmul.f32 %v1387, %v1415
    %v1429 = vmul.f32 %v1389, %v1415
    %v1430 = vmul.f32 %v1391, %v1415
    %v1431 = vmul.f32 %v1393, %v1415
    %v1432 = vpack.c.bf16 %v283, %v283
    %v1433 = vpack.c.bf16 %v1417, %v1416
    %v1434 = vpack.c.bf16 %v1419, %v1418
    %v1435 = vpack.c.bf16 %v1421, %v1420
    %v1436 = vpack.c.bf16 %v1423, %v1422
    %v1437 = vpack.c.bf16 %v1425, %v1424
    %v1438 = vpack.c.bf16 %v1427, %v1426
    %v1439 = vpack.c.bf16 %v1429, %v1428
    %v1440 = vpack.c.bf16 %v1431, %v1430
    %1441 = vmatprep.subr.bf16.mxu0 0
    %1442 = vmatpush1.bf16.msra.mxu0 %v1440
    %1443 = vmatprep.subr.bf16.mxu0 0
    %1444 = vmatpush1.bf16.msra.mxu0 %v1439
    %1445 = vmatprep.subr.bf16.mxu0 0
    %1446 = vmatpush1.bf16.msra.mxu0 %v1438
    %1447 = vmatprep.subr.bf16.mxu0 0
    %1448 = vmatpush1.bf16.msra.mxu0 %v1437
    %1449 = vmatprep.subr.bf16.mxu0 0
    %1450 = vmatpush1.bf16.msra.mxu0 %v1436
    %1451 = vmatprep.subr.bf16.mxu0 0
    %1452 = vmatpush1.bf16.msra.mxu0 %v1435
    %1453 = vmatprep.subr.bf16.mxu0 0
    %1454 = vmatpush1.bf16.msra.mxu0 %v1434
    %1455 = vmatprep.subr.bf16.mxu0 0
    %1456 = vmatpush1.bf16.msra.mxu0 %v1433
    %1457 = vmatprep.subr.bf16.mxu0 0
    %1458 = vmatpush2.bf16.msra.mxu0 0
    %1459 = vmatprep.subr.bf16.mxu0 0
    %1460 = vmatpush2.bf16.msra.mxu0 0
    %1461 = vmatprep.subr.bf16.mxu0 0
    %1462 = vmatpush2.bf16.msra.mxu0 0
    %1463 = vmatprep.subr.bf16.mxu0 0
    %1464 = vmatpush2.bf16.msra.mxu0 0
    %1465 = vmatprep.subr.bf16.mxu0 0
    %1466 = vmatpush2.bf16.msra.mxu0 0
    %1467 = vmatprep.subr.bf16.mxu0 0
    %1468 = vmatpush2.bf16.msra.mxu0 0
    %1469 = vmatprep.subr.bf16.mxu0 0
    %1470 = vmatpush2.bf16.msra.mxu0 0
    %1471 = vmatprep.subr.bf16.mxu0 0
    %1472 = vmatpush2.bf16.msra.mxu0 0
    %1473 = vmatprep.mubr.bf16.mxu0 0
    %1474 = vmatmul.mubr.bf16.gmra.mxu0 %v1432
    %v1475 = vpop.f32.mrf.mxu0
    %v1476 = vadd.f32 0.0, %v1475
    %v1477 = vpop.f32.mrf.mxu0
    %v1478 = vpop.f32.mrf.mxu0
    %v1479 = vpop.f32.mrf.mxu0
    %1480 = vdwg.mxu0
    %v1481 = vpack.c.bf16 %v231, %v231
    %v1482 = vpack.c.bf16 %v251, %v251
    %1483 = vxpose.xlu0.c.b16.start [1/8] %v1482, 128
    %1484 = vxpose.xlu0.c.b16.cont [2/8] 0, 128
    %1485 = vxpose.xlu0.c.b16.cont [3/8] 0, 128
    %1486 = vxpose.xlu0.c.b16.cont [4/8] 0, 128
    %1487 = vxpose.xlu0.c.b16.cont [5/8] 0, 128
    %1488 = vxpose.xlu0.c.b16.cont [6/8] 0, 128
    %1489 = vxpose.xlu0.c.b16.cont [7/8] 0, 128
    %1490 = vxpose.xlu0.c.b16.end [8/8] 0, 128
    %v1491 = vpop.trf.xlu0
    %v1492 = vpop.trf.xlu0
    %v1493 = vpop.trf.xlu0
    %v1494 = vpop.trf.xlu0
    %v1495 = vpop.trf.xlu0
    %v1496 = vpop.trf.xlu0
    %v1497 = vpop.trf.xlu0
    %v1498 = vpop.trf.xlu0
    %v1500 = vsel %vm305, %v1491, 0
    %v1503 = vsel %vm305, %v1492, 0
    %v1506 = vsel %vm305, %v1493, 0
    %v1509 = vsel %vm305, %v1494, 0
    %v1512 = vsel %vm305, %v1495, 0
    %v1515 = vsel %vm305, %v1496, 0
    %v1518 = vsel %vm305, %v1497, 0
    %v1521 = vsel %vm305, %v1498, 0
    %v1524 = vsel %vm330, %v1481, 0
    %1526 = vmatprep.subr.bf16.mxu0 0
    %1527 = vmatpush1.bf16.msra.mxu0 0
    %1528 = vmatprep.subr.bf16.mxu0 0
    %1529 = vmatpush1.bf16.msra.mxu0 0
    %1530 = vmatprep.subr.bf16.mxu0 0
    %1531 = vmatpush1.bf16.msra.mxu0 0
    %1532 = vmatprep.subr.bf16.mxu0 0
    %1533 = vmatpush1.bf16.msra.mxu0 0
    %1534 = vmatprep.subr.bf16.mxu0 0
    %1535 = vmatpush1.bf16.msra.mxu0 0
    %1536 = vmatprep.subr.bf16.mxu0 0
    %1537 = vmatpush1.bf16.msra.mxu0 0
    %1538 = vmatprep.subr.bf16.mxu0 0
    %1539 = vmatpush1.bf16.msra.mxu0 0
    %1540 = vmatprep.subr.bf16.mxu0 0
    %1541 = vmatpush1.bf16.msra.mxu0 %v1524
    %1542 = vmatprep.subr.bf16.mxu0 0
    %1543 = vmatpush2.bf16.msra.mxu0 0
    %1544 = vmatprep.subr.bf16.mxu0 0
    %1545 = vmatpush2.bf16.msra.mxu0 0
    %1546 = vmatprep.subr.bf16.mxu0 0
    %1547 = vmatpush2.bf16.msra.mxu0 0
    %1548 = vmatprep.subr.bf16.mxu0 0
    %1549 = vmatpush2.bf16.msra.mxu0 0
    %1550 = vmatprep.subr.bf16.mxu0 0
    %1551 = vmatpush2.bf16.msra.mxu0 0
    %1552 = vmatprep.subr.bf16.mxu0 0
    %1553 = vmatpush2.bf16.msra.mxu0 0
    %1554 = vmatprep.subr.bf16.mxu0 0
    %1555 = vmatpush2.bf16.msra.mxu0 0
    %1556 = vmatprep.subr.bf16.mxu0 0
    %1557 = vmatpush2.bf16.msra.mxu0 0
    %1558 = vmatprep.mubr.bf16.mxu0 0
    %1559 = vmatmul.mubr.bf16.gmra.mxu0 %v1500
    %v1560 = vpop.f32.mrf.mxu0
    %v1561 = vadd.f32 0.0, %v1560
    %v1562 = vpop.f32.mrf.mxu0
    %v1563 = vpop.f32.mrf.mxu0
    %v1564 = vadd.f32 0.0, %v1563
    %v1565 = vpop.f32.mrf.mxu0
    %1566 = vmatprep.mubr.bf16.mxu0 0
    %1567 = vmatmul.mubr.bf16.gmra.mxu0 %v1503
    %v1568 = vpop.f32.mrf.mxu0
    %v1569 = vadd.f32 0.0, %v1568
    %v1570 = vpop.f32.mrf.mxu0
    %v1571 = vpop.f32.mrf.mxu0
    %v1572 = vadd.f32 0.0, %v1571
    %v1573 = vpop.f32.mrf.mxu0
    %1574 = vmatprep.mubr.bf16.mxu0 0
    %1575 = vmatmul.mubr.bf16.gmra.mxu0 %v1506
    %v1576 = vpop.f32.mrf.mxu0
    %v1577 = vadd.f32 0.0, %v1576
    %v1578 = vpop.f32.mrf.mxu0
    %v1579 = vpop.f32.mrf.mxu0
    %v1580 = vadd.f32 0.0, %v1579
    %v1581 = vpop.f32.mrf.mxu0
    %1582 = vmatprep.mubr.bf16.mxu0 0
    %1583 = vmatmul.mubr.bf16.gmra.mxu0 %v1509
    %v1584 = vpop.f32.mrf.mxu0
    %v1585 = vadd.f32 0.0, %v1584
    %v1586 = vpop.f32.mrf.mxu0
    %v1587 = vpop.f32.mrf.mxu0
    %v1588 = vadd.f32 0.0, %v1587
    %v1589 = vpop.f32.mrf.mxu0
    %1590 = vmatprep.mubr.bf16.mxu0 0
    %1591 = vmatmul.mubr.bf16.gmra.mxu0 %v1512
    %v1592 = vpop.f32.mrf.mxu0
    %v1593 = vadd.f32 0.0, %v1592
    %v1594 = vpop.f32.mrf.mxu0
    %v1595 = vpop.f32.mrf.mxu0
    %v1596 = vadd.f32 0.0, %v1595
    %v1597 = vpop.f32.mrf.mxu0
    %1598 = vmatprep.mubr.bf16.mxu0 0
    %1599 = vmatmul.mubr.bf16.gmra.mxu0 %v1515
    %v1600 = vpop.f32.mrf.mxu0
    %v1601 = vadd.f32 0.0, %v1600
    %v1602 = vpop.f32.mrf.mxu0
    %v1603 = vpop.f32.mrf.mxu0
    %v1604 = vadd.f32 0.0, %v1603
    %v1605 = vpop.f32.mrf.mxu0
    %1606 = vmatprep.mubr.bf16.mxu0 0
    %1607 = vmatmul.mubr.bf16.gmra.mxu0 %v1518
    %v1608 = vpop.f32.mrf.mxu0
    %v1609 = vadd.f32 0.0, %v1608
    %v1610 = vpop.f32.mrf.mxu0
    %v1611 = vpop.f32.mrf.mxu0
    %v1612 = vadd.f32 0.0, %v1611
    %v1613 = vpop.f32.mrf.mxu0
    %1614 = vmatprep.mubr.bf16.mxu0 0
    %1615 = vmatmul.mubr.bf16.gmra.mxu0 %v1521
    %v1616 = vpop.f32.mrf.mxu0
    %v1617 = vadd.f32 0.0, %v1616
    %v1618 = vpop.f32.mrf.mxu0
    %v1619 = vpop.f32.mrf.mxu0
    %v1620 = vadd.f32 0.0, %v1619
    %v1621 = vpop.f32.mrf.mxu0
    %1622 = vdwg.mxu0
    %v1623 = vmax.f32 %v1561, %v1577
    %v1624 = vmax.f32 %v1564, %v1580
    %v1625 = vmax.f32 %v1569, %v1585
    %v1626 = vmax.f32 %v1572, %v1588
    %v1627 = vmax.f32 %v1623, %v1593
    %v1628 = vmax.f32 %v1624, %v1596
    %v1629 = vmax.f32 %v1625, %v1601
    %v1630 = vmax.f32 %v1626, %v1604
    %v1631 = vmax.f32 %v1627, %v1609
    %v1632 = vmax.f32 %v1628, %v1612
    %v1633 = vmax.f32 %v1629, %v1617
    %v1634 = vmax.f32 %v1630, %v1620
    %v1635 = vmax.f32 %v1631, %v1632
    %v1636 = vmax.f32 %v1633, %v1634
    %v1637 = vmax.f32 %v1635, %v1636
    %v1638 = vrot.slane %v1637, 4
    %v1639 = vmax.f32 %v1637, %v1638
    %v1640 = vrot.slane %v1639, 2
    %v1641 = vmax.f32 %v1639, %v1640
    %v1642 = vrot.slane %v1641, 1
    %v1643 = vmax.f32 %v1641, %v1642
    %v1644 = vsub.f32 %v1561, %v1643
    %v1645 = vsub.f32 %v1564, %v1643
    %v1646 = vsub.f32 %v1569, %v1643
    %v1647 = vsub.f32 %v1572, %v1643
    %v1648 = vsub.f32 %v1577, %v1643
    %v1649 = vsub.f32 %v1580, %v1643
    %v1650 = vsub.f32 %v1585, %v1643
    %v1651 = vsub.f32 %v1588, %v1643
    %v1652 = vsub.f32 %v1593, %v1643
    %v1653 = vsub.f32 %v1596, %v1643
    %v1654 = vsub.f32 %v1601, %v1643
    %v1655 = vsub.f32 %v1604, %v1643
    %v1656 = vsub.f32 %v1609, %v1643
    %v1657 = vsub.f32 %v1612, %v1643
    %v1658 = vsub.f32 %v1617, %v1643
    %v1659 = vsub.f32 %v1620, %v1643
    %v1660 = vmul.f32 %v1644, 1.442695
    %v1661 = vpow.pop %v1660
    %v1662 = vmul.f32 %v1645, 1.442695
    %v1663 = vpow.pop %v1662
    %v1664 = vmul.f32 %v1646, 1.442695
    %v1665 = vpow.pop %v1664
    %v1666 = vmul.f32 %v1647, 1.442695
    %v1667 = vpow.pop %v1666
    %v1668 = vmul.f32 %v1648, 1.442695
    %v1669 = vpow.pop %v1668
    %v1670 = vmul.f32 %v1649, 1.442695
    %v1671 = vpow.pop %v1670
    %v1672 = vmul.f32 %v1650, 1.442695
    %v1673 = vpow.pop %v1672
    %v1674 = vmul.f32 %v1651, 1.442695
    %v1675 = vpow.pop %v1674
    %v1676 = vmul.f32 %v1652, 1.442695
    %v1677 = vpow.pop %v1676
    %v1678 = vmul.f32 %v1653, 1.442695
    %v1679 = vpow.pop %v1678
    %v1680 = vmul.f32 %v1654, 1.442695
    %v1681 = vpow.pop %v1680
    %v1682 = vmul.f32 %v1655, 1.442695
    %v1683 = vpow.pop %v1682
    %v1684 = vmul.f32 %v1656, 1.442695
    %v1685 = vpow.pop %v1684
    %v1686 = vmul.f32 %v1657, 1.442695
    %v1687 = vpow.pop %v1686
    %v1688 = vmul.f32 %v1658, 1.442695
    %v1689 = vpow.pop %v1688
    %v1690 = vmul.f32 %v1659, 1.442695
    %v1691 = vpow.pop %v1690
    %v1692 = vadd.f32 %v1661, %v1663
    %v1693 = vadd.f32 %v1692, %v1665
    %v1694 = vadd.f32 %v1693, %v1667
    %v1695 = vadd.f32 %v1694, %v1669
    %v1696 = vadd.f32 %v1695, %v1671
    %v1697 = vadd.f32 %v1696, %v1673
    %v1698 = vadd.f32 %v1697, %v1675
    %v1699 = vadd.f32 %v1698, %v1677
    %v1700 = vadd.f32 %v1699, %v1679
    %v1701 = vadd.f32 %v1700, %v1681
    %v1702 = vadd.f32 %v1701, %v1683
    %v1703 = vadd.f32 %v1702, %v1685
    %v1704 = vadd.f32 %v1703, %v1687
    %v1705 = vadd.f32 %v1704, %v1689
    %v1706 = vadd.f32 %v1705, %v1691
    %v1707 = vrot.slane %v1706, 4
    %v1708 = vadd.f32 %v1706, %v1707
    %v1709 = vrot.slane %v1708, 2
    %v1710 = vadd.f32 %v1708, %v1709
    %v1711 = vrot.slane %v1710, 1
    %v1712 = vadd.f32 %v1710, %v1711
    %v1713 = vrcp.pop %v1712
    %v1714 = vmul.f32 %v1661, %v1713
    %v1715 = vmul.f32 %v1663, %v1713
    %v1716 = vmul.f32 %v1665, %v1713
    %v1717 = vmul.f32 %v1667, %v1713
    %v1718 = vmul.f32 %v1669, %v1713
    %v1719 = vmul.f32 %v1671, %v1713
    %v1720 = vmul.f32 %v1673, %v1713
    %v1721 = vmul.f32 %v1675, %v1713
    %v1722 = vmul.f32 %v1677, %v1713
    %v1723 = vmul.f32 %v1679, %v1713
    %v1724 = vmul.f32 %v1681, %v1713
    %v1725 = vmul.f32 %v1683, %v1713
    %v1726 = vmul.f32 %v1685, %v1713
    %v1727 = vmul.f32 %v1687, %v1713
    %v1728 = vmul.f32 %v1689, %v1713
    %v1729 = vmul.f32 %v1691, %v1713
    %v1730 = vpack.c.bf16 %v271, %v271
    %v1731 = vpack.c.bf16 %v1715, %v1714
    %v1732 = vpack.c.bf16 %v1717, %v1716
    %v1733 = vpack.c.bf16 %v1719, %v1718
    %v1734 = vpack.c.bf16 %v1721, %v1720
    %v1735 = vpack.c.bf16 %v1723, %v1722
    %v1736 = vpack.c.bf16 %v1725, %v1724
    %v1737 = vpack.c.bf16 %v1727, %v1726
    %v1738 = vpack.c.bf16 %v1729, %v1728
    %1739 = vmatprep.subr.bf16.mxu0 0
    %1740 = vmatpush1.bf16.msra.mxu0 %v1738
    %1741 = vmatprep.subr.bf16.mxu0 0
    %1742 = vmatpush1.bf16.msra.mxu0 %v1737
    %1743 = vmatprep.subr.bf16.mxu0 0
    %1744 = vmatpush1.bf16.msra.mxu0 %v1736
    %1745 = vmatprep.subr.bf16.mxu0 0
    %1746 = vmatpush1.bf16.msra.mxu0 %v1735
    %1747 = vmatprep.subr.bf16.mxu0 0
    %1748 = vmatpush1.bf16.msra.mxu0 %v1734
    %1749 = vmatprep.subr.bf16.mxu0 0
    %1750 = vmatpush1.bf16.msra.mxu0 %v1733
    %1751 = vmatprep.subr.bf16.mxu0 0
    %1752 = vmatpush1.bf16.msra.mxu0 %v1732
    %1753 = vmatprep.subr.bf16.mxu0 0
    %1754 = vmatpush1.bf16.msra.mxu0 %v1731
    %1755 = vmatprep.subr.bf16.mxu0 0
    %1756 = vmatpush2.bf16.msra.mxu0 0
    %1757 = vmatprep.subr.bf16.mxu0 0
    %1758 = vmatpush2.bf16.msra.mxu0 0
    %1759 = vmatprep.subr.bf16.mxu0 0
    %1760 = vmatpush2.bf16.msra.mxu0 0
    %1761 = vmatprep.subr.bf16.mxu0 0
    %1762 = vmatpush2.bf16.msra.mxu0 0
    %1763 = vmatprep.subr.bf16.mxu0 0
    %1764 = vmatpush2.bf16.msra.mxu0 0
    %1765 = vmatprep.subr.bf16.mxu0 0
    %1766 = vmatpush2.bf16.msra.mxu0 0
    %1767 = vmatprep.subr.bf16.mxu0 0
    %1768 = vmatpush2.bf16.msra.mxu0 0
    %1769 = vmatprep.subr.bf16.mxu0 0
    %1770 = vmatpush2.bf16.msra.mxu0 0
    %1771 = vmatprep.mubr.bf16.mxu0 0
    %1772 = vmatmul.mubr.bf16.gmra.mxu0 %v1730
    %v1773 = vpop.f32.mrf.mxu0
    %v1774 = vadd.f32 0.0, %v1773
    %v1775 = vpop.f32.mrf.mxu0
    %v1776 = vpop.f32.mrf.mxu0
    %v1777 = vpop.f32.mrf.mxu0
    %1778 = vdwg.mxu0
    %v1779 = vpack.c.bf16 %v235, %v235
    %v1780 = vpack.c.bf16 %v255, %v255
    %1781 = vxpose.xlu0.c.b16.start [1/8] %v1780, 128
    %1782 = vxpose.xlu0.c.b16.cont [2/8] 0, 128
    %1783 = vxpose.xlu0.c.b16.cont [3/8] 0, 128
    %1784 = vxpose.xlu0.c.b16.cont [4/8] 0, 128
    %1785 = vxpose.xlu0.c.b16.cont [5/8] 0, 128
    %1786 = vxpose.xlu0.c.b16.cont [6/8] 0, 128
    %1787 = vxpose.xlu0.c.b16.cont [7/8] 0, 128
    %1788 = vxpose.xlu0.c.b16.end [8/8] 0, 128
    %v1789 = vpop.trf.xlu0
    %v1790 = vpop.trf.xlu0
    %v1791 = vpop.trf.xlu0
    %v1792 = vpop.trf.xlu0
    %v1793 = vpop.trf.xlu0
    %v1794 = vpop.trf.xlu0
    %v1795 = vpop.trf.xlu0
    %v1796 = vpop.trf.xlu0
    %v1798 = vsel %vm305, %v1789, 0
    %v1801 = vsel %vm305, %v1790, 0
    %v1804 = vsel %vm305, %v1791, 0
    %v1807 = vsel %vm305, %v1792, 0
    %v1810 = vsel %vm305, %v1793, 0
    %v1813 = vsel %vm305, %v1794, 0
    %v1816 = vsel %vm305, %v1795, 0
    %v1819 = vsel %vm305, %v1796, 0
    %v1822 = vsel %vm330, %v1779, 0
    %1824 = vmatprep.subr.bf16.mxu0 0
    %1825 = vmatpush1.bf16.msra.mxu0 0
    %1826 = vmatprep.subr.bf16.mxu0 0
    %1827 = vmatpush1.bf16.msra.mxu0 0
    %1828 = vmatprep.subr.bf16.mxu0 0
    %1829 = vmatpush1.bf16.msra.mxu0 0
    %1830 = vmatprep.subr.bf16.mxu0 0
    %1831 = vmatpush1.bf16.msra.mxu0 0
    %1832 = vmatprep.subr.bf16.mxu0 0
    %1833 = vmatpush1.bf16.msra.mxu0 0
    %1834 = vmatprep.subr.bf16.mxu0 0
    %1835 = vmatpush1.bf16.msra.mxu0 0
    %1836 = vmatprep.subr.bf16.mxu0 0
    %1837 = vmatpush1.bf16.msra.mxu0 0
    %1838 = vmatprep.subr.bf16.mxu0 0
    %1839 = vmatpush1.bf16.msra.mxu0 %v1822
    %1840 = vmatprep.subr.bf16.mxu0 0
    %1841 = vmatpush2.bf16.msra.mxu0 0
    %1842 = vmatprep.subr.bf16.mxu0 0
    %1843 = vmatpush2.bf16.msra.mxu0 0
    %1844 = vmatprep.subr.bf16.mxu0 0
    %1845 = vmatpush2.bf16.msra.mxu0 0
    %1846 = vmatprep.subr.bf16.mxu0 0
    %1847 = vmatpush2.bf16.msra.mxu0 0
    %1848 = vmatprep.subr.bf16.mxu0 0
    %1849 = vmatpush2.bf16.msra.mxu0 0
    %1850 = vmatprep.subr.bf16.mxu0 0
    %1851 = vmatpush2.bf16.msra.mxu0 0
    %1852 = vmatprep.subr.bf16.mxu0 0
    %1853 = vmatpush2.bf16.msra.mxu0 0
    %1854 = vmatprep.subr.bf16.mxu0 0
    %1855 = vmatpush2.bf16.msra.mxu0 0
    %1856 = vmatprep.mubr.bf16.mxu0 0
    %1857 = vmatmul.mubr.bf16.gmra.mxu0 %v1798
    %v1858 = vpop.f32.mrf.mxu0
    %v1859 = vadd.f32 0.0, %v1858
    %v1860 = vpop.f32.mrf.mxu0
    %v1861 = vpop.f32.mrf.mxu0
    %v1862 = vadd.f32 0.0, %v1861
    %v1863 = vpop.f32.mrf.mxu0
    %1864 = vmatprep.mubr.bf16.mxu0 0
    %1865 = vmatmul.mubr.bf16.gmra.mxu0 %v1801
    %v1866 = vpop.f32.mrf.mxu0
    %v1867 = vadd.f32 0.0, %v1866
    %v1868 = vpop.f32.mrf.mxu0
    %v1869 = vpop.f32.mrf.mxu0
    %v1870 = vadd.f32 0.0, %v1869
    %v1871 = vpop.f32.mrf.mxu0
    %1872 = vmatprep.mubr.bf16.mxu0 0
    %1873 = vmatmul.mubr.bf16.gmra.mxu0 %v1804
    %v1874 = vpop.f32.mrf.mxu0
    %v1875 = vadd.f32 0.0, %v1874
    %v1876 = vpop.f32.mrf.mxu0
    %v1877 = vpop.f32.mrf.mxu0
    %v1878 = vadd.f32 0.0, %v1877
    %v1879 = vpop.f32.mrf.mxu0
    %1880 = vmatprep.mubr.bf16.mxu0 0
    %1881 = vmatmul.mubr.bf16.gmra.mxu0 %v1807
    %v1882 = vpop.f32.mrf.mxu0
    %v1883 = vadd.f32 0.0, %v1882
    %v1884 = vpop.f32.mrf.mxu0
    %v1885 = vpop.f32.mrf.mxu0
    %v1886 = vadd.f32 0.0, %v1885
    %v1887 = vpop.f32.mrf.mxu0
    %1888 = vmatprep.mubr.bf16.mxu0 0
    %1889 = vmatmul.mubr.bf16.gmra.mxu0 %v1810
    %v1890 = vpop.f32.mrf.mxu0
    %v1891 = vadd.f32 0.0, %v1890
    %v1892 = vpop.f32.mrf.mxu0
    %v1893 = vpop.f32.mrf.mxu0
    %v1894 = vadd.f32 0.0, %v1893
    %v1895 = vpop.f32.mrf.mxu0
    %1896 = vmatprep.mubr.bf16.mxu0 0
    %1897 = vmatmul.mubr.bf16.gmra.mxu0 %v1813
    %v1898 = vpop.f32.mrf.mxu0
    %v1899 = vadd.f32 0.0, %v1898
    %v1900 = vpop.f32.mrf.mxu0
    %v1901 = vpop.f32.mrf.mxu0
    %v1902 = vadd.f32 0.0, %v1901
    %v1903 = vpop.f32.mrf.mxu0
    %1904 = vmatprep.mubr.bf16.mxu0 0
    %1905 = vmatmul.mubr.bf16.gmra.mxu0 %v1816
    %v1906 = vpop.f32.mrf.mxu0
    %v1907 = vadd.f32 0.0, %v1906
    %v1908 = vpop.f32.mrf.mxu0
    %v1909 = vpop.f32.mrf.mxu0
    %v1910 = vadd.f32 0.0, %v1909
    %v1911 = vpop.f32.mrf.mxu0
    %1912 = vmatprep.mubr.bf16.mxu0 0
    %1913 = vmatmul.mubr.bf16.gmra.mxu0 %v1819
    %v1914 = vpop.f32.mrf.mxu0
    %v1915 = vadd.f32 0.0, %v1914
    %v1916 = vpop.f32.mrf.mxu0
    %v1917 = vpop.f32.mrf.mxu0
    %v1918 = vadd.f32 0.0, %v1917
    %v1919 = vpop.f32.mrf.mxu0
    %1920 = vdwg.mxu0
    %v1921 = vmax.f32 %v1859, %v1875
    %v1922 = vmax.f32 %v1862, %v1878
    %v1923 = vmax.f32 %v1867, %v1883
    %v1924 = vmax.f32 %v1870, %v1886
    %v1925 = vmax.f32 %v1921, %v1891
    %v1926 = vmax.f32 %v1922, %v1894
    %v1927 = vmax.f32 %v1923, %v1899
    %v1928 = vmax.f32 %v1924, %v1902
    %v1929 = vmax.f32 %v1925, %v1907
    %v1930 = vmax.f32 %v1926, %v1910
    %v1931 = vmax.f32 %v1927, %v1915
    %v1932 = vmax.f32 %v1928, %v1918
    %v1933 = vmax.f32 %v1929, %v1930
    %v1934 = vmax.f32 %v1931, %v1932
    %v1935 = vmax.f32 %v1933, %v1934
    %v1936 = vrot.slane %v1935, 4
    %v1937 = vmax.f32 %v1935, %v1936
    %v1938 = vrot.slane %v1937, 2
    %v1939 = vmax.f32 %v1937, %v1938
    %v1940 = vrot.slane %v1939, 1
    %v1941 = vmax.f32 %v1939, %v1940
    %v1942 = vsub.f32 %v1859, %v1941
    %v1943 = vsub.f32 %v1862, %v1941
    %v1944 = vsub.f32 %v1867, %v1941
    %v1945 = vsub.f32 %v1870, %v1941
    %v1946 = vsub.f32 %v1875, %v1941
    %v1947 = vsub.f32 %v1878, %v1941
    %v1948 = vsub.f32 %v1883, %v1941
    %v1949 = vsub.f32 %v1886, %v1941
    %v1950 = vsub.f32 %v1891, %v1941
    %v1951 = vsub.f32 %v1894, %v1941
    %v1952 = vsub.f32 %v1899, %v1941
    %v1953 = vsub.f32 %v1902, %v1941
    %v1954 = vsub.f32 %v1907, %v1941
    %v1955 = vsub.f32 %v1910, %v1941
    %v1956 = vsub.f32 %v1915, %v1941
    %v1957 = vsub.f32 %v1918, %v1941
    %v1958 = vmul.f32 %v1942, 1.442695
    %v1959 = vpow.pop %v1958
    %v1960 = vmul.f32 %v1943, 1.442695
    %v1961 = vpow.pop %v1960
    %v1962 = vmul.f32 %v1944, 1.442695
    %v1963 = vpow.pop %v1962
    %v1964 = vmul.f32 %v1945, 1.442695
    %v1965 = vpow.pop %v1964
    %v1966 = vmul.f32 %v1946, 1.442695
    %v1967 = vpow.pop %v1966
    %v1968 = vmul.f32 %v1947, 1.442695
    %v1969 = vpow.pop %v1968
    %v1970 = vmul.f32 %v1948, 1.442695
    %v1971 = vpow.pop %v1970
    %v1972 = vmul.f32 %v1949, 1.442695
    %v1973 = vpow.pop %v1972
    %v1974 = vmul.f32 %v1950, 1.442695
    %v1975 = vpow.pop %v1974
    %v1976 = vmul.f32 %v1951, 1.442695
    %v1977 = vpow.pop %v1976
    %v1978 = vmul.f32 %v1952, 1.442695
    %v1979 = vpow.pop %v1978
    %v1980 = vmul.f32 %v1953, 1.442695
    %v1981 = vpow.pop %v1980
    %v1982 = vmul.f32 %v1954, 1.442695
    %v1983 = vpow.pop %v1982
    %v1984 = vmul.f32 %v1955, 1.442695
    %v1985 = vpow.pop %v1984
    %v1986 = vmul.f32 %v1956, 1.442695
    %v1987 = vpow.pop %v1986
    %v1988 = vmul.f32 %v1957, 1.442695
    %v1989 = vpow.pop %v1988
    %v1990 = vadd.f32 %v1959, %v1961
    %v1991 = vadd.f32 %v1990, %v1963
    %v1992 = vadd.f32 %v1991, %v1965
    %v1993 = vadd.f32 %v1992, %v1967
    %v1994 = vadd.f32 %v1993, %v1969
    %v1995 = vadd.f32 %v1994, %v1971
    %v1996 = vadd.f32 %v1995, %v1973
    %v1997 = vadd.f32 %v1996, %v1975
    %v1998 = vadd.f32 %v1997, %v1977
    %v1999 = vadd.f32 %v1998, %v1979
    %v2000 = vadd.f32 %v1999, %v1981
    %v2001 = vadd.f32 %v2000, %v1983
    %v2002 = vadd.f32 %v2001, %v1985
    %v2003 = vadd.f32 %v2002, %v1987
    %v2004 = vadd.f32 %v2003, %v1989
    %v2005 = vrot.slane %v2004, 4
    %v2006 = vadd.f32 %v2004, %v2005
    %v2007 = vrot.slane %v2006, 2
    %v2008 = vadd.f32 %v2006, %v2007
    %v2009 = vrot.slane %v2008, 1
    %v2010 = vadd.f32 %v2008, %v2009
    %v2011 = vrcp.pop %v2010
    %v2012 = vmul.f32 %v1959, %v2011
    %v2013 = vmul.f32 %v1961, %v2011
    %v2014 = vmul.f32 %v1963, %v2011
    %v2015 = vmul.f32 %v1965, %v2011
    %v2016 = vmul.f32 %v1967, %v2011
    %v2017 = vmul.f32 %v1969, %v2011
    %v2018 = vmul.f32 %v1971, %v2011
    %v2019 = vmul.f32 %v1973, %v2011
    %v2020 = vmul.f32 %v1975, %v2011
    %v2021 = vmul.f32 %v1977, %v2011
    %v2022 = vmul.f32 %v1979, %v2011
    %v2023 = vmul.f32 %v1981, %v2011
    %v2024 = vmul.f32 %v1983, %v2011
    %v2025 = vmul.f32 %v1985, %v2011
    %v2026 = vmul.f32 %v1987, %v2011
    %v2027 = vmul.f32 %v1989, %v2011
    %v2028 = vpack.c.bf16 %v275, %v275
    %v2029 = vpack.c.bf16 %v2013, %v2012
    %v2030 = vpack.c.bf16 %v2015, %v2014
    %v2031 = vpack.c.bf16 %v2017, %v2016
    %v2032 = vpack.c.bf16 %v2019, %v2018
    %v2033 = vpack.c.bf16 %v2021, %v2020
    %v2034 = vpack.c.bf16 %v2023, %v2022
    %v2035 = vpack.c.bf16 %v2025, %v2024
    %v2036 = vpack.c.bf16 %v2027, %v2026
    %2037 = vmatprep.subr.bf16.mxu0 0
    %2038 = vmatpush1.bf16.msra.mxu0 %v2036
    %2039 = vmatprep.subr.bf16.mxu0 0
    %2040 = vmatpush1.bf16.msra.mxu0 %v2035
    %2041 = vmatprep.subr.bf16.mxu0 0
    %2042 = vmatpush1.bf16.msra.mxu0 %v2034
    %2043 = vmatprep.subr.bf16.mxu0 0
    %2044 = vmatpush1.bf16.msra.mxu0 %v2033
    %2045 = vmatprep.subr.bf16.mxu0 0
    %2046 = vmatpush1.bf16.msra.mxu0 %v2032
    %2047 = vmatprep.subr.bf16.mxu0 0
    %2048 = vmatpush1.bf16.msra.mxu0 %v2031
    %2049 = vmatprep.subr.bf16.mxu0 0
    %2050 = vmatpush1.bf16.msra.mxu0 %v2030
    %2051 = vmatprep.subr.bf16.mxu0 0
    %2052 = vmatpush1.bf16.msra.mxu0 %v2029
    %2053 = vmatprep.subr.bf16.mxu0 0
    %2054 = vmatpush2.bf16.msra.mxu0 0
    %2055 = vmatprep.subr.bf16.mxu0 0
    %2056 = vmatpush2.bf16.msra.mxu0 0
    %2057 = vmatprep.subr.bf16.mxu0 0
    %2058 = vmatpush2.bf16.msra.mxu0 0
    %2059 = vmatprep.subr.bf16.mxu0 0
    %2060 = vmatpush2.bf16.msra.mxu0 0
    %2061 = vmatprep.subr.bf16.mxu0 0
    %2062 = vmatpush2.bf16.msra.mxu0 0
    %2063 = vmatprep.subr.bf16.mxu0 0
    %2064 = vmatpush2.bf16.msra.mxu0 0
    %2065 = vmatprep.subr.bf16.mxu0 0
    %2066 = vmatpush2.bf16.msra.mxu0 0
    %2067 = vmatprep.subr.bf16.mxu0 0
    %2068 = vmatpush2.bf16.msra.mxu0 0
    %2069 = vmatprep.mubr.bf16.mxu0 0
    %2070 = vmatmul.mubr.bf16.gmra.mxu0 %v2028
    %v2071 = vpop.f32.mrf.mxu0
    %v2072 = vadd.f32 0.0, %v2071
    %v2073 = vpop.f32.mrf.mxu0
    %v2074 = vpop.f32.mrf.mxu0
    %v2075 = vpop.f32.mrf.mxu0
    %2076 = vdwg.mxu0
    %v2077 = vpack.c.bf16 %v241, %v241
    %v2078 = vpack.c.bf16 %v261, %v261
    %2079 = vxpose.xlu0.c.b16.start [1/8] %v2078, 128
    %2080 = vxpose.xlu0.c.b16.cont [2/8] 0, 128
    %2081 = vxpose.xlu0.c.b16.cont [3/8] 0, 128
    %2082 = vxpose.xlu0.c.b16.cont [4/8] 0, 128
    %2083 = vxpose.xlu0.c.b16.cont [5/8] 0, 128
    %2084 = vxpose.xlu0.c.b16.cont [6/8] 0, 128
    %2085 = vxpose.xlu0.c.b16.cont [7/8] 0, 128
    %2086 = vxpose.xlu0.c.b16.end [8/8] 0, 128
    %v2087 = vpop.trf.xlu0
    %v2088 = vpop.trf.xlu0
    %v2089 = vpop.trf.xlu0
    %v2090 = vpop.trf.xlu0
    %v2091 = vpop.trf.xlu0
    %v2092 = vpop.trf.xlu0
    %v2093 = vpop.trf.xlu0
    %v2094 = vpop.trf.xlu0
    %v2096 = vsel %vm305, %v2087, 0
    %v2099 = vsel %vm305, %v2088, 0
    %v2102 = vsel %vm305, %v2089, 0
    %v2105 = vsel %vm305, %v2090, 0
    %v2108 = vsel %vm305, %v2091, 0
    %v2111 = vsel %vm305, %v2092, 0
    %v2114 = vsel %vm305, %v2093, 0
    %v2117 = vsel %vm305, %v2094, 0
    %v2120 = vsel %vm330, %v2077, 0
    %2122 = vmatprep.subr.bf16.mxu0 0
    %2123 = vmatpush1.bf16.msra.mxu0 0
    %2124 = vmatprep.subr.bf16.mxu0 0
    %2125 = vmatpush1.bf16.msra.mxu0 0
    %2126 = vmatprep.subr.bf16.mxu0 0
    %2127 = vmatpush1.bf16.msra.mxu0 0
    %2128 = vmatprep.subr.bf16.mxu0 0
    %2129 = vmatpush1.bf16.msra.mxu0 0
    %2130 = vmatprep.subr.bf16.mxu0 0
    %2131 = vmatpush1.bf16.msra.mxu0 0
    %2132 = vmatprep.subr.bf16.mxu0 0
    %2133 = vmatpush1.bf16.msra.mxu0 0
    %2134 = vmatprep.subr.bf16.mxu0 0
    %2135 = vmatpush1.bf16.msra.mxu0 0
    %2136 = vmatprep.subr.bf16.mxu0 0
    %2137 = vmatpush1.bf16.msra.mxu0 %v2120
    %2138 = vmatprep.subr.bf16.mxu0 0
    %2139 = vmatpush2.bf16.msra.mxu0 0
    %2140 = vmatprep.subr.bf16.mxu0 0
    %2141 = vmatpush2.bf16.msra.mxu0 0
    %2142 = vmatprep.subr.bf16.mxu0 0
    %2143 = vmatpush2.bf16.msra.mxu0 0
    %2144 = vmatprep.subr.bf16.mxu0 0
    %2145 = vmatpush2.bf16.msra.mxu0 0
    %2146 = vmatprep.subr.bf16.mxu0 0
    %2147 = vmatpush2.bf16.msra.mxu0 0
    %2148 = vmatprep.subr.bf16.mxu0 0
    %2149 = vmatpush2.bf16.msra.mxu0 0
    %2150 = vmatprep.subr.bf16.mxu0 0
    %2151 = vmatpush2.bf16.msra.mxu0 0
    %2152 = vmatprep.subr.bf16.mxu0 0
    %2153 = vmatpush2.bf16.msra.mxu0 0
    %2154 = vmatprep.mubr.bf16.mxu0 0
    %2155 = vmatmul.mubr.bf16.gmra.mxu0 %v2096
    %v2156 = vpop.f32.mrf.mxu0
    %v2157 = vadd.f32 0.0, %v2156
    %v2158 = vpop.f32.mrf.mxu0
    %v2159 = vpop.f32.mrf.mxu0
    %v2160 = vadd.f32 0.0, %v2159
    %v2161 = vpop.f32.mrf.mxu0
    %2162 = vmatprep.mubr.bf16.mxu0 0
    %2163 = vmatmul.mubr.bf16.gmra.mxu0 %v2099
    %v2164 = vpop.f32.mrf.mxu0
    %v2165 = vadd.f32 0.0, %v2164
    %v2166 = vpop.f32.mrf.mxu0
    %v2167 = vpop.f32.mrf.mxu0
    %v2168 = vadd.f32 0.0, %v2167
    %v2169 = vpop.f32.mrf.mxu0
    %2170 = vmatprep.mubr.bf16.mxu0 0
    %2171 = vmatmul.mubr.bf16.gmra.mxu0 %v2102
    %v2172 = vpop.f32.mrf.mxu0
    %v2173 = vadd.f32 0.0, %v2172
    %v2174 = vpop.f32.mrf.mxu0
    %v2175 = vpop.f32.mrf.mxu0
    %v2176 = vadd.f32 0.0, %v2175
    %v2177 = vpop.f32.mrf.mxu0
    %2178 = vmatprep.mubr.bf16.mxu0 0
    %2179 = vmatmul.mubr.bf16.gmra.mxu0 %v2105
    %v2180 = vpop.f32.mrf.mxu0
    %v2181 = vadd.f32 0.0, %v2180
    %v2182 = vpop.f32.mrf.mxu0
    %v2183 = vpop.f32.mrf.mxu0
    %v2184 = vadd.f32 0.0, %v2183
    %v2185 = vpop.f32.mrf.mxu0
    %2186 = vmatprep.mubr.bf16.mxu0 0
    %2187 = vmatmul.mubr.bf16.gmra.mxu0 %v2108
    %v2188 = vpop.f32.mrf.mxu0
    %v2189 = vadd.f32 0.0, %v2188
    %v2190 = vpop.f32.mrf.mxu0
    %v2191 = vpop.f32.mrf.mxu0
    %v2192 = vadd.f32 0.0, %v2191
    %v2193 = vpop.f32.mrf.mxu0
    %2194 = vmatprep.mubr.bf16.mxu0 0
    %2195 = vmatmul.mubr.bf16.gmra.mxu0 %v2111
    %v2196 = vpop.f32.mrf.mxu0
    %v2197 = vadd.f32 0.0, %v2196
    %v2198 = vpop.f32.mrf.mxu0
    %v2199 = vpop.f32.mrf.mxu0
    %v2200 = vadd.f32 0.0, %v2199
    %v2201 = vpop.f32.mrf.mxu0
    %2202 = vmatprep.mubr.bf16.mxu0 0
    %2203 = vmatmul.mubr.bf16.gmra.mxu0 %v2114
    %v2204 = vpop.f32.mrf.mxu0
    %v2205 = vadd.f32 0.0, %v2204
    %v2206 = vpop.f32.mrf.mxu0
    %v2207 = vpop.f32.mrf.mxu0
    %v2208 = vadd.f32 0.0, %v2207
    %v2209 = vpop.f32.mrf.mxu0
    %2210 = vmatprep.mubr.bf16.mxu0 0
    %2211 = vmatmul.mubr.bf16.gmra.mxu0 %v2117
    %v2212 = vpop.f32.mrf.mxu0
    %v2213 = vadd.f32 0.0, %v2212
    %v2214 = vpop.f32.mrf.mxu0
    %v2215 = vpop.f32.mrf.mxu0
    %v2216 = vadd.f32 0.0, %v2215
    %v2217 = vpop.f32.mrf.mxu0
    %2218 = vdwg.mxu0
    %v2219 = vmax.f32 %v2157, %v2173
    %v2220 = vmax.f32 %v2160, %v2176
    %v2221 = vmax.f32 %v2165, %v2181
    %v2222 = vmax.f32 %v2168, %v2184
    %v2223 = vmax.f32 %v2219, %v2189
    %v2224 = vmax.f32 %v2220, %v2192
    %v2225 = vmax.f32 %v2221, %v2197
    %v2226 = vmax.f32 %v2222, %v2200
    %v2227 = vmax.f32 %v2223, %v2205
    %v2228 = vmax.f32 %v2224, %v2208
    %v2229 = vmax.f32 %v2225, %v2213
    %v2230 = vmax.f32 %v2226, %v2216
    %v2231 = vmax.f32 %v2227, %v2228
    %v2232 = vmax.f32 %v2229, %v2230
    %v2233 = vmax.f32 %v2231, %v2232
    %v2234 = vrot.slane %v2233, 4
    %v2235 = vmax.f32 %v2233, %v2234
    %v2236 = vrot.slane %v2235, 2
    %v2237 = vmax.f32 %v2235, %v2236
    %v2238 = vrot.slane %v2237, 1
    %v2239 = vmax.f32 %v2237, %v2238
    %v2240 = vsub.f32 %v2157, %v2239
    %v2241 = vsub.f32 %v2160, %v2239
    %v2242 = vsub.f32 %v2165, %v2239
    %v2243 = vsub.f32 %v2168, %v2239
    %v2244 = vsub.f32 %v2173, %v2239
    %v2245 = vsub.f32 %v2176, %v2239
    %v2246 = vsub.f32 %v2181, %v2239
    %v2247 = vsub.f32 %v2184, %v2239
    %v2248 = vsub.f32 %v2189, %v2239
    %v2249 = vsub.f32 %v2192, %v2239
    %v2250 = vsub.f32 %v2197, %v2239
    %v2251 = vsub.f32 %v2200, %v2239
    %v2252 = vsub.f32 %v2205, %v2239
    %v2253 = vsub.f32 %v2208, %v2239
    %v2254 = vsub.f32 %v2213, %v2239
    %v2255 = vsub.f32 %v2216, %v2239
    %v2256 = vmul.f32 %v2240, 1.442695
    %v2257 = vpow.pop %v2256
    %v2258 = vmul.f32 %v2241, 1.442695
    %v2259 = vpow.pop %v2258
    %v2260 = vmul.f32 %v2242, 1.442695
    %v2261 = vpow.pop %v2260
    %v2262 = vmul.f32 %v2243, 1.442695
    %v2263 = vpow.pop %v2262
    %v2264 = vmul.f32 %v2244, 1.442695
    %v2265 = vpow.pop %v2264
    %v2266 = vmul.f32 %v2245, 1.442695
    %v2267 = vpow.pop %v2266
    %v2268 = vmul.f32 %v2246, 1.442695
    %v2269 = vpow.pop %v2268
    %v2270 = vmul.f32 %v2247, 1.442695
    %v2271 = vpow.pop %v2270
    %v2272 = vmul.f32 %v2248, 1.442695
    %v2273 = vpow.pop %v2272
    %v2274 = vmul.f32 %v2249, 1.442695
    %v2275 = vpow.pop %v2274
    %v2276 = vmul.f32 %v2250, 1.442695
    %v2277 = vpow.pop %v2276
    %v2278 = vmul.f32 %v2251, 1.442695
    %v2279 = vpow.pop %v2278
    %v2280 = vmul.f32 %v2252, 1.442695
    %v2281 = vpow.pop %v2280
    %v2282 = vmul.f32 %v2253, 1.442695
    %v2283 = vpow.pop %v2282
    %v2284 = vmul.f32 %v2254, 1.442695
    %v2285 = vpow.pop %v2284
    %v2286 = vmul.f32 %v2255, 1.442695
    %v2287 = vpow.pop %v2286
    %v2288 = vadd.f32 %v2257, %v2259
    %v2289 = vadd.f32 %v2288, %v2261
    %v2290 = vadd.f32 %v2289, %v2263
    %v2291 = vadd.f32 %v2290, %v2265
    %v2292 = vadd.f32 %v2291, %v2267
    %v2293 = vadd.f32 %v2292, %v2269
    %v2294 = vadd.f32 %v2293, %v2271
    %v2295 = vadd.f32 %v2294, %v2273
    %v2296 = vadd.f32 %v2295, %v2275
    %v2297 = vadd.f32 %v2296, %v2277
    %v2298 = vadd.f32 %v2297, %v2279
    %v2299 = vadd.f32 %v2298, %v2281
    %v2300 = vadd.f32 %v2299, %v2283
    %v2301 = vadd.f32 %v2300, %v2285
    %v2302 = vadd.f32 %v2301, %v2287
    %v2303 = vrot.slane %v2302, 4
    %v2304 = vadd.f32 %v2302, %v2303
    %v2305 = vrot.slane %v2304, 2
    %v2306 = vadd.f32 %v2304, %v2305
    %v2307 = vrot.slane %v2306, 1
    %v2308 = vadd.f32 %v2306, %v2307
    %v2309 = vrcp.pop %v2308
    %v2310 = vmul.f32 %v2257, %v2309
    %v2311 = vmul.f32 %v2259, %v2309
    %v2312 = vmul.f32 %v2261, %v2309
    %v2313 = vmul.f32 %v2263, %v2309
    %v2314 = vmul.f32 %v2265, %v2309
    %v2315 = vmul.f32 %v2267, %v2309
    %v2316 = vmul.f32 %v2269, %v2309
    %v2317 = vmul.f32 %v2271, %v2309
    %v2318 = vmul.f32 %v2273, %v2309
    %v2319 = vmul.f32 %v2275, %v2309
    %v2320 = vmul.f32 %v2277, %v2309
    %v2321 = vmul.f32 %v2279, %v2309
    %v2322 = vmul.f32 %v2281, %v2309
    %v2323 = vmul.f32 %v2283, %v2309
    %v2324 = vmul.f32 %v2285, %v2309
    %v2325 = vmul.f32 %v2287, %v2309
    %v2326 = vpack.c.bf16 %v281, %v281
    %v2327 = vpack.c.bf16 %v2311, %v2310
    %v2328 = vpack.c.bf16 %v2313, %v2312
    %v2329 = vpack.c.bf16 %v2315, %v2314
    %v2330 = vpack.c.bf16 %v2317, %v2316
    %v2331 = vpack.c.bf16 %v2319, %v2318
    %v2332 = vpack.c.bf16 %v2321, %v2320
    %v2333 = vpack.c.bf16 %v2323, %v2322
    %v2334 = vpack.c.bf16 %v2325, %v2324
    %2335 = vmatprep.subr.bf16.mxu0 0
    %2336 = vmatpush1.bf16.msra.mxu0 %v2334
    %2337 = vmatprep.subr.bf16.mxu0 0
    %2338 = vmatpush1.bf16.msra.mxu0 %v2333
    %2339 = vmatprep.subr.bf16.mxu0 0
    %2340 = vmatpush1.bf16.msra.mxu0 %v2332
    %2341 = vmatprep.subr.bf16.mxu0 0
    %2342 = vmatpush1.bf16.msra.mxu0 %v2331
    %2343 = vmatprep.subr.bf16.mxu0 0
    %2344 = vmatpush1.bf16.msra.mxu0 %v2330
    %2345 = vmatprep.subr.bf16.mxu0 0
    %2346 = vmatpush1.bf16.msra.mxu0 %v2329
    %2347 = vmatprep.subr.bf16.mxu0 0
    %2348 = vmatpush1.bf16.msra.mxu0 %v2328
    %2349 = vmatprep.subr.bf16.mxu0 0
    %2350 = vmatpush1.bf16.msra.mxu0 %v2327
    %2351 = vmatprep.subr.bf16.mxu0 0
    %2352 = vmatpush2.bf16.msra.mxu0 0
    %2353 = vmatprep.subr.bf16.mxu0 0
    %2354 = vmatpush2.bf16.msra.mxu0 0
    %2355 = vmatprep.subr.bf16.mxu0 0
    %2356 = vmatpush2.bf16.msra.mxu0 0
    %2357 = vmatprep.subr.bf16.mxu0 0
    %2358 = vmatpush2.bf16.msra.mxu0 0
    %2359 = vmatprep.subr.bf16.mxu0 0
    %2360 = vmatpush2.bf16.msra.mxu0 0
    %2361 = vmatprep.subr.bf16.mxu0 0
    %2362 = vmatpush2.bf16.msra.mxu0 0
    %2363 = vmatprep.subr.bf16.mxu0 0
    %2364 = vmatpush2.bf16.msra.mxu0 0
    %2365 = vmatprep.subr.bf16.mxu0 0
    %2366 = vmatpush2.bf16.msra.mxu0 0
    %2367 = vmatprep.mubr.bf16.mxu0 0
    %2368 = vmatmul.mubr.bf16.gmra.mxu0 %v2326
    %v2369 = vpop.f32.mrf.mxu0
    %v2370 = vadd.f32 0.0, %v2369
    %v2371 = vpop.f32.mrf.mxu0
    %v2372 = vpop.f32.mrf.mxu0
    %v2373 = vpop.f32.mrf.mxu0
    %2374 = vdwg.mxu0
    %v2375 = vpack.c.bf16 %v245, %v245
    %v2376 = vpack.c.bf16 %v265, %v265
    %2377 = vxpose.xlu0.c.b16.start [1/8] %v2376, 128
    %2378 = vxpose.xlu0.c.b16.cont [2/8] 0, 128
    %2379 = vxpose.xlu0.c.b16.cont [3/8] 0, 128
    %2380 = vxpose.xlu0.c.b16.cont [4/8] 0, 128
    %2381 = vxpose.xlu0.c.b16.cont [5/8] 0, 128
    %2382 = vxpose.xlu0.c.b16.cont [6/8] 0, 128
    %2383 = vxpose.xlu0.c.b16.cont [7/8] 0, 128
    %2384 = vxpose.xlu0.c.b16.end [8/8] 0, 128
    %v2385 = vpop.trf.xlu0
    %v2386 = vpop.trf.xlu0
    %v2387 = vpop.trf.xlu0
    %v2388 = vpop.trf.xlu0
    %v2389 = vpop.trf.xlu0
    %v2390 = vpop.trf.xlu0
    %v2391 = vpop.trf.xlu0
    %v2392 = vpop.trf.xlu0
    %v2394 = vsel %vm305, %v2385, 0
    %v2397 = vsel %vm305, %v2386, 0
    %v2400 = vsel %vm305, %v2387, 0
    %v2403 = vsel %vm305, %v2388, 0
    %v2406 = vsel %vm305, %v2389, 0
    %v2409 = vsel %vm305, %v2390, 0
    %v2412 = vsel %vm305, %v2391, 0
    %v2415 = vsel %vm305, %v2392, 0
    %v2418 = vsel %vm330, %v2375, 0
    %2420 = vmatprep.subr.bf16.mxu0 0
    %2421 = vmatpush1.bf16.msra.mxu0 0
    %2422 = vmatprep.subr.bf16.mxu0 0
    %2423 = vmatpush1.bf16.msra.mxu0 0
    %2424 = vmatprep.subr.bf16.mxu0 0
    %2425 = vmatpush1.bf16.msra.mxu0 0
    %2426 = vmatprep.subr.bf16.mxu0 0
    %2427 = vmatpush1.bf16.msra.mxu0 0
    %2428 = vmatprep.subr.bf16.mxu0 0
    %2429 = vmatpush1.bf16.msra.mxu0 0
    %2430 = vmatprep.subr.bf16.mxu0 0
    %2431 = vmatpush1.bf16.msra.mxu0 0
    %2432 = vmatprep.subr.bf16.mxu0 0
    %2433 = vmatpush1.bf16.msra.mxu0 0
    %2434 = vmatprep.subr.bf16.mxu0 0
    %2435 = vmatpush1.bf16.msra.mxu0 %v2418
    %2436 = vmatprep.subr.bf16.mxu0 0
    %2437 = vmatpush2.bf16.msra.mxu0 0
    %2438 = vmatprep.subr.bf16.mxu0 0
    %2439 = vmatpush2.bf16.msra.mxu0 0
    %2440 = vmatprep.subr.bf16.mxu0 0
    %2441 = vmatpush2.bf16.msra.mxu0 0
    %2442 = vmatprep.subr.bf16.mxu0 0
    %2443 = vmatpush2.bf16.msra.mxu0 0
    %2444 = vmatprep.subr.bf16.mxu0 0
    %2445 = vmatpush2.bf16.msra.mxu0 0
    %2446 = vmatprep.subr.bf16.mxu0 0
    %2447 = vmatpush2.bf16.msra.mxu0 0
    %2448 = vmatprep.subr.bf16.mxu0 0
    %2449 = vmatpush2.bf16.msra.mxu0 0
    %2450 = vmatprep.subr.bf16.mxu0 0
    %2451 = vmatpush2.bf16.msra.mxu0 0
    %2452 = vmatprep.mubr.bf16.mxu0 0
    %2453 = vmatmul.mubr.bf16.gmra.mxu0 %v2394
    %v2454 = vpop.f32.mrf.mxu0
    %v2455 = vadd.f32 0.0, %v2454
    %v2456 = vpop.f32.mrf.mxu0
    %v2457 = vpop.f32.mrf.mxu0
    %v2458 = vadd.f32 0.0, %v2457
    %v2459 = vpop.f32.mrf.mxu0
    %2460 = vmatprep.mubr.bf16.mxu0 0
    %2461 = vmatmul.mubr.bf16.gmra.mxu0 %v2397
    %v2462 = vpop.f32.mrf.mxu0
    %v2463 = vadd.f32 0.0, %v2462
    %v2464 = vpop.f32.mrf.mxu0
    %v2465 = vpop.f32.mrf.mxu0
    %v2466 = vadd.f32 0.0, %v2465
    %v2467 = vpop.f32.mrf.mxu0
    %2468 = vmatprep.mubr.bf16.mxu0 0
    %2469 = vmatmul.mubr.bf16.gmra.mxu0 %v2400
    %v2470 = vpop.f32.mrf.mxu0
    %v2471 = vadd.f32 0.0, %v2470
    %v2472 = vpop.f32.mrf.mxu0
    %v2473 = vpop.f32.mrf.mxu0
    %v2474 = vadd.f32 0.0, %v2473
    %v2475 = vpop.f32.mrf.mxu0
    %2476 = vmatprep.mubr.bf16.mxu0 0
    %2477 = vmatmul.mubr.bf16.gmra.mxu0 %v2403
    %v2478 = vpop.f32.mrf.mxu0
    %v2479 = vadd.f32 0.0, %v2478
    %v2480 = vpop.f32.mrf.mxu0
    %v2481 = vpop.f32.mrf.mxu0
    %v2482 = vadd.f32 0.0, %v2481
    %v2483 = vpop.f32.mrf.mxu0
    %2484 = vmatprep.mubr.bf16.mxu0 0
    %2485 = vmatmul.mubr.bf16.gmra.mxu0 %v2406
    %v2486 = vpop.f32.mrf.mxu0
    %v2487 = vadd.f32 0.0, %v2486
    %v2488 = vpop.f32.mrf.mxu0
    %v2489 = vpop.f32.mrf.mxu0
    %v2490 = vadd.f32 0.0, %v2489
    %v2491 = vpop.f32.mrf.mxu0
    %2492 = vmatprep.mubr.bf16.mxu0 0
    %2493 = vmatmul.mubr.bf16.gmra.mxu0 %v2409
    %v2494 = vpop.f32.mrf.mxu0
    %v2495 = vadd.f32 0.0, %v2494
    %v2496 = vpop.f32.mrf.mxu0
    %v2497 = vpop.f32.mrf.mxu0
    %v2498 = vadd.f32 0.0, %v2497
    %v2499 = vpop.f32.mrf.mxu0
    %2500 = vmatprep.mubr.bf16.mxu0 0
    %2501 = vmatmul.mubr.bf16.gmra.mxu0 %v2412
    %v2502 = vpop.f32.mrf.mxu0
    %v2503 = vadd.f32 0.0, %v2502
    %v2504 = vpop.f32.mrf.mxu0
    %v2505 = vpop.f32.mrf.mxu0
    %v2506 = vadd.f32 0.0, %v2505
    %v2507 = vpop.f32.mrf.mxu0
    %2508 = vmatprep.mubr.bf16.mxu0 0
    %2509 = vmatmul.mubr.bf16.gmra.mxu0 %v2415
    %v2510 = vpop.f32.mrf.mxu0
    %v2511 = vadd.f32 0.0, %v2510
    %v2512 = vpop.f32.mrf.mxu0
    %v2513 = vpop.f32.mrf.mxu0
    %v2514 = vadd.f32 0.0, %v2513
    %v2515 = vpop.f32.mrf.mxu0
    %2516 = vdwg.mxu0
    %v2517 = vmax.f32 %v2455, %v2471
    %v2518 = vmax.f32 %v2458, %v2474
    %v2519 = vmax.f32 %v2463, %v2479
    %v2520 = vmax.f32 %v2466, %v2482
    %v2521 = vmax.f32 %v2517, %v2487
    %v2522 = vmax.f32 %v2518, %v2490
    %v2523 = vmax.f32 %v2519, %v2495
    %v2524 = vmax.f32 %v2520, %v2498
    %v2525 = vmax.f32 %v2521, %v2503
    %v2526 = vmax.f32 %v2522, %v2506
    %v2527 = vmax.f32 %v2523, %v2511
    %v2528 = vmax.f32 %v2524, %v2514
    %v2529 = vmax.f32 %v2525, %v2526
    %v2530 = vmax.f32 %v2527, %v2528
    %v2531 = vmax.f32 %v2529, %v2530
    %v2532 = vrot.slane %v2531, 4
    %v2533 = vmax.f32 %v2531, %v2532
    %v2534 = vrot.slane %v2533, 2
    %v2535 = vmax.f32 %v2533, %v2534
    %v2536 = vrot.slane %v2535, 1
    %v2537 = vmax.f32 %v2535, %v2536
    %v2538 = vsub.f32 %v2455, %v2537
    %v2539 = vsub.f32 %v2458, %v2537
    %v2540 = vsub.f32 %v2463, %v2537
    %v2541 = vsub.f32 %v2466, %v2537
    %v2542 = vsub.f32 %v2471, %v2537
    %v2543 = vsub.f32 %v2474, %v2537
    %v2544 = vsub.f32 %v2479, %v2537
    %v2545 = vsub.f32 %v2482, %v2537
    %v2546 = vsub.f32 %v2487, %v2537
    %v2547 = vsub.f32 %v2490, %v2537
    %v2548 = vsub.f32 %v2495, %v2537
    %v2549 = vsub.f32 %v2498, %v2537
    %v2550 = vsub.f32 %v2503, %v2537
    %v2551 = vsub.f32 %v2506, %v2537
    %v2552 = vsub.f32 %v2511, %v2537
    %v2553 = vsub.f32 %v2514, %v2537
    %v2554 = vmul.f32 %v2538, 1.442695
    %v2555 = vpow.pop %v2554
    %v2556 = vmul.f32 %v2539, 1.442695
    %v2557 = vpow.pop %v2556
    %v2558 = vmul.f32 %v2540, 1.442695
    %v2559 = vpow.pop %v2558
    %v2560 = vmul.f32 %v2541, 1.442695
    %v2561 = vpow.pop %v2560
    %v2562 = vmul.f32 %v2542, 1.442695
    %v2563 = vpow.pop %v2562
    %v2564 = vmul.f32 %v2543, 1.442695
    %v2565 = vpow.pop %v2564
    %v2566 = vmul.f32 %v2544, 1.442695
    %v2567 = vpow.pop %v2566
    %v2568 = vmul.f32 %v2545, 1.442695
    %v2569 = vpow.pop %v2568
    %v2570 = vmul.f32 %v2546, 1.442695
    %v2571 = vpow.pop %v2570
    %v2572 = vmul.f32 %v2547, 1.442695
    %v2573 = vpow.pop %v2572
    %v2574 = vmul.f32 %v2548, 1.442695
    %v2575 = vpow.pop %v2574
    %v2576 = vmul.f32 %v2549, 1.442695
    %v2577 = vpow.pop %v2576
    %v2578 = vmul.f32 %v2550, 1.442695
    %v2579 = vpow.pop %v2578
    %v2580 = vmul.f32 %v2551, 1.442695
    %v2581 = vpow.pop %v2580
    %v2582 = vmul.f32 %v2552, 1.442695
    %v2583 = vpow.pop %v2582
    %v2584 = vmul.f32 %v2553, 1.442695
    %v2585 = vpow.pop %v2584
    %v2586 = vadd.f32 %v2555, %v2557
    %v2587 = vadd.f32 %v2586, %v2559
    %v2588 = vadd.f32 %v2587, %v2561
    %v2589 = vadd.f32 %v2588, %v2563
    %v2590 = vadd.f32 %v2589, %v2565
    %v2591 = vadd.f32 %v2590, %v2567
    %v2592 = vadd.f32 %v2591, %v2569
    %v2593 = vadd.f32 %v2592, %v2571
    %v2594 = vadd.f32 %v2593, %v2573
    %v2595 = vadd.f32 %v2594, %v2575
    %v2596 = vadd.f32 %v2595, %v2577
    %v2597 = vadd.f32 %v2596, %v2579
    %v2598 = vadd.f32 %v2597, %v2581
    %v2599 = vadd.f32 %v2598, %v2583
    %v2600 = vadd.f32 %v2599, %v2585
    %v2601 = vrot.slane %v2600, 4
    %v2602 = vadd.f32 %v2600, %v2601
    %v2603 = vrot.slane %v2602, 2
    %v2604 = vadd.f32 %v2602, %v2603
    %v2605 = vrot.slane %v2604, 1
    %v2606 = vadd.f32 %v2604, %v2605
    %v2607 = vrcp.pop %v2606
    %v2608 = vmul.f32 %v2555, %v2607
    %v2609 = vmul.f32 %v2557, %v2607
    %v2610 = vmul.f32 %v2559, %v2607
    %v2611 = vmul.f32 %v2561, %v2607
    %v2612 = vmul.f32 %v2563, %v2607
    %v2613 = vmul.f32 %v2565, %v2607
    %v2614 = vmul.f32 %v2567, %v2607
    %v2615 = vmul.f32 %v2569, %v2607
    %v2616 = vmul.f32 %v2571, %v2607
    %v2617 = vmul.f32 %v2573, %v2607
    %v2618 = vmul.f32 %v2575, %v2607
    %v2619 = vmul.f32 %v2577, %v2607
    %v2620 = vmul.f32 %v2579, %v2607
    %v2621 = vmul.f32 %v2581, %v2607
    %v2622 = vmul.f32 %v2583, %v2607
    %v2623 = vmul.f32 %v2585, %v2607
    %v2624 = vpack.c.bf16 %v285, %v285
    %v2625 = vpack.c.bf16 %v2609, %v2608
    %v2626 = vpack.c.bf16 %v2611, %v2610
    %v2627 = vpack.c.bf16 %v2613, %v2612
    %v2628 = vpack.c.bf16 %v2615, %v2614
    %v2629 = vpack.c.bf16 %v2617, %v2616
    %v2630 = vpack.c.bf16 %v2619, %v2618
    %v2631 = vpack.c.bf16 %v2621, %v2620
    %v2632 = vpack.c.bf16 %v2623, %v2622
    %2633 = vmatprep.subr.bf16.mxu0 0
    %2634 = vmatpush1.bf16.msra.mxu0 %v2632
    %2635 = vmatprep.subr.bf16.mxu0 0
    %2636 = vmatpush1.bf16.msra.mxu0 %v2631
    %2637 = vmatprep.subr.bf16.mxu0 0
    %2638 = vmatpush1.bf16.msra.mxu0 %v2630
    %2639 = vmatprep.subr.bf16.mxu0 0
    %2640 = vmatpush1.bf16.msra.mxu0 %v2629
    %2641 = vmatprep.subr.bf16.mxu0 0
    %2642 = vmatpush1.bf16.msra.mxu0 %v2628
    %2643 = vmatprep.subr.bf16.mxu0 0
    %2644 = vmatpush1.bf16.msra.mxu0 %v2627
    %2645 = vmatprep.subr.bf16.mxu0 0
    %2646 = vmatpush1.bf16.msra.mxu0 %v2626
    %2647 = vmatprep.subr.bf16.mxu0 0
    %2648 = vmatpush1.bf16.msra.mxu0 %v2625
    %2649 = vmatprep.subr.bf16.mxu0 0
    %2650 = vmatpush2.bf16.msra.mxu0 0
    %2651 = vmatprep.subr.bf16.mxu0 0
    %2652 = vmatpush2.bf16.msra.mxu0 0
    %2653 = vmatprep.subr.bf16.mxu0 0
    %2654 = vmatpush2.bf16.msra.mxu0 0
    %2655 = vmatprep.subr.bf16.mxu0 0
    %2656 = vmatpush2.bf16.msra.mxu0 0
    %2657 = vmatprep.subr.bf16.mxu0 0
    %2658 = vmatpush2.bf16.msra.mxu0 0
    %2659 = vmatprep.subr.bf16.mxu0 0
    %2660 = vmatpush2.bf16.msra.mxu0 0
    %2661 = vmatprep.subr.bf16.mxu0 0
    %2662 = vmatpush2.bf16.msra.mxu0 0
    %2663 = vmatprep.subr.bf16.mxu0 0
    %2664 = vmatpush2.bf16.msra.mxu0 0
    %2665 = vmatprep.mubr.bf16.mxu0 0
    %2666 = vmatmul.mubr.bf16.gmra.mxu0 %v2624
    %v2667 = vpop.f32.mrf.mxu0
    %v2668 = vadd.f32 0.0, %v2667
    %v2669 = vpop.f32.mrf.mxu0
    %v2670 = vpop.f32.mrf.mxu0
    %v2671 = vpop.f32.mrf.mxu0
    %2672 = vdwg.mxu0
    %v2673 = vpack.c.bf16 %v880, %v582
    %v2674 = vpack.c.bf16 %v2072, %v1774
    %v2675 = vpack.c.bf16 %v1476, %v1178
    %v2676 = vpack.c.bf16 %v2668, %v2370
    %v2677 = vpack.c.bf16 1.0, 1.0
    %v2682 = vunpack.c.l.b16 %v25
    %v2683 = vunpack.c.l.b16 %v26
    %v2684 = vunpack.c.l.b16 %v27
    %v2685 = vunpack.c.l.b16 %v28
    %v2686 = vpack.c.b16 %v2683, %v2682
    %v2687 = vpack.c.b16 %v2685, %v2684
    %vm2688 = vcmask 269312
    %v2690 = vsel %vm2688, %v2686, 0
    %v2693 = vsel %vm2688, %v2687, 0
    %v2695 = vsel 0, 4294967295, 65535
    %v2696 = vsel %vm130, %v2695, 0
    %v2698 = vand.u32 %v2677, %v2696
    %2700 = vmatprep.subr.bf16.mxu0 0
    %2701 = vmatpush1.bf16.msra.mxu0 0
    %2702 = vmatprep.subr.bf16.mxu0 0
    %2703 = vmatpush1.bf16.msra.mxu0 0
    %2704 = vmatprep.subr.bf16.mxu0 0
    %2705 = vmatpush1.bf16.msra.mxu0 0
    %2706 = vmatprep.subr.bf16.mxu0 0
    %2707 = vmatpush1.bf16.msra.mxu0 0
    %2708 = vmatprep.subr.bf16.mxu0 0
    %2709 = vmatpush1.bf16.msra.mxu0 0
    %2710 = vmatprep.subr.bf16.mxu0 %v2698
    %2711 = vmatpush1.bf16.msra.mxu0 %v2698
    %2712 = vmatprep.subr.bf16.mxu0 %v2676
    %2713 = vmatpush1.bf16.msra.mxu0 %v2675
    %2714 = vmatprep.subr.bf16.mxu0 %v2674
    %2715 = vmatpush1.bf16.msra.mxu0 %v2673
    %2716 = vmatprep.subr.bf16.mxu0 0
    %2717 = vmatpush2.bf16.msra.mxu0 0
    %2718 = vmatprep.subr.bf16.mxu0 0
    %2719 = vmatpush2.bf16.msra.mxu0 0
    %2720 = vmatprep.subr.bf16.mxu0 0
    %2721 = vmatpush2.bf16.msra.mxu0 0
    %2722 = vmatprep.subr.bf16.mxu0 0
    %2723 = vmatpush2.bf16.msra.mxu0 0
    %2724 = vmatprep.subr.bf16.mxu0 0
    %2725 = vmatpush2.bf16.msra.mxu0 0
    %2726 = vmatprep.subr.bf16.mxu0 0
    %2727 = vmatpush2.bf16.msra.mxu0 0
    %2728 = vmatprep.subr.bf16.mxu0 0
    %2729 = vmatpush2.bf16.msra.mxu0 0
    %2730 = vmatprep.subr.bf16.mxu0 0
    %2731 = vmatpush2.bf16.msra.mxu0 0
    %2732 = vmatprep.mubr.bf16.mxu0 0
    %2733 = vmatmul.mubr.bf16.gmra.mxu0 %v2690
    %v2734 = vpop.f32.mrf.mxu0
    %v2735 = vadd.f32 0.0, %v2734
    %v2736 = vpop.f32.mrf.mxu0
    %v2737 = vadd.f32 0.0, %v2736
    %v2738 = vpop.f32.mrf.mxu0
    %v2739 = vadd.f32 0.0, %v2738
    %v2740 = vpop.f32.mrf.mxu0
    %v2741 = vadd.f32 0.0, %v2740
    %2742 = vmatprep.mubr.bf16.mxu0 0
    %2743 = vmatmul.mubr.bf16.gmra.mxu0 %v2693
    %v2744 = vpop.f32.mrf.mxu0
    %v2745 = vadd.f32 0.0, %v2744
    %v2746 = vpop.f32.mrf.mxu0
    %v2747 = vadd.f32 0.0, %v2746
    %v2748 = vpop.f32.mrf.mxu0
    %v2749 = vadd.f32 0.0, %v2748
    %v2750 = vpop.f32.mrf.mxu0
    %v2751 = vadd.f32 0.0, %v2750
    %2752 = vdwg.mxu0
    %v2753 = vadd.f32 %v41, %v2735
    %v2754 = vadd.f32 %v46, %v2737
    %v2755 = vadd.f32 %v42, %v2739
    %v2756 = vadd.f32 %v47, %v2741
    %v2757 = vadd.f32 %v43, %v2745
    %v2758 = vadd.f32 %v48, %v2747
    %v2759 = vadd.f32 %v44, %v2749
    %v2760 = vadd.f32 %v49, %v2751
    %v2761 = vadd.f32 %v2753, %v2755
    %v2762 = vadd.f32 %v2761, %v2757
    %v2763 = vadd.f32 %v2762, %v2759
    %v2764 = vrot.slane %v2763, 4
    %v2765 = vadd.f32 %v2763, %v2764
    %v2766 = vrot.slane %v2765, 2
    %v2767 = vadd.f32 %v2765, %v2766
    %v2768 = vrot.slane %v2767, 1
    %v2769 = vadd.f32 %v2767, %v2768
    %v2770 = vadd.f32 %v2754, %v2756
    %v2771 = vadd.f32 %v2770, %v2758
    %v2772 = vadd.f32 %v2771, %v2760
    %v2773 = vrot.slane %v2772, 4
    %v2774 = vadd.f32 %v2772, %v2773
    %v2775 = vrot.slane %v2774, 2
    %v2776 = vadd.f32 %v2774, %v2775
    %v2777 = vrot.slane %v2776, 1
    %v2778 = vadd.f32 %v2776, %v2777
    %v2779 = vmul.f32 %v2769, 0.03125
    %v2780 = vmul.f32 %v2778, 0.03125
    %v2781 = vmul.f32 %v2753, %v2753
    %v2782 = vmul.f32 %v2754, %v2754
    %v2783 = vmul.f32 %v2755, %v2755
    %v2784 = vmul.f32 %v2756, %v2756
    %v2785 = vmul.f32 %v2757, %v2757
    %v2786 = vmul.f32 %v2758, %v2758
    %v2787 = vmul.f32 %v2759, %v2759
    %v2788 = vmul.f32 %v2760, %v2760
    %v2789 = vadd.f32 %v2781, %v2783
    %v2790 = vadd.f32 %v2789, %v2785
    %v2791 = vadd.f32 %v2790, %v2787
    %v2792 = vrot.slane %v2791, 4
    %v2793 = vadd.f32 %v2791, %v2792
    %v2794 = vrot.slane %v2793, 2
    %v2795 = vadd.f32 %v2793, %v2794
    %v2796 = vrot.slane %v2795, 1
    %v2797 = vadd.f32 %v2795, %v2796
    %v2798 = vadd.f32 %v2782, %v2784
    %v2799 = vadd.f32 %v2798, %v2786
    %v2800 = vadd.f32 %v2799, %v2788
    %v2801 = vrot.slane %v2800, 4
    %v2802 = vadd.f32 %v2800, %v2801
    %v2803 = vrot.slane %v2802, 2
    %v2804 = vadd.f32 %v2802, %v2803
    %v2805 = vrot.slane %v2804, 1
    %v2806 = vadd.f32 %v2804, %v2805
    %v2807 = vmul.f32 %v2797, 0.03125
    %v2808 = vmul.f32 %v2806, 0.03125
    %v2809 = vmul.f32 %v2779, %v2779
    %v2810 = vmul.f32 %v2780, %v2780
    %v2811 = vsub.f32 %v2807, %v2809
    %v2812 = vsub.f32 %v2808, %v2810
    %v2813 = vsub.f32 %v2753, %v2779
    %v2814 = vsub.f32 %v2754, %v2780
    %v2815 = vsub.f32 %v2755, %v2779
    %v2816 = vsub.f32 %v2756, %v2780
    %v2817 = vsub.f32 %v2757, %v2779
    %v2818 = vsub.f32 %v2758, %v2780
    %v2819 = vsub.f32 %v2759, %v2779
    %v2820 = vsub.f32 %v2760, %v2780
    %v2821 = vadd.f32 %v2811, 1e-05
    %v2822 = vadd.f32 %v2812, 1e-05
    %v2823 = vrsqrt.pop %v2821
    %v2824 = vrsqrt.pop %v2822
    %v2825 = vmul.f32 %v2813, %v2823
    %v2826 = vmul.f32 %v2814, %v2824
    %v2827 = vmul.f32 %v2815, %v2823
    %v2828 = vmul.f32 %v2816, %v2824
    %v2829 = vmul.f32 %v2817, %v2823
    %v2830 = vmul.f32 %v2818, %v2824
    %v2831 = vmul.f32 %v2819, %v2823
    %v2832 = vmul.f32 %v2820, %v2824
    %v2833 = vpack.c.bf16 %v2827, %v2825
    %v2834 = vpack.c.bf16 %v2828, %v2826
    %v2835 = vpack.c.bf16 %v2831, %v2829
    %v2836 = vpack.c.bf16 %v2832, %v2830
    %v2845 = vunpack.c.l.b16 %v29
    %v2846 = vunpack.c.l.b16 %v30
    %v2847 = vunpack.c.l.b16 %v31
    %v2848 = vunpack.c.l.b16 %v32
    %v2849 = vunpack.c.l.b16 %v33
    %v2850 = vunpack.c.l.b16 %v34
    %v2851 = vunpack.c.l.b16 %v35
    %v2852 = vunpack.c.l.b16 %v36
    %v2853 = vpack.c.b16 %v2846, %v2845
    %v2854 = vpack.c.b16 %v2848, %v2847
    %v2855 = vpack.c.b16 %v2850, %v2849
    %v2856 = vpack.c.b16 %v2852, %v2851
    %v2858 = vsel %vm2688, %v2853, 0
    %v2861 = vsel %vm2688, %v2854, 0
    %v2864 = vsel %vm2688, %v2855, 0
    %v2867 = vsel %vm2688, %v2856, 0
    %2869 = vmatprep.subr.bf16.mxu0 0
    %2870 = vmatpush1.bf16.msra.mxu0 0
    %2871 = vmatprep.subr.bf16.mxu0 0
    %2872 = vmatpush1.bf16.msra.mxu0 0
    %2873 = vmatprep.subr.bf16.mxu0 0
    %2874 = vmatpush1.bf16.msra.mxu0 0
    %2875 = vmatprep.subr.bf16.mxu0 0
    %2876 = vmatpush1.bf16.msra.mxu0 0
    %2877 = vmatprep.subr.bf16.mxu0 0
    %2878 = vmatpush1.bf16.msra.mxu0 0
    %2879 = vmatprep.subr.bf16.mxu0 %v2698
    %2880 = vmatpush1.bf16.msra.mxu0 %v2698
    %2881 = vmatprep.subr.bf16.mxu0 %v2836
    %2882 = vmatpush1.bf16.msra.mxu0 %v2835
    %2883 = vmatprep.subr.bf16.mxu0 %v2834
    %2884 = vmatpush1.bf16.msra.mxu0 %v2833
    %2885 = vmatprep.subr.bf16.mxu0 0
    %2886 = vmatpush2.bf16.msra.mxu0 0
    %2887 = vmatprep.subr.bf16.mxu0 0
    %2888 = vmatpush2.bf16.msra.mxu0 0
    %2889 = vmatprep.subr.bf16.mxu0 0
    %2890 = vmatpush2.bf16.msra.mxu0 0
    %2891 = vmatprep.subr.bf16.mxu0 0
    %2892 = vmatpush2.bf16.msra.mxu0 0
    %2893 = vmatprep.subr.bf16.mxu0 0
    %2894 = vmatpush2.bf16.msra.mxu0 0
    %2895 = vmatprep.subr.bf16.mxu0 0
    %2896 = vmatpush2.bf16.msra.mxu0 0
    %2897 = vmatprep.subr.bf16.mxu0 0
    %2898 = vmatpush2.bf16.msra.mxu0 0
    %2899 = vmatprep.subr.bf16.mxu0 0
    %2900 = vmatpush2.bf16.msra.mxu0 0
    %2901 = vmatprep.mubr.bf16.mxu0 0
    %2902 = vmatmul.mubr.bf16.gmra.mxu0 %v2858
    %v2903 = vpop.f32.mrf.mxu0
    %v2904 = vadd.f32 0.0, %v2903
    %v2905 = vpop.f32.mrf.mxu0
    %v2906 = vadd.f32 0.0, %v2905
    %v2907 = vpop.f32.mrf.mxu0
    %v2908 = vadd.f32 0.0, %v2907
    %v2909 = vpop.f32.mrf.mxu0
    %v2910 = vadd.f32 0.0, %v2909
    %2911 = vmatprep.mubr.bf16.mxu0 0
    %2912 = vmatmul.mubr.bf16.gmra.mxu0 %v2861
    %v2913 = vpop.f32.mrf.mxu0
    %v2914 = vadd.f32 0.0, %v2913
    %v2915 = vpop.f32.mrf.mxu0
    %v2916 = vadd.f32 0.0, %v2915
    %v2917 = vpop.f32.mrf.mxu0
    %v2918 = vadd.f32 0.0, %v2917
    %v2919 = vpop.f32.mrf.mxu0
    %v2920 = vadd.f32 0.0, %v2919
    %2921 = vmatprep.mubr.bf16.mxu0 0
    %2922 = vmatmul.mubr.bf16.gmra.mxu0 %v2864
    %v2923 = vpop.f32.mrf.mxu0
    %v2924 = vadd.f32 0.0, %v2923
    %v2925 = vpop.f32.mrf.mxu0
    %v2926 = vadd.f32 0.0, %v2925
    %v2927 = vpop.f32.mrf.mxu0
    %v2928 = vadd.f32 0.0, %v2927
    %v2929 = vpop.f32.mrf.mxu0
    %v2930 = vadd.f32 0.0, %v2929
    %2931 = vmatprep.mubr.bf16.mxu0 0
    %2932 = vmatmul.mubr.bf16.gmra.mxu0 %v2867
    %v2933 = vpop.f32.mrf.mxu0
    %v2934 = vadd.f32 0.0, %v2933
    %v2935 = vpop.f32.mrf.mxu0
    %v2936 = vadd.f32 0.0, %v2935
    %v2937 = vpop.f32.mrf.mxu0
    %v2938 = vadd.f32 0.0, %v2937
    %v2939 = vpop.f32.mrf.mxu0
    %v2940 = vadd.f32 0.0, %v2939
    %2941 = vdwg.mxu0
    %v2942 = vmax.f32 %v2904, 0.0
    %v2943 = vmax.f32 %v2906, 0.0
    %v2944 = vmax.f32 %v2908, 0.0
    %v2945 = vmax.f32 %v2910, 0.0
    %v2946 = vmax.f32 %v2914, 0.0
    %v2947 = vmax.f32 %v2916, 0.0
    %v2948 = vmax.f32 %v2918, 0.0
    %v2949 = vmax.f32 %v2920, 0.0
    %v2950 = vmax.f32 %v2924, 0.0
    %v2951 = vmax.f32 %v2926, 0.0
    %v2952 = vmax.f32 %v2928, 0.0
    %v2953 = vmax.f32 %v2930, 0.0
    %v2954 = vmax.f32 %v2934, 0.0
    %v2955 = vmax.f32 %v2936, 0.0
    %v2956 = vmax.f32 %v2938, 0.0
    %v2957 = vmax.f32 %v2940, 0.0
    %v2958 = vpack.c.bf16 %v2944, %v2942
    %v2959 = vpack.c.bf16 %v2945, %v2943
    %v2960 = vpack.c.bf16 %v2948, %v2946
    %v2961 = vpack.c.bf16 %v2949, %v2947
    %v2962 = vpack.c.bf16 %v2952, %v2950
    %v2963 = vpack.c.bf16 %v2953, %v2951
    %v2964 = vpack.c.bf16 %v2956, %v2954
    %v2965 = vpack.c.bf16 %v2957, %v2955
    %v2970 = vunpack.c.l.b16 %v37
    %v2971 = vunpack.c.l.b16 %v38
    %v2972 = vunpack.c.l.b16 %v39
    %v2973 = vunpack.c.l.b16 %v40
    %v2974 = vpack.c.b16 %v2971, %v2970
    %v2975 = vpack.c.b16 %v2973, %v2972
    %vm2976 = vcmask 531456
    %v2978 = vsel %vm2976, %v2974, 0
    %v2981 = vsel %vm2976, %v2975, 0
    %2983 = vmatprep.subr.bf16.mxu0 0
    %2984 = vmatpush1.bf16.msra.mxu0 0
    %2985 = vmatprep.subr.bf16.mxu0 0
    %2986 = vmatpush1.bf16.msra.mxu0 0
    %2987 = vmatprep.subr.bf16.mxu0 0
    %2988 = vmatpush1.bf16.msra.mxu0 0
    %2989 = vmatprep.subr.bf16.mxu0 %v2698
    %2990 = vmatpush1.bf16.msra.mxu0 %v2698
    %2991 = vmatprep.subr.bf16.mxu0 %v2965
    %2992 = vmatpush1.bf16.msra.mxu0 %v2964
    %2993 = vmatprep.subr.bf16.mxu0 %v2963
    %2994 = vmatpush1.bf16.msra.mxu0 %v2962
    %2995 = vmatprep.subr.bf16.mxu0 %v2961
    %2996 = vmatpush1.bf16.msra.mxu0 %v2960
    %2997 = vmatprep.subr.bf16.mxu0 %v2959
    %2998 = vmatpush1.bf16.msra.mxu0 %v2958
    %2999 = vmatprep.subr.bf16.mxu0 0
    %3000 = vmatpush2.bf16.msra.mxu0 0
    %3001 = vmatprep.subr.bf16.mxu0 0
    %3002 = vmatpush2.bf16.msra.mxu0 0
    %3003 = vmatprep.subr.bf16.mxu0 0
    %3004 = vmatpush2.bf16.msra.mxu0 0
    %3005 = vmatprep.subr.bf16.mxu0 0
    %3006 = vmatpush2.bf16.msra.mxu0 0
    %3007 = vmatprep.subr.bf16.mxu0 0
    %3008 = vmatpush2.bf16.msra.mxu0 0
    %3009 = vmatprep.subr.bf16.mxu0 0
    %3010 = vmatpush2.bf16.msra.mxu0 0
    %3011 = vmatprep.subr.bf16.mxu0 0
    %3012 = vmatpush2.bf16.msra.mxu0 0
    %3013 = vmatprep.subr.bf16.mxu0 0
    %3014 = vmatpush2.bf16.msra.mxu0 0
    %3015 = vmatprep.mubr.bf16.mxu0 0
    %3016 = vmatmul.mubr.bf16.gmra.mxu0 %v2978
    %v3017 = vpop.f32.mrf.mxu0
    %v3018 = vadd.f32 0.0, %v3017
    %v3019 = vpop.f32.mrf.mxu0
    %v3020 = vadd.f32 0.0, %v3019
    %v3021 = vpop.f32.mrf.mxu0
    %v3022 = vadd.f32 0.0, %v3021
    %v3023 = vpop.f32.mrf.mxu0
    %v3024 = vadd.f32 0.0, %v3023
    %3025 = vmatprep.mubr.bf16.mxu0 0
    %3026 = vmatmul.mubr.bf16.gmra.mxu0 %v2981
    %v3027 = vpop.f32.mrf.mxu0
    %v3028 = vadd.f32 0.0, %v3027
    %v3029 = vpop.f32.mrf.mxu0
    %v3030 = vadd.f32 0.0, %v3029
    %v3031 = vpop.f32.mrf.mxu0
    %v3032 = vadd.f32 0.0, %v3031
    %v3033 = vpop.f32.mrf.mxu0
    %v3034 = vadd.f32 0.0, %v3033
    %3035 = vdwg.mxu0
    %v3036 = vadd.f32 %v2753, %v3018
    %v3037 = vadd.f32 %v2754, %v3020
    %v3038 = vadd.f32 %v2755, %v3022
    %v3039 = vadd.f32 %v2756, %v3024
    %v3040 = vadd.f32 %v2757, %v3028
    %v3041 = vadd.f32 %v2758, %v3030
    %v3042 = vadd.f32 %v2759, %v3032
    %v3043 = vadd.f32 %v2760, %v3034
    %3044 = vst [vmem:[#allocation2] sm:$0xff] %v3036
    %3045 = vst [vmem:[#allocation2 + $0x8] sm:$0xff] %v3038
    %3046 = vst [vmem:[#allocation2 + $0x10] sm:$0xff] %v3040
    %3047 = vst [vmem:[#allocation2 + $0x18] sm:$0xff] %v3042
    %s3048 = scalar_lea.vmem [#allocation2], 32
    %3049 = vst [vmem:[%s3048] sm:$0xff] %v3037
    %3050 = vst [vmem:[%s3048 + $0x8] sm:$0xff] %v3039
    %3051 = vst [vmem:[%s3048 + $0x10] sm:$0xff] %v3041
    %3052 = vst [vmem:[%s3048 + $0x18] sm:$0xff] %v3043
    // Predicated region
    $region10: #{tpu_custom_call.1} parent=1 // pred_check
      _
    $region11: #{tpu_custom_call.1} parent=1 // pred_check_branch
      %3054 = sbr.rel (0) target = $region13
    $region12: #{tpu_custom_call.1} parent=1 // pred_region
      %s3056 = ssub.s32 1024, 1024
      %3057 = vsyncadd [#allocation3], %s3056
      %s3058 = sshll.u32 [#allocation2], 4
      %s3059 = int_to_ptr.vmem [resolvable:$true] %s3058
      %3064 = dma.vmem_to_hbm [thread:$0]  %s3059, 1024, %s2, [#allocation3], 128, 128, 8
    $region13: #{tpu_custom_call.1} parent=1 // pred_fallthru
      _
    // Predicated region
    $region14: #{tpu_custom_call.1} parent=1 // pred_check
      _
    $region15: #{tpu_custom_call.1} parent=1 // pred_check_branch
      %3066 = sbr.rel (0) target = $region17
    $region16: #{tpu_custom_call.1} parent=1 // pred_region
      %3067 = dma.done [#allocation3], 1024
    $region17: #{tpu_custom_call.1} parent=1 // pred_fallthru
      _
    %3068 = vsyncpa [#allocation3], 1

</llo_original>
